<compile_context>
chip_gen: v7x
topology: tpu7x:2x2x1
jax: 0.10.0
libtpu: 0.0.40
codegen_flags: <defaults>
</compile_context>

<pallas_src>
import functools

import jax
import jax.numpy as jnp
import numpy as np
from jax.experimental import pallas as pl
from jax.experimental.pallas import tpu as pltpu

GN_EPS = 1e-5          # torch.nn.GroupNorm default eps
GROUPS = 32            # GroupNorm(32, C)


# --------------------------------------------------------------------------- #
# Kernel 1: per-channel sums / sums-of-squares over HW (tiled)                 #
# --------------------------------------------------------------------------- #
def _gn_sums_kernel(x_ref, sum_ref, sq_ref):
    t = pl.program_id(2)

    @pl.when(t == 0)
    def _():
        sum_ref[...] = jnp.zeros(sum_ref.shape, sum_ref.dtype)
        sq_ref[...] = jnp.zeros(sq_ref.shape, sq_ref.dtype)

    x = x_ref[...]                                            # (t1, C) f32
    sum_ref[...] += jnp.sum(x, axis=0, keepdims=True)
    sq_ref[...] += jnp.sum(x * x, axis=0, keepdims=True)


# --------------------------------------------------------------------------- #
# Kernel 2: GroupNorm apply + fused QKV projection (tiled over HW)             #
# --------------------------------------------------------------------------- #
def _gn_qkv_kernel(x_ref, scale_ref, shift_ref, wqkv_ref, bqkv_ref, *out_refs, c):
    h = x_ref[...] * scale_ref[...] + shift_ref[...]          # (t2, C) f32
    qkv = jnp.dot(h.astype(jnp.bfloat16), wqkv_ref[...],      # (t2, C) @ (C, 3C) on MXU
                  preferred_element_type=jnp.float32)
    qkv = (qkv + bqkv_ref[...]).astype(jnp.bfloat16)          # (t2, 3C)
    if len(out_refs) == 1:                                    # single contiguous store
        out_refs[0][...] = qkv
    else:                                                     # C % 128 != 0 fallback
        q_ref, k_ref, v_ref = out_refs
        q_ref[...] = qkv[:, :c]
        k_ref[...] = qkv[:, c:2 * c]
        v_ref[...] = qkv[:, 2 * c:]


# --------------------------------------------------------------------------- #
# Kernel 3a: KV-resident single-pass attention + projection + residual (NCHW)  #
# --------------------------------------------------------------------------- #
def _attn_single_kernel(q_ref, k_ref, v_ref, xct_ref, wp_ref, bp_ref, o_ref):
    # logits: attention scale already folded into the Q projection
    s = jax.lax.dot_general(q_ref[...], k_ref[...],
                            dimension_numbers=(((1,), (1,)), ((), ())),
                            preferred_element_type=jnp.float32)          # (tq, HW)
    m = jnp.max(s, axis=-1, keepdims=True)
    p = jnp.exp(s - m)                                                   # f32 softmax math
    l = jnp.sum(p, axis=-1, keepdims=True)
    attn = jnp.dot(p.astype(jnp.bfloat16), v_ref[...],
                   preferred_element_type=jnp.float32) / l               # (tq, C), exact div
    # transposed output projection: wp (C_out, C_in) x attn (tq, C_in) -> (C_out, tq)
    proj_t = jax.lax.dot_general(wp_ref[...], attn.astype(jnp.bfloat16),
                                 dimension_numbers=(((1,), (1,)), ((), ())),
                                 preferred_element_type=jnp.float32)
    o_ref[...] = xct_ref[...] + proj_t + bp_ref[...]                     # NCHW store


# --------------------------------------------------------------------------- #
# Kernel 3b: flash-style online-softmax attention (kv-tiled) + proj + residual #
# --------------------------------------------------------------------------- #
def _attn_flash_kernel(q_ref, k_ref, v_ref, xct_ref, wp_ref, bp_ref, o_ref,
                       m_ref, l_ref, acc_ref):
    ki = pl.program_id(2)

    @pl.when(ki == 0)
    def _():
        m_ref[...] = jnp.full(m_ref.shape, -jnp.inf, m_ref.dtype)
        l_ref[...] = jnp.zeros(l_ref.shape, l_ref.dtype)
        acc_ref[...] = jnp.zeros(acc_ref.shape, acc_ref.dtype)

    s = jax.lax.dot_general(q_ref[...], k_ref[...],
                            dimension_numbers=(((1,), (1,)), ((), ())),
                            preferred_element_type=jnp.float32)          # (tq, tkv)
    m_prev = m_ref[...]
    m_new = jnp.maximum(m_prev, jnp.max(s, axis=-1, keepdims=True))
    alpha = jnp.exp(m_prev - m_new)
    p = jnp.exp(s - m_new)
    l_ref[...] = alpha * l_ref[...] + jnp.sum(p, axis=-1, keepdims=True)
    acc_ref[...] = alpha * acc_ref[...] + jnp.dot(
        p.astype(jnp.bfloat16), v_ref[...], preferred_element_type=jnp.float32)
    m_ref[...] = m_new

    @pl.when(ki == pl.num_programs(2) - 1)
    def _():
        attn = acc_ref[...] / l_ref[...]                                 # exact normalize
        proj_t = jax.lax.dot_general(wp_ref[...], attn.astype(jnp.bfloat16),
                                     dimension_numbers=(((1,), (1,)), ((), ())),
                                     preferred_element_type=jnp.float32)  # (C, tq)
        o_ref[...] = xct_ref[...] + proj_t + bp_ref[...]


# --------------------------------------------------------------------------- #
# Wrapper                                                                      #
# --------------------------------------------------------------------------- #
def _tpu_generation():
    try:
        kind = jax.devices()[0].device_kind.lower()
    except Exception:
        return 0
    for g in (7, 6, 5, 4, 3, 2):
        if f"v{g}" in kind:
            return g
    return 0


def _pick_tile(total, target, mults=(128, 16, 8)):
    """Largest tile dividing `total` that is a multiple of one of `mults` (tried in
    order of preference) and <= target; falls back to the full extent."""
    total = int(total)
    target = max(1, min(int(target), total))
    for m in mults:
        t = (target // m) * m
        while t >= m:
            if total % t == 0:
                return t
            t -= m
    return total


def _stage3_vmem_bytes(tq, tkv, c):
    """Rough stage-3 VMEM footprint: double-buffered blocks + scratch + logits temps."""
    db = 2
    q = tq * c * 2 * db
    kv = 2 * tkv * c * 2 * db
    x_res = c * tq * 4 * db
    out = c * tq * 4 * db
    w = (c * c * 2 + c * 4) * db
    scratch = tq * c * 4 + 2 * tq * 4
    logits = int(1.5 * tq * tkv * 4)
    return q + kv + x_res + out + w + scratch + logits


def attn_block_pallas(x_nchw, params, *, max_tq=None, max_tkv=None):
    """x_nchw: (B, C, H, W) float32. Returns (B, C, H, W) float32."""
    B, C, H, W = x_nchw.shape
    assert C % GROUPS == 0, "GroupNorm(32, C) requires C % 32 == 0"
    cpg = C // GROUPS
    HW = H * W

    x_nchw = x_nchw.astype(jnp.float32)
    # TODO(synk): stages 1/2 still read an NHWC copy (one XLA transpose of x); the output
    # side is written directly in NCHW by the attention kernel (no post-kernel transpose).
    x_seq = jnp.transpose(x_nchw, (0, 2, 3, 1)).reshape(B, HW, C)
    x_flat = x_nchw.reshape(B, C, HW)            # free view: residual + output layout

    # ---- parameter prep ----------------------------------------------------
    gamma = params["gn_gamma"].reshape(1, C).astype(jnp.float32)
    beta = params["gn_beta"].reshape(1, C).astype(jnp.float32)

    def conv_w(w):        # (C_out, C_in, 1, 1) -> (C_in, C_out): h @ W == conv1x1(h)
        return jnp.transpose(w.reshape(C, C), (1, 0))

    sm_scale = float(C) ** (-0.5)
    wq = conv_w(params["wq"]) * sm_scale         # fold attention scale into Q projection
    wk = conv_w(params["wk"])
    wv = conv_w(params["wv"])
    wqkv = jnp.concatenate([wq, wk, wv], axis=1).astype(jnp.bfloat16)            # (C, 3C)
    bqkv = jnp.concatenate([params["bq"] * sm_scale, params["bk"],
                            params["bv"]]).reshape(1, 3 * C).astype(jnp.float32)
    wp_oi = params["wp"].reshape(C, C).astype(jnp.bfloat16)   # raw (out, in) layout
    bp_col = params["bp"].reshape(C, 1).astype(jnp.float32)

    # ---- generation-specific tiling targets & VMEM budgets -----------------
    gen = _tpu_generation()
    if gen >= 7:      # v7x: 64 MiB VMEM/TC, 3.2 TB/s HBM -> smaller resident-KV ceiling
        tq_t, tkv_t, resident_budget, vmem_cap = 512, 1024, 28 << 20, 48 << 20
    elif gen == 6:    # v6e: 128 MiB VMEM, worst HBM-BW/MXU ratio -> big q tiles, resident KV
        tq_t, tkv_t, resident_budget, vmem_cap = 1024, 1024, 64 << 20, 100 << 20
    elif gen == 5:    # v5e: 128 MiB VMEM, ~820 GB/s HBM, 128x128 MXU
        tq_t, tkv_t, resident_budget, vmem_cap = 1024, 1024, 56 << 20, 100 << 20
    else:             # unknown / older: conservative
        tq_t, tkv_t, resident_budget, vmem_cap = 256, 512, 16 << 20, 64 << 20

    if max_tq is not None:
        tq_t = max_tq

    # tq is the lane dim of the NCHW residual/output blocks -> multiple of 128 (or = HW)
    tq = _pick_tile(HW, tq_t, mults=(128,))

    if max_tkv is not None:
        tkv = _pick_tile(HW, max_tkv, mults=(128, 16, 8))
    else:
        tkv = None
        tq_res = tq
        while True:   # prefer fully KV-resident stage 3 (K/V DMA'd once per batch)
            if _stage3_vmem_bytes(tq_res, HW, C) <= resident_budget:
                tq, tkv = tq_res, HW
                break
            nxt = _pick_tile(HW, tq_res // 2, mults=(128,))
            if nxt >= tq_res or nxt < 128:
                break
            tq_res = nxt
        if tkv is None:
            # streaming fallback: kv tiles + flash online softmax
            tkv = _pick_tile(HW, tkv_t, mults=(128, 16, 8))
            while _stage3_vmem_bytes(tq, tkv, C) > (2 * vmem_cap) // 3:
                if tkv >= tq and tkv > 128:
                    nxt = _pick_tile(HW, tkv // 2, mults=(128, 16, 8))
                    if nxt < tkv:
                        tkv = nxt
                        continue
                if tq > 128:
                    nxt = _pick_tile(HW, tq // 2, mults=(128,))
                    if nxt < tq:
                        tq = nxt
                        continue
                break

    t1 = _pick_tile(HW, 1024)
    t2 = _pick_tile(HW, 512 if gen >= 7 else 1024)

    def cparams(sem, need_bytes):
        limit = min(max(int(need_bytes) * 2, 16 << 20), vmem_cap)
        return pltpu.CompilerParams(dimension_semantics=sem, vmem_limit_bytes=limit)

    # ---- stage 1: per-channel sums over HW ----------------------------------
    n1 = HW // t1
    split = 2 if (n1 % 2 == 0 and n1 >= 2) else 1   # extra parallel axis for megacore
    n1s = n1 // split
    need1 = 2 * t1 * C * 4 + 8 * C * 4
    sums, sqs = pl.pallas_call(
        _gn_sums_kernel,
        out_shape=(jax.ShapeDtypeStruct((split, B, 1, C), jnp.float32),
                   jax.ShapeDtypeStruct((split, B, 1, C), jnp.float32)),
        grid=(split, B, n1s),
        in_specs=[pl.BlockSpec((pl.Squeezed(), t1, C),
                               lambda s, b, t: (b, s * n1s + t, 0))],
        out_specs=(pl.BlockSpec((pl.Squeezed(), pl.Squeezed(), 1, C),
                                lambda s, b, t: (s, b, 0, 0)),
                   pl.BlockSpec((pl.Squeezed(), pl.Squeezed(), 1, C),
                                lambda s, b, t: (s, b, 0, 0))),
        compiler_params=cparams(("parallel", "parallel", "arbitrary"), need1),
    )(x_seq)

    # tiny per-group math in plain JAX ((B, C)-sized arrays, negligible cost)
    csum = jnp.sum(sums, axis=(0, 2))                         # (B, C)
    csq = jnp.sum(sqs, axis=(0, 2))
    n = float(HW * cpg)
    g_mean = jnp.sum(csum.reshape(B, GROUPS, cpg), axis=-1) / n
    g_sq = jnp.sum(csq.reshape(B, GROUPS, cpg), axis=-1) / n
    g_var = jnp.maximum(g_sq - g_mean * g_mean, 0.0)          # clamp cancellation error
    g_rstd = jax.lax.rsqrt(g_var + GN_EPS)
    mean_c = jnp.repeat(g_mean, cpg, axis=1)                  # (B, C)
    rstd_c = jnp.repeat(g_rstd, cpg, axis=1)
    scale = rstd_c * gamma
    gn_scale = scale.reshape(B, 1, C)
    gn_shift = (beta - mean_c * scale).reshape(B, 1, C)

    # ---- stage 2: GroupNorm apply + fused QKV projection --------------------
    fused = (C % 128 == 0)   # stage-3 K/V lane-slices need C as a clean block multiple
    if fused:
        out_shape2 = jax.ShapeDtypeStruct((B, HW, 3 * C), jnp.bfloat16)
        out_specs2 = pl.BlockSpec((pl.Squeezed(), t2, 3 * C), lambda b, t: (b, t, 0))
    else:
        out_shape2 = tuple(jax.ShapeDtypeStruct((B, HW, C), jnp.bfloat16)
                           for _ in range(3))
        out_specs2 = tuple(pl.BlockSpec((pl.Squeezed(), t2, C), lambda b, t: (b, t, 0))
                           for _ in range(3))
    need2 = (2 * t2 * C * 4 + 2 * t2 * 3 * C * 2
             + 2 * C * 3 * C * 2 + 2 * t2 * 3 * C * 4)
    qkv = pl.pallas_call(
        functools.partial(_gn_qkv_kernel, c=C),
        out_shape=out_shape2,
        grid=(B, HW // t2),
        in_specs=[
            pl.BlockSpec((pl.Squeezed(), t2, C), lambda b, t: (b, t, 0)),
            pl.BlockSpec((pl.Squeezed(), 1, C), lambda b, t: (b, 0, 0)),
            pl.BlockSpec((pl.Squeezed(), 1, C), lambda b, t: (b, 0, 0)),
            pl.BlockSpec((C, 3 * C), lambda b, t: (0, 0)),
            pl.BlockSpec((1, 3 * C), lambda b, t: (0, 0)),
        ],
        out_specs=out_specs2,
        compiler_params=cparams(("parallel", "parallel"), need2),
    )(x_seq, gn_scale, gn_shift, wqkv, bqkv)

    # ---- stage 3: attention + transposed output projection + residual (NCHW)
    n_q, n_kv = HW // tq, HW // tkv
    need3 = _stage3_vmem_bytes(tq, tkv, C)
    if fused:
        qkv_ops = (qkv, qkv, qkv)
        q_blk, k_blk, v_blk = 0, 1, 2
    else:
        qkv_ops = qkv
        q_blk, k_blk, v_blk = 0, 0, 0

    if n_kv == 1:
        out_flat = pl.pallas_call(
            _attn_single_kernel,
            out_shape=jax.ShapeDtypeStruct((B, C, HW), jnp.float32),
            grid=(B, n_q),
            in_specs=[
                pl.BlockSpec((pl.Squeezed(), tq, C), lambda b, qi: (b, qi, q_blk)),
                pl.BlockSpec((pl.Squeezed(), tkv, C), lambda b, qi: (b, 0, k_blk)),
                pl.BlockSpec((pl.Squeezed(), tkv, C), lambda b, qi: (b, 0, v_blk)),
                pl.BlockSpec((pl.Squeezed(), C, tq), lambda b, qi: (b, 0, qi)),
                pl.BlockSpec((C, C), lambda b, qi: (0, 0)),
                pl.BlockSpec((C, 1), lambda b, qi: (0, 0)),
            ],
            out_specs=pl.BlockSpec((pl.Squeezed(), C, tq), lambda b, qi: (b, 0, qi)),
            compiler_params=cparams(("parallel", "parallel"), need3),
        )(*qkv_ops, x_flat, wp_oi, bp_col)
    else:
        out_flat = pl.pallas_call(
            _attn_flash_kernel,
            out_shape=jax.ShapeDtypeStruct((B, C, HW), jnp.float32),
            grid=(B, n_q, n_kv),
            in_specs=[
                pl.BlockSpec((pl.Squeezed(), tq, C), lambda b, qi, ki: (b, qi, q_blk)),
                pl.BlockSpec((pl.Squeezed(), tkv, C), lambda b, qi, ki: (b, ki, k_blk)),
                pl.BlockSpec((pl.Squeezed(), tkv, C), lambda b, qi, ki: (b, ki, v_blk)),
                pl.BlockSpec((pl.Squeezed(), C, tq), lambda b, qi, ki: (b, 0, qi)),
                pl.BlockSpec((C, C), lambda b, qi, ki: (0, 0)),
                pl.BlockSpec((C, 1), lambda b, qi, ki: (0, 0)),
            ],
            out_specs=pl.BlockSpec((pl.Squeezed(), C, tq), lambda b, qi, ki: (b, 0, qi)),
            scratch_shapes=[pltpu.VMEM((tq, 1), jnp.float32),     # running max
                            pltpu.VMEM((tq, 1), jnp.float32),     # running sum
                            pltpu.VMEM((tq, C), jnp.float32)],    # output accumulator
            compiler_params=cparams(("parallel", "parallel", "arbitrary"), need3),
        )(*qkv_ops, x_flat, wp_oi, bp_col)

    return out_flat.reshape(B, C, H, W)


# --------------------------------------------------------------------------- #
# Plain-JAX reference (mirrors the PyTorch forward) + init                     #
# --------------------------------------------------------------------------- #
def attn_block_reference(x_nchw, params):
    B, C, H, W = x_nchw.shape
    xg = x_nchw.reshape(B, GROUPS, C // GROUPS, H, W)
    mean = xg.mean(axis=(2, 3, 4), keepdims=True)
    var = xg.var(axis=(2, 3, 4), keepdims=True)
    h = ((xg - mean) / jnp.sqrt(var + GN_EPS)).reshape(B, C, H, W)
    h = h * params["gn_gamma"].reshape(1, C, 1, 1) + params["gn_beta"].reshape(1, C, 1, 1)

    def conv1x1(t, w, b):
        return jnp.einsum("bchw,oc->bohw", t, w.reshape(C, C)) + b.reshape(1, C, 1, 1)

    q = conv1x1(h, params["wq"], params["bq"])
    k = conv1x1(h, params["wk"], params["bk"])
    v = conv1x1(h, params["wv"], params["bv"])
    q = jnp.transpose(q, (0, 2, 3, 1)).reshape(B, H * W, C)
    k = k.reshape(B, C, H * W)
    w = jnp.einsum("bqc,bck->bqk", q, k) * (float(C) ** (-0.5))
    w = jax.nn.softmax(w, axis=-1)
    v = jnp.transpose(v, (0, 2, 3, 1)).reshape(B, H * W, C)
    h2 = jnp.einsum("bqk,bkc->bqc", w, v)
    h2 = jnp.transpose(h2.reshape(B, H, W, C), (0, 3, 1, 2))
    h2 = conv1x1(h2, params["wp"], params["bp"])
    return x_nchw + h2


def init_params(key, C):
    """Matches AttnBlock.initialize(): xavier_uniform, zero bias, proj gain=1e-5."""
    k1, k2, k3, k4 = jax.random.split(key, 4)
    bound = float(np.sqrt(6.0 / (C + C)))

    def xavier(k, gain=1.0):
        return jax.random.uniform(k, (C, C, 1, 1), jnp.float32,
                                  minval=-gain * bound, maxval=gain * bound)

    return {
        "gn_gamma": jnp.ones((C,), jnp.float32),
        "gn_beta": jnp.zeros((C,), jnp.float32),
        "wq": xavier(k1), "bq": jnp.zeros((C,), jnp.float32),
        "wk": xavier(k2), "bk": jnp.zeros((C,), jnp.float32),
        "wv": xavier(k3), "bv": jnp.zeros((C,), jnp.float32),
        "wp": xavier(k4, gain=1e-5), "bp": jnp.zeros((C,), jnp.float32),
    }


if __name__ == "__main__":
    B, C, H, W = 2, 128, 16, 16       # C % 32 == 0; HW = 256
    key = jax.random.PRNGKey(0)
    kx, kp = jax.random.split(key)
    x = jax.random.normal(kx, (B, C, H, W), jnp.float32)
    params = init_params(kp, C)

    ref = attn_block_reference(x, params)
    ref_np, x_np = np.asarray(ref), np.asarray(x)

    # default config: KV-resident single-pass stage 3
    out_default = jax.block_until_ready(jax.jit(attn_block_pallas)(x, params))
    # forced small tiles: exercises the multi-step flash online-softmax path
    out_tiled = jax.block_until_ready(
        jax.jit(functools.partial(attn_block_pallas, max_tq=128, max_tkv=128))(x, params))

    for out in (out_default, out_tiled):
        out_np = np.asarray(out)
        assert out_np.shape == (B, C, H, W)
        # full output (residual-dominated) must match tightly
        np.testing.assert_allclose(out_np, ref_np, rtol=1e-3, atol=1e-3)
        # attention branch alone (residual removed): bf16 MXU operands -> few % tolerance
        dp, dr = out_np - x_np, ref_np - x_np
        rel = np.linalg.norm(dp - dr) / (np.linalg.norm(dr) + 1e-12)
        assert rel < 0.05, f"attention-branch relative error too high: {rel:.4f}"

    print("KERNEL_OK")
</pallas_src>

<mosaic_0001>
module attributes {stable_mosaic.version = 11 : i64} {
  func.func @_gn_sums_kernel(%arg0: i32, %arg1: i32, %arg2: i32, %arg3: memref<1x256x128xf32, #tpu.memory_space<vmem>>, %arg4: memref<1x1x1x128xf32, #tpu.memory_space<vmem>>, %arg5: memref<1x1x1x128xf32, #tpu.memory_space<vmem>>) attributes {dimension_semantics = [#tpu.dimension_semantics<parallel>, #tpu.dimension_semantics<parallel>, #tpu.dimension_semantics<arbitrary>], iteration_bounds = array<i64: 1, 2, 1>, scalar_prefetch = 0 : i64, scratch_operands = 0 : i64, tpu.core_type = #tpu.core_type<tc>, window_params = [{transform_indices = @transform_0, window_bounds = array<i64: 1, 256, 128>}, {transform_indices = @transform_1, window_bounds = array<i64: 1, 1, 1, 128>}, {transform_indices = @transform_2, window_bounds = array<i64: 1, 1, 1, 128>}]} {
    %c0_i32 = arith.constant 0 : i32
    %0 = arith.cmpi eq, %arg2, %c0_i32 : i32
    %1 = arith.extui %0 : i1 to i32
    %c0_i32_0 = arith.constant 0 : i32
    %2 = arith.cmpi ne, %1, %c0_i32_0 : i32
    scf.if %2 {
      %cst_20 = arith.constant 0.000000e+00 : f32
      %22 = vector.broadcast %cst_20 : f32 to vector<1x128xf32>
      %c0_21 = arith.constant 0 : index
      %c0_22 = arith.constant 0 : index
      %c0_23 = arith.constant 0 : index
      %c0_24 = arith.constant 0 : index
      %23 = vector.load %arg4[%c0_21, %c0_22, %c0_23, %c0_24] : memref<1x1x1x128xf32, #tpu.memory_space<vmem>>, vector<1x1x1x128xf32>
      %24 = vector.shape_cast %23 : vector<1x1x1x128xf32> to vector<1x128xf32>
      %25 = vector.shape_cast %22 : vector<1x128xf32> to vector<1x1x1x128xf32>
      tpu.vector_store %arg4[%c0_21, %c0_22, %c0_23, %c0_24], %25 {strides = array<i32>} : memref<1x1x1x128xf32, #tpu.memory_space<vmem>>, vector<1x1x1x128xf32>,
      %cst_25 = arith.constant 0.000000e+00 : f32
      %26 = vector.broadcast %cst_25 : f32 to vector<1x128xf32>
      %c0_26 = arith.constant 0 : index
      %c0_27 = arith.constant 0 : index
      %c0_28 = arith.constant 0 : index
      %c0_29 = arith.constant 0 : index
      %27 = vector.load %arg5[%c0_26, %c0_27, %c0_28, %c0_29] : memref<1x1x1x128xf32, #tpu.memory_space<vmem>>, vector<1x1x1x128xf32>
      %28 = vector.shape_cast %27 : vector<1x1x1x128xf32> to vector<1x128xf32>
      %29 = vector.shape_cast %26 : vector<1x128xf32> to vector<1x1x1x128xf32>
      tpu.vector_store %arg5[%c0_26, %c0_27, %c0_28, %c0_29], %29 {strides = array<i32>} : memref<1x1x1x128xf32, #tpu.memory_space<vmem>>, vector<1x1x1x128xf32>,
    } else {
    }
    %c0 = arith.constant 0 : index
    %c0_1 = arith.constant 0 : index
    %c0_2 = arith.constant 0 : index
    %3 = vector.load %arg3[%c0, %c0_1, %c0_2] : memref<1x256x128xf32, #tpu.memory_space<vmem>>, vector<1x256x128xf32>
    %4 = vector.shape_cast %3 : vector<1x256x128xf32> to vector<256x128xf32>
    %c0_3 = arith.constant 0 : index
    %c0_4 = arith.constant 0 : index
    %c0_5 = arith.constant 0 : index
    %c0_6 = arith.constant 0 : index
    %5 = vector.load %arg4[%c0_3, %c0_4, %c0_5, %c0_6] : memref<1x1x1x128xf32, #tpu.memory_space<vmem>>, vector<1x1x1x128xf32>
    %6 = vector.shape_cast %5 : vector<1x1x1x128xf32> to vector<1x128xf32>
    %cst = arith.constant dense<0.000000e+00> : vector<128xf32>
    %7 = vector.multi_reduction <add>, %4, %cst [0] : vector<256x128xf32> to vector<128xf32>
    %8 = vector.shape_cast %7 : vector<128xf32> to vector<1x128xf32>
    %9 = arith.addf %6, %8 : vector<1x128xf32>
    %c0_7 = arith.constant 0 : index
    %c0_8 = arith.constant 0 : index
    %c0_9 = arith.constant 0 : index
    %c0_10 = arith.constant 0 : index
    %10 = vector.load %arg4[%c0_7, %c0_8, %c0_9, %c0_10] : memref<1x1x1x128xf32, #tpu.memory_space<vmem>>, vector<1x1x1x128xf32>
    %11 = vector.shape_cast %10 : vector<1x1x1x128xf32> to vector<1x128xf32>
    %12 = vector.shape_cast %9 : vector<1x128xf32> to vector<1x1x1x128xf32>
    tpu.vector_store %arg4[%c0_7, %c0_8, %c0_9, %c0_10], %12 {strides = array<i32>} : memref<1x1x1x128xf32, #tpu.memory_space<vmem>>, vector<1x1x1x128xf32>,
    %c0_11 = arith.constant 0 : index
    %c0_12 = arith.constant 0 : index
    %c0_13 = arith.constant 0 : index
    %c0_14 = arith.constant 0 : index
    %13 = vector.load %arg5[%c0_11, %c0_12, %c0_13, %c0_14] : memref<1x1x1x128xf32, #tpu.memory_space<vmem>>, vector<1x1x1x128xf32>
    %14 = vector.shape_cast %13 : vector<1x1x1x128xf32> to vector<1x128xf32>
    %15 = arith.mulf %4, %4 : vector<256x128xf32>
    %cst_15 = arith.constant dense<0.000000e+00> : vector<128xf32>
    %16 = vector.multi_reduction <add>, %15, %cst_15 [0] : vector<256x128xf32> to vector<128xf32>
    %17 = vector.shape_cast %16 : vector<128xf32> to vector<1x128xf32>
    %18 = arith.addf %14, %17 : vector<1x128xf32>
    %c0_16 = arith.constant 0 : index
    %c0_17 = arith.constant 0 : index
    %c0_18 = arith.constant 0 : index
    %c0_19 = arith.constant 0 : index
    %19 = vector.load %arg5[%c0_16, %c0_17, %c0_18, %c0_19] : memref<1x1x1x128xf32, #tpu.memory_space<vmem>>, vector<1x1x1x128xf32>
    %20 = vector.shape_cast %19 : vector<1x1x1x128xf32> to vector<1x128xf32>
    %21 = vector.shape_cast %18 : vector<1x128xf32> to vector<1x1x1x128xf32>
    tpu.vector_store %arg5[%c0_16, %c0_17, %c0_18, %c0_19], %21 {strides = array<i32>} : memref<1x1x1x128xf32, #tpu.memory_space<vmem>>, vector<1x1x1x128xf32>,
    return
  }
  func.func @transform_0(%arg0: i32, %arg1: i32, %arg2: i32) -> (i32, i32, i32) {
    %c1_i32 = arith.constant 1 : i32
    %0 = arith.muli %arg0, %c1_i32 : i32
    %1 = arith.addi %0, %arg2 : i32
    %c0_i32 = arith.constant 0 : i32
    %c0_i32_0 = arith.constant 0 : i32
    return %arg1, %1, %c0_i32 : i32, i32, i32
  }
  func.func @transform_1(%arg0: i32, %arg1: i32, %arg2: i32) -> (i32, i32, i32, i32) {
    %c0_i32 = arith.constant 0 : i32
    %c0_i32_0 = arith.constant 0 : i32
    %c0_i32_1 = arith.constant 0 : i32
    return %arg0, %arg1, %c0_i32, %c0_i32_0 : i32, i32, i32, i32
  }
  func.func @transform_2(%arg0: i32, %arg1: i32, %arg2: i32) -> (i32, i32, i32, i32) {
    %c0_i32 = arith.constant 0 : i32
    %c0_i32_0 = arith.constant 0 : i32
    %c0_i32_1 = arith.constant 0 : i32
    return %arg0, %arg1, %c0_i32, %c0_i32_0 : i32, i32, i32, i32
  }
}

module attributes {stable_mosaic.version = 11 : i64} {
  func.func @_gn_qkv_kernel(%arg0: i32, %arg1: i32, %arg2: memref<1x256x128xf32, #tpu.memory_space<vmem>>, %arg3: memref<1x1x128xf32, #tpu.memory_space<vmem>>, %arg4: memref<1x1x128xf32, #tpu.memory_space<vmem>>, %arg5: memref<128x384xbf16, #tpu.memory_space<vmem>>, %arg6: memref<1x384xf32, #tpu.memory_space<vmem>>, %arg7: memref<1x256x384xbf16, #tpu.memory_space<vmem>>) attributes {dimension_semantics = [#tpu.dimension_semantics<parallel>, #tpu.dimension_semantics<parallel>], iteration_bounds = array<i64: 2, 1>, scalar_prefetch = 0 : i64, scratch_operands = 0 : i64, tpu.core_type = #tpu.core_type<tc>, window_params = [{transform_indices = @transform_0, window_bounds = array<i64: 1, 256, 128>}, {transform_indices = @transform_1, window_bounds = array<i64: 1, 1, 128>}, {transform_indices = @transform_2, window_bounds = array<i64: 1, 1, 128>}, {pipeline_mode = #tpu.pipeline_mode<synchronous>, transform_indices = @transform_3, window_bounds = array<i64: 128, 384>}, {pipeline_mode = #tpu.pipeline_mode<synchronous>, transform_indices = @transform_4, window_bounds = array<i64: 1, 384>}, {transform_indices = @transform_5, window_bounds = array<i64: 1, 256, 384>}]} {
    %c0 = arith.constant 0 : index
    %c0_0 = arith.constant 0 : index
    %c0_1 = arith.constant 0 : index
    %0 = vector.load %arg2[%c0, %c0_0, %c0_1] : memref<1x256x128xf32, #tpu.memory_space<vmem>>, vector<1x256x128xf32>
    %1 = vector.shape_cast %0 : vector<1x256x128xf32> to vector<256x128xf32>
    %c0_2 = arith.constant 0 : index
    %c0_3 = arith.constant 0 : index
    %c0_4 = arith.constant 0 : index
    %2 = vector.load %arg3[%c0_2, %c0_3, %c0_4] : memref<1x1x128xf32, #tpu.memory_space<vmem>>, vector<1x1x128xf32>
    %3 = vector.shape_cast %2 : vector<1x1x128xf32> to vector<1x128xf32>
    %4 = vector.broadcast %3 : vector<1x128xf32> to vector<256x128xf32>
    %5 = arith.mulf %1, %4 : vector<256x128xf32>
    %c0_5 = arith.constant 0 : index
    %c0_6 = arith.constant 0 : index
    %c0_7 = arith.constant 0 : index
    %6 = vector.load %arg4[%c0_5, %c0_6, %c0_7] : memref<1x1x128xf32, #tpu.memory_space<vmem>>, vector<1x1x128xf32>
    %7 = vector.shape_cast %6 : vector<1x1x128xf32> to vector<1x128xf32>
    %8 = vector.broadcast %7 : vector<1x128xf32> to vector<256x128xf32>
    %9 = arith.addf %5, %8 : vector<256x128xf32>
    %10 = arith.truncf %9 : vector<256x128xf32> to vector<256x128xbf16>
    %c0_8 = arith.constant 0 : index
    %c0_9 = arith.constant 0 : index
    %11 = vector.load %arg5[%c0_8, %c0_9] : memref<128x384xbf16, #tpu.memory_space<vmem>>, vector<128x384xbf16>
    %cst = arith.constant dense<0.000000e+00> : vector<256x384xf32>
    %12 = tpu.matmul %10, %11, %cst {dimension_numbers = #tpu.dot_dimension_numbers<[1], [0], [0], [1], [0, 0, 1, 1], [], []>} : vector<256x128xbf16>, vector<128x384xbf16>, vector<256x384xf32> -> vector<256x384xf32>
    %c0_10 = arith.constant 0 : index
    %c0_11 = arith.constant 0 : index
    %13 = vector.load %arg6[%c0_10, %c0_11] : memref<1x384xf32, #tpu.memory_space<vmem>>, vector<1x384xf32>
    %14 = vector.broadcast %13 : vector<1x384xf32> to vector<256x384xf32>
    %15 = arith.addf %12, %14 : vector<256x384xf32>
    %16 = arith.truncf %15 : vector<256x384xf32> to vector<256x384xbf16>
    %c0_12 = arith.constant 0 : index
    %c0_13 = arith.constant 0 : index
    %c0_14 = arith.constant 0 : index
    %17 = vector.load %arg7[%c0_12, %c0_13, %c0_14] : memref<1x256x384xbf16, #tpu.memory_space<vmem>>, vector<1x256x384xbf16>
    %18 = vector.shape_cast %17 : vector<1x256x384xbf16> to vector<256x384xbf16>
    %19 = vector.shape_cast %16 : vector<256x384xbf16> to vector<1x256x384xbf16>
    tpu.vector_store %arg7[%c0_12, %c0_13, %c0_14], %19 {strides = array<i32>} : memref<1x256x384xbf16, #tpu.memory_space<vmem>>, vector<1x256x384xbf16>,
    return
  }
  func.func @transform_0(%arg0: i32, %arg1: i32) -> (i32, i32, i32) {
    %c0_i32 = arith.constant 0 : i32
    %c0_i32_0 = arith.constant 0 : i32
    return %arg0, %arg1, %c0_i32 : i32, i32, i32
  }
  func.func @transform_1(%arg0: i32, %arg1: i32) -> (i32, i32, i32) {
    %c0_i32 = arith.constant 0 : i32
    %c0_i32_0 = arith.constant 0 : i32
    %c0_i32_1 = arith.constant 0 : i32
    return %arg0, %c0_i32, %c0_i32_0 : i32, i32, i32
  }
  func.func @transform_2(%arg0: i32, %arg1: i32) -> (i32, i32, i32) {
    %c0_i32 = arith.constant 0 : i32
    %c0_i32_0 = arith.constant 0 : i32
    %c0_i32_1 = arith.constant 0 : i32
    return %arg0, %c0_i32, %c0_i32_0 : i32, i32, i32
  }
  func.func @transform_3(%arg0: i32, %arg1: i32) -> (i32, i32) {
    %c0_i32 = arith.constant 0 : i32
    %c0_i32_0 = arith.constant 0 : i32
    %c0_i32_1 = arith.constant 0 : i32
    return %c0_i32, %c0_i32_0 : i32, i32
  }
  func.func @transform_4(%arg0: i32, %arg1: i32) -> (i32, i32) {
    %c0_i32 = arith.constant 0 : i32
    %c0_i32_0 = arith.constant 0 : i32
    %c0_i32_1 = arith.constant 0 : i32
    return %c0_i32, %c0_i32_0 : i32, i32
  }
  func.func @transform_5(%arg0: i32, %arg1: i32) -> (i32, i32, i32) {
    %c0_i32 = arith.constant 0 : i32
    %c0_i32_0 = arith.constant 0 : i32
    return %arg0, %arg1, %c0_i32 : i32, i32, i32
  }
}

module attributes {stable_mosaic.version = 11 : i64} {
  func.func @_attn_single_kernel(%arg0: i32, %arg1: i32, %arg2: memref<1x256x128xbf16, #tpu.memory_space<vmem>>, %arg3: memref<1x256x128xbf16, #tpu.memory_space<vmem>>, %arg4: memref<1x256x128xbf16, #tpu.memory_space<vmem>>, %arg5: memref<1x128x256xf32, #tpu.memory_space<vmem>>, %arg6: memref<128x128xbf16, #tpu.memory_space<vmem>>, %arg7: memref<128x1xf32, #tpu.memory_space<vmem>>, %arg8: memref<1x128x256xf32, #tpu.memory_space<vmem>>) attributes {dimension_semantics = [#tpu.dimension_semantics<parallel>, #tpu.dimension_semantics<parallel>], iteration_bounds = array<i64: 2, 1>, scalar_prefetch = 0 : i64, scratch_operands = 0 : i64, tpu.core_type = #tpu.core_type<tc>, window_params = [{transform_indices = @transform_0, window_bounds = array<i64: 1, 256, 128>}, {transform_indices = @transform_1, window_bounds = array<i64: 1, 256, 128>}, {transform_indices = @transform_2, window_bounds = array<i64: 1, 256, 128>}, {transform_indices = @transform_3, window_bounds = array<i64: 1, 128, 256>}, {pipeline_mode = #tpu.pipeline_mode<synchronous>, transform_indices = @transform_4, window_bounds = array<i64: 128, 128>}, {pipeline_mode = #tpu.pipeline_mode<synchronous>, transform_indices = @transform_5, window_bounds = array<i64: 128, 1>}, {transform_indices = @transform_6, window_bounds = array<i64: 1, 128, 256>}]} {
    %c0 = arith.constant 0 : index
    %c0_0 = arith.constant 0 : index
    %c0_1 = arith.constant 0 : index
    %0 = vector.load %arg2[%c0, %c0_0, %c0_1] : memref<1x256x128xbf16, #tpu.memory_space<vmem>>, vector<1x256x128xbf16>
    %1 = vector.shape_cast %0 : vector<1x256x128xbf16> to vector<256x128xbf16>
    %c0_2 = arith.constant 0 : index
    %c0_3 = arith.constant 0 : index
    %c0_4 = arith.constant 0 : index
    %2 = vector.load %arg3[%c0_2, %c0_3, %c0_4] : memref<1x256x128xbf16, #tpu.memory_space<vmem>>, vector<1x256x128xbf16>
    %3 = vector.shape_cast %2 : vector<1x256x128xbf16> to vector<256x128xbf16>
    %cst = arith.constant dense<0.000000e+00> : vector<256x256xf32>
    %4 = tpu.matmul %1, %3, %cst {dimension_numbers = #tpu.dot_dimension_numbers<[1], [1], [0], [0], [0, 0, 1, 0], [], []>} : vector<256x128xbf16>, vector<256x128xbf16>, vector<256x256xf32> -> vector<256x256xf32>
    %cst_5 = arith.constant dense<0xFF800000> : vector<256xf32>
    %5 = vector.multi_reduction <maximumf>, %4, %cst_5 [1] : vector<256x256xf32> to vector<256xf32>
    %6 = vector.shape_cast %5 : vector<256xf32> to vector<256x1xf32>
    %7 = vector.broadcast %6 : vector<256x1xf32> to vector<256x256xf32>
    %8 = arith.subf %4, %7 : vector<256x256xf32>
    %9 = math.exp %8 : vector<256x256xf32>
    %cst_6 = arith.constant dense<0.000000e+00> : vector<256xf32>
    %10 = vector.multi_reduction <add>, %9, %cst_6 [1] : vector<256x256xf32> to vector<256xf32>
    %11 = vector.shape_cast %10 : vector<256xf32> to vector<256x1xf32>
    %12 = arith.truncf %9 : vector<256x256xf32> to vector<256x256xbf16>
    %c0_7 = arith.constant 0 : index
    %c0_8 = arith.constant 0 : index
    %c0_9 = arith.constant 0 : index
    %13 = vector.load %arg4[%c0_7, %c0_8, %c0_9] : memref<1x256x128xbf16, #tpu.memory_space<vmem>>, vector<1x256x128xbf16>
    %14 = vector.shape_cast %13 : vector<1x256x128xbf16> to vector<256x128xbf16>
    %cst_10 = arith.constant dense<0.000000e+00> : vector<256x128xf32>
    %15 = tpu.matmul %12, %14, %cst_10 {dimension_numbers = #tpu.dot_dimension_numbers<[1], [0], [0], [1], [0, 0, 1, 1], [], []>} : vector<256x256xbf16>, vector<256x128xbf16>, vector<256x128xf32> -> vector<256x128xf32>
    %16 = vector.broadcast %11 : vector<256x1xf32> to vector<256x128xf32>
    %17 = arith.divf %15, %16 : vector<256x128xf32>
    %c0_11 = arith.constant 0 : index
    %c0_12 = arith.constant 0 : index
    %18 = vector.load %arg6[%c0_11, %c0_12] : memref<128x128xbf16, #tpu.memory_space<vmem>>, vector<128x128xbf16>
    %19 = arith.truncf %17 : vector<256x128xf32> to vector<256x128xbf16>
    %cst_13 = arith.constant dense<0.000000e+00> : vector<128x256xf32>
    %20 = tpu.matmul %18, %19, %cst_13 {dimension_numbers = #tpu.dot_dimension_numbers<[1], [1], [0], [0], [0, 0, 1, 0], [], []>} : vector<128x128xbf16>, vector<256x128xbf16>, vector<128x256xf32> -> vector<128x256xf32>
    %c0_14 = arith.constant 0 : index
    %c0_15 = arith.constant 0 : index
    %c0_16 = arith.constant 0 : index
    %21 = vector.load %arg5[%c0_14, %c0_15, %c0_16] : memref<1x128x256xf32, #tpu.memory_space<vmem>>, vector<1x128x256xf32>
    %22 = vector.shape_cast %21 : vector<1x128x256xf32> to vector<128x256xf32>
    %23 = arith.addf %22, %20 : vector<128x256xf32>
    %c0_17 = arith.constant 0 : index
    %c0_18 = arith.constant 0 : index
    %24 = vector.load %arg7[%c0_17, %c0_18] : memref<128x1xf32, #tpu.memory_space<vmem>>, vector<128x1xf32>
    %25 = vector.broadcast %24 : vector<128x1xf32> to vector<128x256xf32>
    %26 = arith.addf %23, %25 : vector<128x256xf32>
    %c0_19 = arith.constant 0 : index
    %c0_20 = arith.constant 0 : index
    %c0_21 = arith.constant 0 : index
    %27 = vector.load %arg8[%c0_19, %c0_20, %c0_21] : memref<1x128x256xf32, #tpu.memory_space<vmem>>, vector<1x128x256xf32>
    %28 = vector.shape_cast %27 : vector<1x128x256xf32> to vector<128x256xf32>
    %29 = vector.shape_cast %26 : vector<128x256xf32> to vector<1x128x256xf32>
    tpu.vector_store %arg8[%c0_19, %c0_20, %c0_21], %29 {strides = array<i32>} : memref<1x128x256xf32, #tpu.memory_space<vmem>>, vector<1x128x256xf32>,
    return
  }
  func.func @transform_0(%arg0: i32, %arg1: i32) -> (i32, i32, i32) {
    %c0_i32 = arith.constant 0 : i32
    %c0_i32_0 = arith.constant 0 : i32
    return %arg0, %arg1, %c0_i32 : i32, i32, i32
  }
  func.func @transform_1(%arg0: i32, %arg1: i32) -> (i32, i32, i32) {
    %c0_i32 = arith.constant 0 : i32
    %c1_i32 = arith.constant 1 : i32
    %c0_i32_0 = arith.constant 0 : i32
    return %arg0, %c0_i32, %c1_i32 : i32, i32, i32
  }
  func.func @transform_2(%arg0: i32, %arg1: i32) -> (i32, i32, i32) {
    %c0_i32 = arith.constant 0 : i32
    %c2_i32 = arith.constant 2 : i32
    %c0_i32_0 = arith.constant 0 : i32
    return %arg0, %c0_i32, %c2_i32 : i32, i32, i32
  }
  func.func @transform_3(%arg0: i32, %arg1: i32) -> (i32, i32, i32) {
    %c0_i32 = arith.constant 0 : i32
    %c0_i32_0 = arith.constant 0 : i32
    return %arg0, %c0_i32, %arg1 : i32, i32, i32
  }
  func.func @transform_4(%arg0: i32, %arg1: i32) -> (i32, i32) {
    %c0_i32 = arith.constant 0 : i32
    %c0_i32_0 = arith.constant 0 : i32
    %c0_i32_1 = arith.constant 0 : i32
    return %c0_i32, %c0_i32_0 : i32, i32
  }
  func.func @transform_5(%arg0: i32, %arg1: i32) -> (i32, i32) {
    %c0_i32 = arith.constant 0 : i32
    %c0_i32_0 = arith.constant 0 : i32
    %c0_i32_1 = arith.constant 0 : i32
    return %c0_i32, %c0_i32_0 : i32, i32
  }
  func.func @transform_6(%arg0: i32, %arg1: i32) -> (i32, i32, i32) {
    %c0_i32 = arith.constant 0 : i32
    %c0_i32_0 = arith.constant 0 : i32
    return %arg0, %c0_i32, %arg1 : i32, i32, i32
  }
}

</mosaic_0001>

<llo_original>
// kernel: attn_block_pallas.3
$region0: #{attn_block_pallas.3}
  #allocation0 [shape = 'u32[]', space=smem, size = 0x4, offset = 0x4, fixed_abs, tag = 'smem constant byte address 0x4 - core index']
  #allocation1 [shape = 'u32[144,128]{1,0:T(1,128)}', space=vmem, size = 0x12000, scoped, tag = 'internal scratch']
  %s0 = inlined_call_operand.hbm [shape: f32[2,256,128], index: 0, kind: input, shape index: {}]
  %s1 = inlined_call_operand.vmem [shape: f32[1,2,1,128], index: 1, kind: output, shape index: {0}]
  %s2 = inlined_call_operand.vmem [shape: f32[1,2,1,128], index: 2, kind: output, shape index: {1}]
  %3 = xla_tuple %s1, %s2
  %s4 = sld [smem:[#allocation0]]
  $region53: #{attn_block_pallas.3} parent=0
    _
  %s6 = ssub.s32 1, %s4
  %s7 = scalar_select 0, %s6, %s4
  $region1: #{attn_block_pallas.3} parent=0
    #allocation2 [shape = 'u8[262144]{0}', space=vmem, size = 0x40000, scoped, tag = 'input window, operand 0']
    #allocation3 [shape = 's32[2]{0}', space=sflag, size = 0x8, scoped, tag = 'scoped memory for attn_block_pallas.3']
    %8 = vsyncpa [#allocation3], 0
    %s9 = scalar_lea.sflag [#allocation3], 1
    %10 = vsyncpa %s9, 0
    loop: start=0, step=1, limit=4
    $region2: #{attn_block_pallas.3} parent=1 // loop_pre_header
      _
    $region3: #{attn_block_pallas.3} parent=1 // loop_header
      %s12 = sphi 0, %s16
      %p13 = scmp.ge.s32.totalorder %s12, 4
      %s19 = sphi 0, %s38
      %s20 = sphi 0, %s34
      %s21 = sphi 0, %s30
      %s22 = sphi 0, %s19
      %s23 = sphi 0, %s20
      %s24 = sphi 0, %s21
      %s25 = sphi 0, %s22
      %s26 = sphi 0, %s23
      %s27 = sphi 0, %s24
      %s45 = sphi 0, %s47
      %s48 = sphi 0, %s45
      %s49 = sphi 0, %s48
      %s65 = sphi 0, %s49
      %s73 = sphi 0, %s75
      %s76 = sphi 0, %s73
      %s77 = sphi 0, %s76
      %s93 = sphi 0, %s77
      %s101 = sphi 0, %s103
      %s104 = sphi 0, %s101
      %s105 = sphi 0, %s104
      %s121 = sphi 0, %s105
    $region4: #{attn_block_pallas.3} parent=1 // loop_header_branch
      %15 = sbr.rel (%p13) target = $region8
    $region5: #{attn_block_pallas.3} parent=1 // loop_body
      %s17 = ssub.s32 %s12, 1
      %s18 = ssub.s32 %s12, 2
      %s28 = sadd.s32 1, %s21
      %p29 = scmp.ge.s32.totalorder %s28, 1
      %s30 = scalar_select %p29, 0, %s28
      %s31 = sadd.s32 1, %s20
      %s32 = scalar_select %p29, %s31, %s20
      %p33 = scmp.ge.s32.totalorder %s32, 2
      %s34 = scalar_select %p33, 0, %s32
      %s35 = sadd.s32 1, %s19
      %s36 = scalar_select %p33, %s35, %s19
      %p37 = scmp.ge.s32.totalorder %s36, 1
      %s38 = scalar_select %p37, 0, %s36
      %s39 = sadd.s32 %s19, %s21
      %s40 = sadd.s32 %s38, %s30
      %s41 = ssub.s32 %s20, %s34
      %s42 = ssub.s32 %s39, %s40
      %s43 = sor.u32 %s41, %s42
      %p44 = scmp.eq.s32.totalorder %s43, 0
      %s46 = sadd.s32 %s45, 1
      %s47 = scalar_select %p44, %s45, %s46
      %p50 = pneg %p44
      %p51 = scmp.eq.s32.totalorder %s12, 1
      %p52 = por %p50, %p51
      %p53 = scmp.ne.s32.totalorder %s45, %s48
      %p54 = scmp.eq.s32.totalorder %s12, 0
      %p55 = por %p53, %p54
      %p56 = scmp.ne.s32.totalorder %s45, %s48
      %p57 = scmp.eq.s32.totalorder %s17, 1
      %p58 = por %p56, %p57
      %p59 = scmp.ne.s32.totalorder %s48, %s49
      %p60 = scmp.eq.s32.totalorder %s17, 0
      %p61 = por %p59, %p60
      %p62 = scmp.ne.s32.totalorder %s48, %s49
      %p63 = scmp.eq.s32.totalorder %s18, 1
      %p64 = por %p62, %p63
      %p66 = scmp.ne.s32.totalorder %s49, %s65
      %p67 = scmp.eq.s32.totalorder %s18, 0
      %p68 = por %p66, %p67
      %s69 = ssub.s32 %s19, %s38
      %s70 = ssub.s32 %s20, %s34
      %s71 = sor.u32 %s69, %s70
      %p72 = scmp.eq.s32.totalorder %s71, 0
      %s74 = sadd.s32 %s73, 1
      %s75 = scalar_select %p72, %s73, %s74
      %p78 = pneg %p72
      %p79 = scmp.eq.s32.totalorder %s12, 1
      %p80 = por %p78, %p79
      %p81 = scmp.ne.s32.totalorder %s73, %s76
      %p82 = scmp.eq.s32.totalorder %s12, 0
      %p83 = por %p81, %p82
      %p84 = scmp.ne.s32.totalorder %s73, %s76
      %p85 = scmp.eq.s32.totalorder %s17, 1
      %p86 = por %p84, %p85
      %p87 = scmp.ne.s32.totalorder %s76, %s77
      %p88 = scmp.eq.s32.totalorder %s17, 0
      %p89 = por %p87, %p88
      %p90 = scmp.ne.s32.totalorder %s76, %s77
      %p91 = scmp.eq.s32.totalorder %s18, 1
      %p92 = por %p90, %p91
      %p94 = scmp.ne.s32.totalorder %s77, %s93
      %p95 = scmp.eq.s32.totalorder %s18, 0
      %p96 = por %p94, %p95
      %s97 = ssub.s32 %s19, %s38
      %s98 = ssub.s32 %s20, %s34
      %s99 = sor.u32 %s97, %s98
      %p100 = scmp.eq.s32.totalorder %s99, 0
      %s102 = sadd.s32 %s101, 1
      %s103 = scalar_select %p100, %s101, %s102
      %p106 = pneg %p100
      %p107 = scmp.eq.s32.totalorder %s12, 1
      %p108 = por %p106, %p107
      %p109 = scmp.ne.s32.totalorder %s101, %s104
      %p110 = scmp.eq.s32.totalorder %s12, 0
      %p111 = por %p109, %p110
      %p112 = scmp.ne.s32.totalorder %s101, %s104
      %p113 = scmp.eq.s32.totalorder %s17, 1
      %p114 = por %p112, %p113
      %p115 = scmp.ne.s32.totalorder %s104, %s105
      %p116 = scmp.eq.s32.totalorder %s17, 0
      %p117 = por %p115, %p116
      %p118 = scmp.ne.s32.totalorder %s104, %s105
      %p119 = scmp.eq.s32.totalorder %s18, 1
      %p120 = por %p118, %p119
      %p122 = scmp.ne.s32.totalorder %s105, %s121
      %p123 = scmp.eq.s32.totalorder %s18, 0
      %p124 = por %p122, %p123
      %p125 = scmp.le.s32.totalorder 1, %s12
      %p126 = scmp.lt.s32.totalorder %s12, 3
      %p127 = pnand %p125, %p126
      %p128 = pneg %p127
      // Predicated region
      $region9: #{attn_block_pallas.3} parent=5 // pred_check
        _
      $region10: #{attn_block_pallas.3} parent=5 // pred_check_branch
        %130 = sbr.rel (%p127) target = $region12
      $region11: #{attn_block_pallas.3} parent=5 // pred_region
        %s131 = ssub.s32 %s12, 1
      $region12: #{attn_block_pallas.3} parent=5 // pred_fallthru
        _
      %p132 = scmp.lt.s32.totalorder %s12, 2
      // Predicated region
      $region13: #{attn_block_pallas.3} parent=5 // pred_check
        %p133 = pneg %p132
      $region14: #{attn_block_pallas.3} parent=5 // pred_check_branch
        %135 = sbr.rel (%p133) target = $region16
      $region15: #{attn_block_pallas.3} parent=5 // pred_region
        // Predicated region
        $region17: #{attn_block_pallas.3} parent=15 // pred_check
          %p136 = pneg %p55
        $region18: #{attn_block_pallas.3} parent=15 // pred_check_branch
          %138 = sbr.rel (%p136) target = $region20
        $region19: #{attn_block_pallas.3} parent=15 // pred_region
          %s139 = sand.u32 %s45, 1
          %s140 = scalar_lea.sflag [#allocation3], %s139
          %s141 = sand.u32 %s45, 1
          %s142 = smul.addr %s141, 256
          %s143 = scalar_lea.vmem [#allocation2], %s142
          %s144 = sadd.s32 %s19, %s21
          %s145 = smul.u32 32, %s144
          %s147 = ssub.s32 4096, 4096
          %148 = vsyncadd %s140, %s147
          %s149 = smul.addr %s20, 32
          %s150 = sadd.s32 %s145, %s149
          %s151 = smul.addr %s150, 128
          %s152 = scalar_lea.hbm %s0, %s151
          %s153 = sshll.u32 %s143, 4
          %s154 = int_to_ptr.vmem [resolvable:$true] %s153
          %159 = dma.hbm_to_vmem [thread:$0]  %s152, 4096, %s154, %s140, 128, 128, 8
        $region20: #{attn_block_pallas.3} parent=15 // pred_fallthru
          _
      $region16: #{attn_block_pallas.3} parent=5 // pred_fallthru
        _
      %p160 = scmp.le.s32.totalorder 1, %s12
      %p161 = scmp.lt.s32.totalorder %s12, 3
      %p162 = pnand %p160, %p161
      %p163 = pneg %p162
      // Predicated region
      $region21: #{attn_block_pallas.3} parent=5 // pred_check
        _
      $region22: #{attn_block_pallas.3} parent=5 // pred_check_branch
        %165 = sbr.rel (%p162) target = $region24
      $region23: #{attn_block_pallas.3} parent=5 // pred_region
        %s166 = ssub.s32 %s12, 1
        %s167 = sand.u32 %s48, 1
        %s168 = scalar_lea.sflag [#allocation3], %s167
        %s169 = sand.u32 %s48, 1
        %s170 = smul.addr %s169, 256
        %s171 = scalar_lea.vmem [#allocation2], %s170
        // Predicated region
        $region25: #{attn_block_pallas.3} parent=23 // pred_check
          %p172 = pneg %p61
        $region26: #{attn_block_pallas.3} parent=23 // pred_check_branch
          %174 = sbr.rel (%p172) target = $region28
        $region27: #{attn_block_pallas.3} parent=23 // pred_region
          %175 = dma.done %s168, 4096
        $region28: #{attn_block_pallas.3} parent=23 // pred_fallthru
          _
        %s176 = sand.u32 %s48, 1
        %s177 = scalar_lea.sflag [#allocation3], %s176
        %s178 = sand.u32 %s48, 1
        %s179 = smul.addr %s178, 256
        %s180 = scalar_lea.vmem [#allocation2], %s179
        %p181 = pneg %p61
        %p182 = pneg %p58
        %p183 = pneg %p89
        %p184 = pneg %p86
        %p185 = scmp.lt.s32.totalorder %s22, 0
        %s186 = scalar_select %p185, %s22, 0
        %p187 = scmp.lt.s32.totalorder %s23, 1
        %s188 = scalar_select %p187, %s23, 1
        %s189 = smul.addr %s186, 2
        %s190 = sadd.s32 %s188, %s189
        %s191 = scalar_lea.vmem %s1, %s190
        %p192 = pneg %p117
        %p193 = pneg %p114
        %p194 = scmp.lt.s32.totalorder %s22, 0
        %s195 = scalar_select %p194, %s22, 0
        %p196 = scmp.lt.s32.totalorder %s23, 1
        %s197 = scalar_select %p196, %s23, 1
        %s198 = smul.addr %s195, 2
        %s199 = sadd.s32 %s197, %s198
        %s200 = scalar_lea.vmem %s2, %s199
        %s201 = sadd.s32 %s22, %s24
        %s202 = smul.u32 32, %s201
        %p203 = scmp.lt.s32.totalorder %s22, 0
        %s204 = scalar_select %p203, %s22, 0
        %p205 = scmp.lt.s32.totalorder %s23, 1
        %s206 = scalar_select %p205, %s23, 1
        %s207 = smul.addr %s204, 2
        %s208 = sadd.s32 %s206, %s207
        %s209 = scalar_lea.vmem %s1, %s208
        %p210 = scmp.lt.s32.totalorder %s22, 0
        %s211 = scalar_select %p210, %s22, 0
        %p212 = scmp.lt.s32.totalorder %s23, 1
        %s213 = scalar_select %p212, %s23, 1
        %s214 = smul.addr %s211, 2
        %s215 = sadd.s32 %s213, %s214
        %s216 = scalar_lea.vmem %s2, %s215
        %p217 = scmp.eq.s32.totalorder %s24, 0
        // Predicated region
        $region29: #{attn_block_pallas.3} parent=23 // pred_check
          %p218 = pneg %p217
        $region30: #{attn_block_pallas.3} parent=23 // pred_check_branch
          %220 = sbr.rel (%p218) target = $region32
        $region31: #{attn_block_pallas.3} parent=23 // pred_region
          %221 = vst [vmem:[%s209] sm:$0x1] 0.0
          %222 = vst [vmem:[%s216] sm:$0x1] 0.0
        $region32: #{attn_block_pallas.3} parent=23 // pred_fallthru
          _
        %v223 = vld [vmem:[%s171] sm:$0xff]
        %v224 = vld [vmem:[%s171 + $0x8] sm:$0xff]
        %v225 = vld [vmem:[%s171 + $0x10] sm:$0xff]
        %v226 = vld [vmem:[%s171 + $0x18] sm:$0xff]
        %v227 = vld [vmem:[%s171 + $0x20] sm:$0xff]
        %v228 = vld [vmem:[%s171 + $0x28] sm:$0xff]
        %v229 = vld [vmem:[%s171 + $0x30] sm:$0xff]
        %v230 = vld [vmem:[%s171 + $0x38] sm:$0xff]
        %v231 = vld [vmem:[%s171 + $0x40] sm:$0xff]
        %v232 = vld [vmem:[%s171 + $0x48] sm:$0xff]
        %v233 = vld [vmem:[%s171 + $0x50] sm:$0xff]
        %v234 = vld [vmem:[%s171 + $0x58] sm:$0xff]
        %v235 = vld [vmem:[%s171 + $0x60] sm:$0xff]
        %v236 = vld [vmem:[%s171 + $0x68] sm:$0xff]
        %v237 = vld [vmem:[%s171 + $0x70] sm:$0xff]
        %v238 = vld [vmem:[%s171 + $0x78] sm:$0xff]
        %v239 = vld [vmem:[%s171 + $0x80] sm:$0xff]
        %v240 = vld [vmem:[%s171 + $0x88] sm:$0xff]
        %v241 = vld [vmem:[%s171 + $0x90] sm:$0xff]
        %v242 = vld [vmem:[%s171 + $0x98] sm:$0xff]
        %v243 = vld [vmem:[%s171 + $0xa0] sm:$0xff]
        %v244 = vld [vmem:[%s171 + $0xa8] sm:$0xff]
        %v245 = vld [vmem:[%s171 + $0xb0] sm:$0xff]
        %v246 = vld [vmem:[%s171 + $0xb8] sm:$0xff]
        %v247 = vld [vmem:[%s171 + $0xc0] sm:$0xff]
        %v248 = vld [vmem:[%s171 + $0xc8] sm:$0xff]
        %v249 = vld [vmem:[%s171 + $0xd0] sm:$0xff]
        %v250 = vld [vmem:[%s171 + $0xd8] sm:$0xff]
        %v251 = vld [vmem:[%s171 + $0xe0] sm:$0xff]
        %v252 = vld [vmem:[%s171 + $0xe8] sm:$0xff]
        %v253 = vld [vmem:[%s171 + $0xf0] sm:$0xff]
        %v254 = vld [vmem:[%s171 + $0xf8] sm:$0xff]
        %v255 = vld [vmem:[%s209] sm:$0x1]
        %v256 = vadd.f32 %v223, %v224
        %v257 = vadd.f32 %v256, %v225
        %v258 = vadd.f32 %v257, %v226
        %v259 = vadd.f32 %v258, %v227
        %v260 = vadd.f32 %v259, %v228
        %v261 = vadd.f32 %v260, %v229
        %v262 = vadd.f32 %v261, %v230
        %v263 = vadd.f32 %v262, %v231
        %v264 = vadd.f32 %v263, %v232
        %v265 = vadd.f32 %v264, %v233
        %v266 = vadd.f32 %v265, %v234
        %v267 = vadd.f32 %v266, %v235
        %v268 = vadd.f32 %v267, %v236
        %v269 = vadd.f32 %v268, %v237
        %v270 = vadd.f32 %v269, %v238
        %v271 = vadd.f32 %v270, %v239
        %v272 = vadd.f32 %v271, %v240
        %v273 = vadd.f32 %v272, %v241
        %v274 = vadd.f32 %v273, %v242
        %v275 = vadd.f32 %v274, %v243
        %v276 = vadd.f32 %v275, %v244
        %v277 = vadd.f32 %v276, %v245
        %v278 = vadd.f32 %v277, %v246
        %v279 = vadd.f32 %v278, %v247
        %v280 = vadd.f32 %v279, %v248
        %v281 = vadd.f32 %v280, %v249
        %v282 = vadd.f32 %v281, %v250
        %v283 = vadd.f32 %v282, %v251
        %v284 = vadd.f32 %v283, %v252
        %v285 = vadd.f32 %v284, %v253
        %v286 = vadd.f32 %v285, %v254
        %v287 = vrot.slane %v286, 4
        %v288 = vadd.f32 %v286, %v287
        %v289 = vrot.slane %v288, 2
        %v290 = vadd.f32 %v288, %v289
        %v291 = vrot.slane %v290, 1
        %v292 = vadd.f32 %v290, %v291
        %v293 = vadd.f32 %v255, %v292
        %294 = vst [vmem:[%s209] sm:$0x1] %v293
        %v295 = vld [vmem:[%s216] sm:$0x1]
        %v296 = vmul.f32 %v223, %v223
        %v297 = vmul.f32 %v224, %v224
        %v298 = vmul.f32 %v225, %v225
        %v299 = vmul.f32 %v226, %v226
        %v300 = vmul.f32 %v227, %v227
        %v301 = vmul.f32 %v228, %v228
        %v302 = vmul.f32 %v229, %v229
        %v303 = vmul.f32 %v230, %v230
        %v304 = vmul.f32 %v231, %v231
        %v305 = vmul.f32 %v232, %v232
        %v306 = vmul.f32 %v233, %v233
        %v307 = vmul.f32 %v234, %v234
        %v308 = vmul.f32 %v235, %v235
        %v309 = vmul.f32 %v236, %v236
        %v310 = vmul.f32 %v237, %v237
        %v311 = vmul.f32 %v238, %v238
        %v312 = vmul.f32 %v239, %v239
        %v313 = vmul.f32 %v240, %v240
        %v314 = vmul.f32 %v241, %v241
        %v315 = vmul.f32 %v242, %v242
        %v316 = vmul.f32 %v243, %v243
        %v317 = vmul.f32 %v244, %v244
        %v318 = vmul.f32 %v245, %v245
        %v319 = vmul.f32 %v246, %v246
        %v320 = vmul.f32 %v247, %v247
        %v321 = vmul.f32 %v248, %v248
        %v322 = vmul.f32 %v249, %v249
        %v323 = vmul.f32 %v250, %v250
        %v324 = vmul.f32 %v251, %v251
        %v325 = vmul.f32 %v252, %v252
        %v326 = vmul.f32 %v253, %v253
        %v327 = vmul.f32 %v254, %v254
        %v328 = vadd.f32 %v296, %v297
        %v329 = vadd.f32 %v328, %v298
        %v330 = vadd.f32 %v329, %v299
        %v331 = vadd.f32 %v330, %v300
        %v332 = vadd.f32 %v331, %v301
        %v333 = vadd.f32 %v332, %v302
        %v334 = vadd.f32 %v333, %v303
        %v335 = vadd.f32 %v334, %v304
        %v336 = vadd.f32 %v335, %v305
        %v337 = vadd.f32 %v336, %v306
        %v338 = vadd.f32 %v337, %v307
        %v339 = vadd.f32 %v338, %v308
        %v340 = vadd.f32 %v339, %v309
        %v341 = vadd.f32 %v340, %v310
        %v342 = vadd.f32 %v341, %v311
        %v343 = vadd.f32 %v342, %v312
        %v344 = vadd.f32 %v343, %v313
        %v345 = vadd.f32 %v344, %v314
        %v346 = vadd.f32 %v345, %v315
        %v347 = vadd.f32 %v346, %v316
        %v348 = vadd.f32 %v347, %v317
        %v349 = vadd.f32 %v348, %v318
        %v350 = vadd.f32 %v349, %v319
        %v351 = vadd.f32 %v350, %v320
        %v352 = vadd.f32 %v351, %v321
        %v353 = vadd.f32 %v352, %v322
        %v354 = vadd.f32 %v353, %v323
        %v355 = vadd.f32 %v354, %v324
        %v356 = vadd.f32 %v355, %v325
        %v357 = vadd.f32 %v356, %v326
        %v358 = vadd.f32 %v357, %v327
        %v359 = vrot.slane %v358, 4
        %v360 = vadd.f32 %v358, %v359
        %v361 = vrot.slane %v360, 2
        %v362 = vadd.f32 %v360, %v361
        %v363 = vrot.slane %v362, 1
        %v364 = vadd.f32 %v362, %v363
        %v365 = vadd.f32 %v295, %v364
        %366 = vst [vmem:[%s216] sm:$0x1] %v365
        %p367 = scmp.lt.s32.totalorder %s22, 0
        %s368 = scalar_select %p367, %s22, 0
        %p369 = scmp.lt.s32.totalorder %s23, 1
        %s370 = scalar_select %p369, %s23, 1
        %s371 = smul.addr %s368, 2
        %s372 = sadd.s32 %s370, %s371
        %s373 = scalar_lea.vmem %s1, %s372
        %p374 = scmp.lt.s32.totalorder %s22, 0
        %s375 = scalar_select %p374, %s22, 0
        %p376 = scmp.lt.s32.totalorder %s23, 1
        %s377 = scalar_select %p376, %s23, 1
        %s378 = smul.addr %s375, 2
        %s379 = sadd.s32 %s377, %s378
        %s380 = scalar_lea.vmem %s2, %s379
        // Predicated region
        $region33: #{attn_block_pallas.3} parent=23 // pred_check
          %p381 = pneg %p86
        $region34: #{attn_block_pallas.3} parent=23 // pred_check_branch
          %383 = sbr.rel (%p381) target = $region36
        $region35: #{attn_block_pallas.3} parent=23 // pred_region
          _
        $region36: #{attn_block_pallas.3} parent=23 // pred_fallthru
          _
        // Predicated region
        $region37: #{attn_block_pallas.3} parent=23 // pred_check
          %p384 = pneg %p114
        $region38: #{attn_block_pallas.3} parent=23 // pred_check_branch
          %386 = sbr.rel (%p384) target = $region40
        $region39: #{attn_block_pallas.3} parent=23 // pred_region
          _
        $region40: #{attn_block_pallas.3} parent=23 // pred_fallthru
          _
      $region24: #{attn_block_pallas.3} parent=5 // pred_fallthru
        _
      %p387 = scmp.le.s32.totalorder 2, %s12
      // Predicated region
      $region41: #{attn_block_pallas.3} parent=5 // pred_check
        %p388 = pneg %p387
      $region42: #{attn_block_pallas.3} parent=5 // pred_check_branch
        %390 = sbr.rel (%p388) target = $region44
      $region43: #{attn_block_pallas.3} parent=5 // pred_region
        %s391 = ssub.s32 %s12, 2
        // Predicated region
        $region45: #{attn_block_pallas.3} parent=43 // pred_check
          %p392 = pneg %p92
        $region46: #{attn_block_pallas.3} parent=43 // pred_check_branch
          %394 = sbr.rel (%p392) target = $region48
        $region47: #{attn_block_pallas.3} parent=43 // pred_region
          %p395 = scmp.lt.s32.totalorder %s25, 0
          %s396 = scalar_select %p395, %s25, 0
          %p397 = scmp.lt.s32.totalorder %s26, 1
          %s398 = scalar_select %p397, %s26, 1
          %s399 = smul.addr %s396, 2
          %s400 = sadd.s32 %s398, %s399
          %s401 = scalar_lea.vmem %s1, %s400
        $region48: #{attn_block_pallas.3} parent=43 // pred_fallthru
          _
        // Predicated region
        $region49: #{attn_block_pallas.3} parent=43 // pred_check
          %p402 = pneg %p120
        $region50: #{attn_block_pallas.3} parent=43 // pred_check_branch
          %404 = sbr.rel (%p402) target = $region52
        $region51: #{attn_block_pallas.3} parent=43 // pred_region
          %p405 = scmp.lt.s32.totalorder %s25, 0
          %s406 = scalar_select %p405, %s25, 0
          %p407 = scmp.lt.s32.totalorder %s26, 1
          %s408 = scalar_select %p407, %s26, 1
          %s409 = smul.addr %s406, 2
          %s410 = sadd.s32 %s408, %s409
          %s411 = scalar_lea.vmem %s2, %s410
        $region52: #{attn_block_pallas.3} parent=43 // pred_fallthru
          _
      $region44: #{attn_block_pallas.3} parent=5 // pred_fallthru
        _
    $region6: #{attn_block_pallas.3} parent=1 // loop_footer
      %s16 = sadd.s32 1, %s12
    $region7: #{attn_block_pallas.3} parent=1 // loop_footer_branch
      %11 = sbr.rel target = $region3
    $region8: #{attn_block_pallas.3} parent=1 // loop_exit
      _
    %412 = vsyncpa [#allocation3], 1
    %s413 = scalar_lea.sflag [#allocation3], 1
    %414 = vsyncpa %s413, 1

// kernel: attn_block_pallas.4
$region0: #{attn_block_pallas.4}
  #allocation0 [shape = 'u32[]', space=smem, size = 0x4, offset = 0x4, fixed_abs, tag = 'smem constant byte address 0x4 - core index']
  #allocation1 [shape = 'u32[144,128]{1,0:T(1,128)}', space=vmem, size = 0x12000, scoped, tag = 'internal scratch']
  %s0 = inlined_call_operand.vmem [shape: f32[2,256,128], index: 0, kind: input, shape index: {}]
  %s1 = inlined_call_operand.vmem [shape: f32[2,1,128], index: 1, kind: input, shape index: {}]
  %s2 = inlined_call_operand.vmem [shape: f32[2,1,128], index: 2, kind: input, shape index: {}]
  %s3 = inlined_call_operand.vmem [shape: bf16[128,384], index: 3, kind: input, shape index: {}]
  %s4 = inlined_call_operand.vmem [shape: f32[1,384], index: 4, kind: input, shape index: {}]
  %s5 = inlined_call_operand.vmem [shape: bf16[2,256,384], index: 5, kind: output, shape index: {}]
  %s6 = sld [smem:[#allocation0]]
  $region53: #{attn_block_pallas.4} parent=0
    _
  %s8 = ssub.s32 1, %s6
  %s9 = scalar_select 0, %s8, %s6
  loop: start=0, step=1, limit=4
  $region2: #{attn_block_pallas.4} parent=0 // loop_pre_header
    _
  $region3: #{attn_block_pallas.4} parent=0 // loop_header
    %s11 = sphi 0, %s15
    %p12 = scmp.ge.s32.totalorder %s11, 4
    %s18 = sphi 0, %s30
    %s19 = sphi 0, %s26
    %s20 = sphi 0, %s18
    %s21 = sphi 0, %s19
    %s22 = sphi 0, %s20
    %s23 = sphi 0, %s21
    %s35 = sphi 0, %s37
    %s38 = sphi 0, %s35
    %s39 = sphi 0, %s38
    %s55 = sphi 0, %s39
    %s61 = sphi 0, %s63
    %s64 = sphi 0, %s61
    %s65 = sphi 0, %s64
    %s81 = sphi 0, %s65
    %s87 = sphi 0, %s89
    %s90 = sphi 0, %s87
    %s91 = sphi 0, %s90
    %s107 = sphi 0, %s91
    %s111 = sphi 0, %s111
    %s113 = sphi 0, %s111
    %s114 = sphi 0, %s113
    %s128 = sphi 0, %s114
    %s132 = sphi 0, %s132
    %s134 = sphi 0, %s132
    %s135 = sphi 0, %s134
    %s149 = sphi 0, %s135
    %s157 = sphi 0, %s159
    %s160 = sphi 0, %s157
    %s161 = sphi 0, %s160
    %s177 = sphi 0, %s161
  $region4: #{attn_block_pallas.4} parent=0 // loop_header_branch
    %14 = sbr.rel (%p12) target = $region8
  $region5: #{attn_block_pallas.4} parent=0 // loop_body
    %s16 = ssub.s32 %s11, 1
    %s17 = ssub.s32 %s11, 2
    %s24 = sadd.s32 1, %s19
    %p25 = scmp.ge.s32.totalorder %s24, 1
    %s26 = scalar_select %p25, 0, %s24
    %s27 = sadd.s32 1, %s18
    %s28 = scalar_select %p25, %s27, %s18
    %p29 = scmp.ge.s32.totalorder %s28, 2
    %s30 = scalar_select %p29, 0, %s28
    %s31 = ssub.s32 %s18, %s30
    %s32 = ssub.s32 %s19, %s26
    %s33 = sor.u32 %s31, %s32
    %p34 = scmp.eq.s32.totalorder %s33, 0
    %s36 = sadd.s32 %s35, 1
    %s37 = scalar_select %p34, %s35, %s36
    %p40 = pneg %p34
    %p41 = scmp.eq.s32.totalorder %s11, 1
    %p42 = por %p40, %p41
    %p43 = scmp.ne.s32.totalorder %s35, %s38
    %p44 = scmp.eq.s32.totalorder %s11, 0
    %p45 = por %p43, %p44
    %p46 = scmp.ne.s32.totalorder %s35, %s38
    %p47 = scmp.eq.s32.totalorder %s16, 1
    %p48 = por %p46, %p47
    %p49 = scmp.ne.s32.totalorder %s38, %s39
    %p50 = scmp.eq.s32.totalorder %s16, 0
    %p51 = por %p49, %p50
    %p52 = scmp.ne.s32.totalorder %s38, %s39
    %p53 = scmp.eq.s32.totalorder %s17, 1
    %p54 = por %p52, %p53
    %p56 = scmp.ne.s32.totalorder %s39, %s55
    %p57 = scmp.eq.s32.totalorder %s17, 0
    %p58 = por %p56, %p57
    %s59 = ssub.s32 %s18, %s30
    %p60 = scmp.eq.s32.totalorder %s59, 0
    %s62 = sadd.s32 %s61, 1
    %s63 = scalar_select %p60, %s61, %s62
    %p66 = pneg %p60
    %p67 = scmp.eq.s32.totalorder %s11, 1
    %p68 = por %p66, %p67
    %p69 = scmp.ne.s32.totalorder %s61, %s64
    %p70 = scmp.eq.s32.totalorder %s11, 0
    %p71 = por %p69, %p70
    %p72 = scmp.ne.s32.totalorder %s61, %s64
    %p73 = scmp.eq.s32.totalorder %s16, 1
    %p74 = por %p72, %p73
    %p75 = scmp.ne.s32.totalorder %s64, %s65
    %p76 = scmp.eq.s32.totalorder %s16, 0
    %p77 = por %p75, %p76
    %p78 = scmp.ne.s32.totalorder %s64, %s65
    %p79 = scmp.eq.s32.totalorder %s17, 1
    %p80 = por %p78, %p79
    %p82 = scmp.ne.s32.totalorder %s65, %s81
    %p83 = scmp.eq.s32.totalorder %s17, 0
    %p84 = por %p82, %p83
    %s85 = ssub.s32 %s18, %s30
    %p86 = scmp.eq.s32.totalorder %s85, 0
    %s88 = sadd.s32 %s87, 1
    %s89 = scalar_select %p86, %s87, %s88
    %p92 = pneg %p86
    %p93 = scmp.eq.s32.totalorder %s11, 1
    %p94 = por %p92, %p93
    %p95 = scmp.ne.s32.totalorder %s87, %s90
    %p96 = scmp.eq.s32.totalorder %s11, 0
    %p97 = por %p95, %p96
    %p98 = scmp.ne.s32.totalorder %s87, %s90
    %p99 = scmp.eq.s32.totalorder %s16, 1
    %p100 = por %p98, %p99
    %p101 = scmp.ne.s32.totalorder %s90, %s91
    %p102 = scmp.eq.s32.totalorder %s16, 0
    %p103 = por %p101, %p102
    %p104 = scmp.ne.s32.totalorder %s90, %s91
    %p105 = scmp.eq.s32.totalorder %s17, 1
    %p106 = por %p104, %p105
    %p108 = scmp.ne.s32.totalorder %s91, %s107
    %p109 = scmp.eq.s32.totalorder %s17, 0
    %p110 = por %p108, %p109
    %s112 = sadd.s32 %s111, 1
    %p115 = scmp.eq.s32.totalorder %s11, 1
    %p116 = scmp.ne.s32.totalorder %s111, %s113
    %p117 = scmp.eq.s32.totalorder %s11, 0
    %p118 = por %p116, %p117
    %p119 = scmp.ne.s32.totalorder %s111, %s113
    %p120 = scmp.eq.s32.totalorder %s16, 1
    %p121 = por %p119, %p120
    %p122 = scmp.ne.s32.totalorder %s113, %s114
    %p123 = scmp.eq.s32.totalorder %s16, 0
    %p124 = por %p122, %p123
    %p125 = scmp.ne.s32.totalorder %s113, %s114
    %p126 = scmp.eq.s32.totalorder %s17, 1
    %p127 = por %p125, %p126
    %p129 = scmp.ne.s32.totalorder %s114, %s128
    %p130 = scmp.eq.s32.totalorder %s17, 0
    %p131 = por %p129, %p130
    %s133 = sadd.s32 %s132, 1
    %p136 = scmp.eq.s32.totalorder %s11, 1
    %p137 = scmp.ne.s32.totalorder %s132, %s134
    %p138 = scmp.eq.s32.totalorder %s11, 0
    %p139 = por %p137, %p138
    %p140 = scmp.ne.s32.totalorder %s132, %s134
    %p141 = scmp.eq.s32.totalorder %s16, 1
    %p142 = por %p140, %p141
    %p143 = scmp.ne.s32.totalorder %s134, %s135
    %p144 = scmp.eq.s32.totalorder %s16, 0
    %p145 = por %p143, %p144
    %p146 = scmp.ne.s32.totalorder %s134, %s135
    %p147 = scmp.eq.s32.totalorder %s17, 1
    %p148 = por %p146, %p147
    %p150 = scmp.ne.s32.totalorder %s135, %s149
    %p151 = scmp.eq.s32.totalorder %s17, 0
    %p152 = por %p150, %p151
    %s153 = ssub.s32 %s18, %s30
    %s154 = ssub.s32 %s19, %s26
    %s155 = sor.u32 %s153, %s154
    %p156 = scmp.eq.s32.totalorder %s155, 0
    %s158 = sadd.s32 %s157, 1
    %s159 = scalar_select %p156, %s157, %s158
    %p162 = pneg %p156
    %p163 = scmp.eq.s32.totalorder %s11, 1
    %p164 = por %p162, %p163
    %p165 = scmp.ne.s32.totalorder %s157, %s160
    %p166 = scmp.eq.s32.totalorder %s11, 0
    %p167 = por %p165, %p166
    %p168 = scmp.ne.s32.totalorder %s157, %s160
    %p169 = scmp.eq.s32.totalorder %s16, 1
    %p170 = por %p168, %p169
    %p171 = scmp.ne.s32.totalorder %s160, %s161
    %p172 = scmp.eq.s32.totalorder %s16, 0
    %p173 = por %p171, %p172
    %p174 = scmp.ne.s32.totalorder %s160, %s161
    %p175 = scmp.eq.s32.totalorder %s17, 1
    %p176 = por %p174, %p175
    %p178 = scmp.ne.s32.totalorder %s161, %s177
    %p179 = scmp.eq.s32.totalorder %s17, 0
    %p180 = por %p178, %p179
    %p181 = scmp.le.s32.totalorder 1, %s11
    %p182 = scmp.lt.s32.totalorder %s11, 3
    %p183 = pnand %p181, %p182
    %p184 = pneg %p183
    // Predicated region
    $region9: #{attn_block_pallas.4} parent=5 // pred_check
      _
    $region10: #{attn_block_pallas.4} parent=5 // pred_check_branch
      %186 = sbr.rel (%p183) target = $region12
    $region11: #{attn_block_pallas.4} parent=5 // pred_region
      %s187 = ssub.s32 %s11, 1
      // Predicated region
      $region13: #{attn_block_pallas.4} parent=11 // pred_check
        %p188 = pneg %p124
      $region14: #{attn_block_pallas.4} parent=11 // pred_check_branch
        %190 = sbr.rel (%p188) target = $region16
      $region15: #{attn_block_pallas.4} parent=11 // pred_region
        _
      $region16: #{attn_block_pallas.4} parent=11 // pred_fallthru
        _
      // Predicated region
      $region17: #{attn_block_pallas.4} parent=11 // pred_check
        %p191 = pneg %p145
      $region18: #{attn_block_pallas.4} parent=11 // pred_check_branch
        %193 = sbr.rel (%p191) target = $region20
      $region19: #{attn_block_pallas.4} parent=11 // pred_region
        _
      $region20: #{attn_block_pallas.4} parent=11 // pred_fallthru
        _
    $region12: #{attn_block_pallas.4} parent=5 // pred_fallthru
      _
    %p194 = scmp.lt.s32.totalorder %s11, 2
    // Predicated region
    $region21: #{attn_block_pallas.4} parent=5 // pred_check
      %p195 = pneg %p194
    $region22: #{attn_block_pallas.4} parent=5 // pred_check_branch
      %197 = sbr.rel (%p195) target = $region24
    $region23: #{attn_block_pallas.4} parent=5 // pred_region
      // Predicated region
      $region25: #{attn_block_pallas.4} parent=23 // pred_check
        %p198 = pneg %p45
      $region26: #{attn_block_pallas.4} parent=23 // pred_check_branch
        %200 = sbr.rel (%p198) target = $region28
      $region27: #{attn_block_pallas.4} parent=23 // pred_region
        %s201 = smul.u32 32, %s19
        %p202 = scmp.lt.s32.totalorder %s18, 1
        %s203 = scalar_select %p202, %s18, 1
        %p204 = scmp.lt.s32.totalorder %s201, 31
        %s205 = scalar_select %p204, %s201, 31
        %s206 = smul.addr %s203, 32
        %s207 = sadd.s32 %s205, %s206
        %s208 = smul.addr %s207, 8
        %s209 = scalar_lea.vmem %s0, %s208
        %s210 = smul.u32 32, %s19
      $region28: #{attn_block_pallas.4} parent=23 // pred_fallthru
        _
      // Predicated region
      $region29: #{attn_block_pallas.4} parent=23 // pred_check
        %p211 = pneg %p71
      $region30: #{attn_block_pallas.4} parent=23 // pred_check_branch
        %213 = sbr.rel (%p211) target = $region32
      $region31: #{attn_block_pallas.4} parent=23 // pred_region
        %p214 = scmp.lt.s32.totalorder %s18, 1
        %s215 = scalar_select %p214, %s18, 1
        %s216 = scalar_lea.vmem %s1, %s215
      $region32: #{attn_block_pallas.4} parent=23 // pred_fallthru
        _
      // Predicated region
      $region33: #{attn_block_pallas.4} parent=23 // pred_check
        %p217 = pneg %p97
      $region34: #{attn_block_pallas.4} parent=23 // pred_check_branch
        %219 = sbr.rel (%p217) target = $region36
      $region35: #{attn_block_pallas.4} parent=23 // pred_region
        %p220 = scmp.lt.s32.totalorder %s18, 1
        %s221 = scalar_select %p220, %s18, 1
        %s222 = scalar_lea.vmem %s2, %s221
      $region36: #{attn_block_pallas.4} parent=23 // pred_fallthru
        _
    $region24: #{attn_block_pallas.4} parent=5 // pred_fallthru
      _
    %p223 = scmp.le.s32.totalorder 1, %s11
    %p224 = scmp.lt.s32.totalorder %s11, 3
    %p225 = pnand %p223, %p224
    %p226 = pneg %p225
    // Predicated region
    $region37: #{attn_block_pallas.4} parent=5 // pred_check
      _
    $region38: #{attn_block_pallas.4} parent=5 // pred_check_branch
      %228 = sbr.rel (%p225) target = $region40
    $region39: #{attn_block_pallas.4} parent=5 // pred_region
      %s229 = ssub.s32 %s11, 1
      %s230 = smul.u32 32, %s21
      %p231 = scmp.lt.s32.totalorder %s20, 1
      %s232 = scalar_select %p231, %s20, 1
      %p233 = scmp.lt.s32.totalorder %s230, 31
      %s234 = scalar_select %p233, %s230, 31
      %s235 = smul.addr %s232, 32
      %s236 = sadd.s32 %s234, %s235
      %s237 = smul.addr %s236, 8
      %s238 = scalar_lea.vmem %s0, %s237
      %p239 = pneg %p51
      %p240 = pneg %p48
      %p241 = scmp.lt.s32.totalorder %s20, 1
      %s242 = scalar_select %p241, %s20, 1
      %s243 = scalar_lea.vmem %s1, %s242
      %p244 = pneg %p77
      %p245 = pneg %p74
      %p246 = scmp.lt.s32.totalorder %s20, 1
      %s247 = scalar_select %p246, %s20, 1
      %s248 = scalar_lea.vmem %s2, %s247
      %p249 = pneg %p103
      %p250 = pneg %p100
      %p251 = pneg %p124
      %p252 = pneg %p121
      %p253 = pneg %p145
      %p254 = pneg %p142
      %p255 = pneg %p173
      %p256 = pneg %p170
      %s257 = smul.u32 32, %s21
      %p258 = scmp.lt.s32.totalorder %s20, 1
      %s259 = scalar_select %p258, %s20, 1
      %p260 = scmp.lt.s32.totalorder %s257, 31
      %s261 = scalar_select %p260, %s257, 31
      %s262 = smul.addr %s261, 3
      %s263 = smul.addr %s259, 96
      %s264 = sadd.s32 %s262, %s263
      %s265 = smul.addr %s264, 4
      %s266 = scalar_lea.vmem %s5, %s265
      %s267 = smul.u32 32, %s21
      %p268 = scmp.lt.s32.totalorder %s20, 1
      %s269 = scalar_select %p268, %s20, 1
      %p270 = scmp.lt.s32.totalorder %s267, 31
      %s271 = scalar_select %p270, %s267, 31
      %s272 = smul.addr %s269, 32
      %s273 = sadd.s32 %s271, %s272
      %s274 = smul.addr %s273, 8
      %s275 = scalar_lea.vmem %s0, %s274
      %s276 = smul.u32 32, %s21
      %p277 = scmp.lt.s32.totalorder %s20, 1
      %s278 = scalar_select %p277, %s20, 1
      %s279 = scalar_lea.vmem %s1, %s278
      %p280 = scmp.lt.s32.totalorder %s20, 1
      %s281 = scalar_select %p280, %s20, 1
      %s282 = scalar_lea.vmem %s2, %s281
      %s283 = smul.u32 32, %s21
      %p284 = scmp.lt.s32.totalorder %s20, 1
      %s285 = scalar_select %p284, %s20, 1
      %p286 = scmp.lt.s32.totalorder %s283, 31
      %s287 = scalar_select %p286, %s283, 31
      %s288 = smul.addr %s287, 3
      %s289 = smul.addr %s285, 96
      %s290 = sadd.s32 %s288, %s289
      %s291 = smul.addr %s290, 4
      %s292 = scalar_lea.vmem %s5, %s291
      %s293 = smul.u32 32, %s21
      %v295 = vld [vmem:[%s275] sm:$0xff]
      %v296 = vld [vmem:[%s275 + $0x8] sm:$0xff]
      %v297 = vld [vmem:[%s275 + $0x10] sm:$0xff]
      %v298 = vld [vmem:[%s275 + $0x18] sm:$0xff]
      %v299 = vld [vmem:[%s275 + $0x20] sm:$0xff]
      %v300 = vld [vmem:[%s275 + $0x28] sm:$0xff]
      %v301 = vld [vmem:[%s275 + $0x30] sm:$0xff]
      %v302 = vld [vmem:[%s275 + $0x38] sm:$0xff]
      %v303 = vld [vmem:[%s275 + $0x40] sm:$0xff]
      %v304 = vld [vmem:[%s275 + $0x48] sm:$0xff]
      %v305 = vld [vmem:[%s275 + $0x50] sm:$0xff]
      %v306 = vld [vmem:[%s275 + $0x58] sm:$0xff]
      %v307 = vld [vmem:[%s275 + $0x60] sm:$0xff]
      %v308 = vld [vmem:[%s275 + $0x68] sm:$0xff]
      %v309 = vld [vmem:[%s275 + $0x70] sm:$0xff]
      %v310 = vld [vmem:[%s275 + $0x78] sm:$0xff]
      %v311 = vld [vmem:[%s275 + $0x80] sm:$0xff]
      %v312 = vld [vmem:[%s275 + $0x88] sm:$0xff]
      %v313 = vld [vmem:[%s275 + $0x90] sm:$0xff]
      %v314 = vld [vmem:[%s275 + $0x98] sm:$0xff]
      %v315 = vld [vmem:[%s275 + $0xa0] sm:$0xff]
      %v316 = vld [vmem:[%s275 + $0xa8] sm:$0xff]
      %v317 = vld [vmem:[%s275 + $0xb0] sm:$0xff]
      %v318 = vld [vmem:[%s275 + $0xb8] sm:$0xff]
      %v319 = vld [vmem:[%s275 + $0xc0] sm:$0xff]
      %v320 = vld [vmem:[%s275 + $0xc8] sm:$0xff]
      %v321 = vld [vmem:[%s275 + $0xd0] sm:$0xff]
      %v322 = vld [vmem:[%s275 + $0xd8] sm:$0xff]
      %v323 = vld [vmem:[%s275 + $0xe0] sm:$0xff]
      %v324 = vld [vmem:[%s275 + $0xe8] sm:$0xff]
      %v325 = vld [vmem:[%s275 + $0xf0] sm:$0xff]
      %v326 = vld [vmem:[%s275 + $0xf8] sm:$0xff]
      %v327 = vld [vmem:[%s279] sm:$0x1]
      %v329 = vlaneseq
      %v330 = vshrl.u32 %v329, 7
      %v331 = vsub.s32 0, %v330
      %v332 = vrot.slane %v327, %v331
      %v334 = vmul.f32 %v295, %v332
      %v335 = vmul.f32 %v296, %v332
      %v336 = vmul.f32 %v297, %v332
      %v337 = vmul.f32 %v298, %v332
      %v338 = vmul.f32 %v299, %v332
      %v339 = vmul.f32 %v300, %v332
      %v340 = vmul.f32 %v301, %v332
      %v341 = vmul.f32 %v302, %v332
      %v342 = vmul.f32 %v303, %v332
      %v343 = vmul.f32 %v304, %v332
      %v344 = vmul.f32 %v305, %v332
      %v345 = vmul.f32 %v306, %v332
      %v346 = vmul.f32 %v307, %v332
      %v347 = vmul.f32 %v308, %v332
      %v348 = vmul.f32 %v309, %v332
      %v349 = vmul.f32 %v310, %v332
      %v350 = vmul.f32 %v311, %v332
      %v351 = vmul.f32 %v312, %v332
      %v352 = vmul.f32 %v313, %v332
      %v353 = vmul.f32 %v314, %v332
      %v354 = vmul.f32 %v315, %v332
      %v355 = vmul.f32 %v316, %v332
      %v356 = vmul.f32 %v317, %v332
      %v357 = vmul.f32 %v318, %v332
      %v358 = vmul.f32 %v319, %v332
      %v359 = vmul.f32 %v320, %v332
      %v360 = vmul.f32 %v321, %v332
      %v361 = vmul.f32 %v322, %v332
      %v362 = vmul.f32 %v323, %v332
      %v363 = vmul.f32 %v324, %v332
      %v364 = vmul.f32 %v325, %v332
      %v365 = vmul.f32 %v326, %v332
      %v366 = vld [vmem:[%s282] sm:$0x1]
      %v368 = vlaneseq
      %v369 = vshrl.u32 %v368, 7
      %v370 = vsub.s32 0, %v369
      %v371 = vrot.slane %v366, %v370
      %v373 = vadd.f32 %v334, %v371
      %v374 = vadd.f32 %v335, %v371
      %v375 = vadd.f32 %v336, %v371
      %v376 = vadd.f32 %v337, %v371
      %v377 = vadd.f32 %v338, %v371
      %v378 = vadd.f32 %v339, %v371
      %v379 = vadd.f32 %v340, %v371
      %v380 = vadd.f32 %v341, %v371
      %v381 = vadd.f32 %v342, %v371
      %v382 = vadd.f32 %v343, %v371
      %v383 = vadd.f32 %v344, %v371
      %v384 = vadd.f32 %v345, %v371
      %v385 = vadd.f32 %v346, %v371
      %v386 = vadd.f32 %v347, %v371
      %v387 = vadd.f32 %v348, %v371
      %v388 = vadd.f32 %v349, %v371
      %v389 = vadd.f32 %v350, %v371
      %v390 = vadd.f32 %v351, %v371
      %v391 = vadd.f32 %v352, %v371
      %v392 = vadd.f32 %v353, %v371
      %v393 = vadd.f32 %v354, %v371
      %v394 = vadd.f32 %v355, %v371
      %v395 = vadd.f32 %v356, %v371
      %v396 = vadd.f32 %v357, %v371
      %v397 = vadd.f32 %v358, %v371
      %v398 = vadd.f32 %v359, %v371
      %v399 = vadd.f32 %v360, %v371
      %v400 = vadd.f32 %v361, %v371
      %v401 = vadd.f32 %v362, %v371
      %v402 = vadd.f32 %v363, %v371
      %v403 = vadd.f32 %v364, %v371
      %v404 = vadd.f32 %v365, %v371
      %v405 = vpack.c.bf16 %v374, %v373
      %v406 = vpack.c.bf16 %v376, %v375
      %v407 = vpack.c.bf16 %v378, %v377
      %v408 = vpack.c.bf16 %v380, %v379
      %v409 = vpack.c.bf16 %v382, %v381
      %v410 = vpack.c.bf16 %v384, %v383
      %v411 = vpack.c.bf16 %v386, %v385
      %v412 = vpack.c.bf16 %v388, %v387
      %v413 = vpack.c.bf16 %v390, %v389
      %v414 = vpack.c.bf16 %v392, %v391
      %v415 = vpack.c.bf16 %v394, %v393
      %v416 = vpack.c.bf16 %v396, %v395
      %v417 = vpack.c.bf16 %v398, %v397
      %v418 = vpack.c.bf16 %v400, %v399
      %v419 = vpack.c.bf16 %v402, %v401
      %v420 = vpack.c.bf16 %v404, %v403
      %v421 = vld [vmem:[%s3] sm:$0xff]
      %v422 = vld [vmem:[%s3 + $0x8] sm:$0xf]
      %v423 = vld [vmem:[%s3 + $0xc] sm:$0xff]
      %v424 = vld [vmem:[%s3 + $0x14] sm:$0xf]
      %v425 = vld [vmem:[%s3 + $0x18] sm:$0xff]
      %v426 = vld [vmem:[%s3 + $0x20] sm:$0xf]
      %v427 = vld [vmem:[%s3 + $0x24] sm:$0xff]
      %v428 = vld [vmem:[%s3 + $0x2c] sm:$0xf]
      %v429 = vld [vmem:[%s3 + $0x30] sm:$0xff]
      %v430 = vld [vmem:[%s3 + $0x38] sm:$0xf]
      %v431 = vld [vmem:[%s3 + $0x3c] sm:$0xff]
      %v432 = vld [vmem:[%s3 + $0x44] sm:$0xf]
      %v433 = vld [vmem:[%s3 + $0x48] sm:$0xff]
      %v434 = vld [vmem:[%s3 + $0x50] sm:$0xf]
      %v435 = vld [vmem:[%s3 + $0x54] sm:$0xff]
      %v436 = vld [vmem:[%s3 + $0x5c] sm:$0xf]
      %v437 = vld [vmem:[%s3 + $0x60] sm:$0xff]
      %v438 = vld [vmem:[%s3 + $0x68] sm:$0xf]
      %v439 = vld [vmem:[%s3 + $0x6c] sm:$0xff]
      %v440 = vld [vmem:[%s3 + $0x74] sm:$0xf]
      %v441 = vld [vmem:[%s3 + $0x78] sm:$0xff]
      %v442 = vld [vmem:[%s3 + $0x80] sm:$0xf]
      %v443 = vld [vmem:[%s3 + $0x84] sm:$0xff]
      %v444 = vld [vmem:[%s3 + $0x8c] sm:$0xf]
      %v445 = vld [vmem:[%s3 + $0x90] sm:$0xff]
      %v446 = vld [vmem:[%s3 + $0x98] sm:$0xf]
      %v447 = vld [vmem:[%s3 + $0x9c] sm:$0xff]
      %v448 = vld [vmem:[%s3 + $0xa4] sm:$0xf]
      %v449 = vld [vmem:[%s3 + $0xa8] sm:$0xff]
      %v450 = vld [vmem:[%s3 + $0xb0] sm:$0xf]
      %v451 = vld [vmem:[%s3 + $0xb4] sm:$0xff]
      %v452 = vld [vmem:[%s3 + $0xbc] sm:$0xf]
      %v453 = vld [vmem:[%s4] sm:$0x7]
      %v455 = vlaneseq
      %v456 = vshrl.u32 %v455, 7
      %v457 = vsub.s32 0, %v456
      %v458 = vrot.slane %v453, %v457
      %v459 = vlaneseq
      %v460 = vshrl.u32 %v459, 7
      %v461 = vsub.s32 1, %v460
      %v462 = vrot.slane %v453, %v461
      %v463 = vlaneseq
      %v464 = vshrl.u32 %v463, 7
      %v465 = vsub.s32 2, %v464
      %v466 = vrot.slane %v453, %v465
      %v502 = vunpack.c.l.b16 %v421
      %v503 = vunpack.c.h.b16 %v421
      %v504 = vunpack.c.l.b16 %v422
      %v505 = vunpack.c.l.b16 %v423
      %v506 = vunpack.c.h.b16 %v423
      %v507 = vunpack.c.l.b16 %v424
      %v508 = vunpack.c.l.b16 %v425
      %v509 = vunpack.c.h.b16 %v425
      %v510 = vunpack.c.l.b16 %v426
      %v511 = vunpack.c.l.b16 %v427
      %v512 = vunpack.c.h.b16 %v427
      %v513 = vunpack.c.l.b16 %v428
      %v514 = vunpack.c.l.b16 %v429
      %v515 = vunpack.c.h.b16 %v429
      %v516 = vunpack.c.l.b16 %v430
      %v517 = vunpack.c.l.b16 %v431
      %v518 = vunpack.c.h.b16 %v431
      %v519 = vunpack.c.l.b16 %v432
      %v520 = vunpack.c.l.b16 %v433
      %v521 = vunpack.c.h.b16 %v433
      %v522 = vunpack.c.l.b16 %v434
      %v523 = vunpack.c.l.b16 %v435
      %v524 = vunpack.c.h.b16 %v435
      %v525 = vunpack.c.l.b16 %v436
      %v526 = vunpack.c.l.b16 %v437
      %v527 = vunpack.c.h.b16 %v437
      %v528 = vunpack.c.l.b16 %v438
      %v529 = vunpack.c.l.b16 %v439
      %v530 = vunpack.c.h.b16 %v439
      %v531 = vunpack.c.l.b16 %v440
      %v532 = vunpack.c.l.b16 %v441
      %v533 = vunpack.c.h.b16 %v441
      %v534 = vunpack.c.l.b16 %v442
      %v535 = vunpack.c.l.b16 %v443
      %v536 = vunpack.c.h.b16 %v443
      %v537 = vunpack.c.l.b16 %v444
      %v538 = vunpack.c.l.b16 %v445
      %v539 = vunpack.c.h.b16 %v445
      %v540 = vunpack.c.l.b16 %v446
      %v541 = vunpack.c.l.b16 %v447
      %v542 = vunpack.c.h.b16 %v447
      %v543 = vunpack.c.l.b16 %v448
      %v544 = vunpack.c.l.b16 %v449
      %v545 = vunpack.c.h.b16 %v449
      %v546 = vunpack.c.l.b16 %v450
      %v547 = vunpack.c.l.b16 %v451
      %v548 = vunpack.c.h.b16 %v451
      %v549 = vunpack.c.l.b16 %v452
      %v550 = vpack.c.b16 %v505, %v502
      %v551 = vpack.c.b16 %v506, %v503
      %v552 = vpack.c.b16 %v507, %v504
      %v553 = vpack.c.b16 %v511, %v508
      %v554 = vpack.c.b16 %v512, %v509
      %v555 = vpack.c.b16 %v513, %v510
      %v556 = vpack.c.b16 %v517, %v514
      %v557 = vpack.c.b16 %v518, %v515
      %v558 = vpack.c.b16 %v519, %v516
      %v559 = vpack.c.b16 %v523, %v520
      %v560 = vpack.c.b16 %v524, %v521
      %v561 = vpack.c.b16 %v525, %v522
      %v562 = vpack.c.b16 %v529, %v526
      %v563 = vpack.c.b16 %v530, %v527
      %v564 = vpack.c.b16 %v531, %v528
      %v565 = vpack.c.b16 %v535, %v532
      %v566 = vpack.c.b16 %v536, %v533
      %v567 = vpack.c.b16 %v537, %v534
      %v568 = vpack.c.b16 %v541, %v538
      %v569 = vpack.c.b16 %v542, %v539
      %v570 = vpack.c.b16 %v543, %v540
      %v571 = vpack.c.b16 %v547, %v544
      %v572 = vpack.c.b16 %v548, %v545
      %v573 = vpack.c.b16 %v549, %v546
      %598 = vmatprep.subr.bf16.mxu0 %v551
      %599 = vmatpush1.bf16.msra.mxu0 %v550
      %600 = vmatprep.subr.bf16.mxu0 %v554
      %601 = vmatpush1.bf16.msra.mxu0 %v553
      %602 = vmatprep.subr.bf16.mxu0 %v557
      %603 = vmatpush1.bf16.msra.mxu0 %v556
      %604 = vmatprep.subr.bf16.mxu0 %v560
      %605 = vmatpush1.bf16.msra.mxu0 %v559
      %606 = vmatprep.subr.bf16.mxu0 %v563
      %607 = vmatpush1.bf16.msra.mxu0 %v562
      %608 = vmatprep.subr.bf16.mxu0 %v566
      %609 = vmatpush1.bf16.msra.mxu0 %v565
      %610 = vmatprep.subr.bf16.mxu0 %v569
      %611 = vmatpush1.bf16.msra.mxu0 %v568
      %612 = vmatprep.subr.bf16.mxu0 %v572
      %613 = vmatpush1.bf16.msra.mxu0 %v571
      %614 = vmatprep.subr.bf16.mxu0 0
      %615 = vmatpush1.bf16.msra.mxu0 0
      %616 = vmatprep.subr.bf16.mxu0 0
      %617 = vmatpush1.bf16.msra.mxu0 0
      %618 = vmatprep.subr.bf16.mxu0 0
      %619 = vmatpush1.bf16.msra.mxu0 0
      %620 = vmatprep.subr.bf16.mxu0 0
      %621 = vmatpush1.bf16.msra.mxu0 0
      %622 = vmatprep.subr.bf16.mxu0 0
      %623 = vmatpush1.bf16.msra.mxu0 0
      %624 = vmatprep.subr.bf16.mxu0 0
      %625 = vmatpush1.bf16.msra.mxu0 0
      %626 = vmatprep.subr.bf16.mxu0 0
      %627 = vmatpush1.bf16.msra.mxu0 0
      %628 = vmatprep.subr.bf16.mxu0 0
      %629 = vmatpush1.bf16.msra.mxu0 0
      %630 = vmatprep.mubr.bf16.mxu0 0
      %631 = vmatmul.mubr.bf16.gmra.mrb[0].mxu0 %v405
      %v632 = vpop.f32.mrb[0].mxu0
      %v633 = vadd.f32 %v458, %v632
      %v634 = vpop.f32.mrb[0].mxu0
      %v635 = vadd.f32 %v462, %v634
      %v636 = vpop.f32.mrb[0].mxu0
      %v637 = vadd.f32 %v458, %v636
      %v638 = vpop.f32.mrb[0].mxu0
      %v639 = vadd.f32 %v462, %v638
      %640 = vmatprep.mubr.bf16.mxu0 0
      %641 = vmatmul.mubr.bf16.gmra.mrb[0].mxu0 %v406
      %v642 = vpop.f32.mrb[0].mxu0
      %v643 = vadd.f32 %v458, %v642
      %v644 = vpop.f32.mrb[0].mxu0
      %v645 = vadd.f32 %v462, %v644
      %v646 = vpop.f32.mrb[0].mxu0
      %v647 = vadd.f32 %v458, %v646
      %v648 = vpop.f32.mrb[0].mxu0
      %v649 = vadd.f32 %v462, %v648
      %650 = vmatprep.mubr.bf16.mxu0 0
      %651 = vmatmul.mubr.bf16.gmra.mrb[0].mxu0 %v407
      %v652 = vpop.f32.mrb[0].mxu0
      %v653 = vadd.f32 %v458, %v652
      %v654 = vpop.f32.mrb[0].mxu0
      %v655 = vadd.f32 %v462, %v654
      %v656 = vpop.f32.mrb[0].mxu0
      %v657 = vadd.f32 %v458, %v656
      %v658 = vpop.f32.mrb[0].mxu0
      %v659 = vadd.f32 %v462, %v658
      %660 = vmatprep.mubr.bf16.mxu0 0
      %661 = vmatmul.mubr.bf16.gmra.mrb[0].mxu0 %v408
      %v662 = vpop.f32.mrb[0].mxu0
      %v663 = vadd.f32 %v458, %v662
      %v664 = vpop.f32.mrb[0].mxu0
      %v665 = vadd.f32 %v462, %v664
      %v666 = vpop.f32.mrb[0].mxu0
      %v667 = vadd.f32 %v458, %v666
      %v668 = vpop.f32.mrb[0].mxu0
      %v669 = vadd.f32 %v462, %v668
      %670 = vmatprep.mubr.bf16.mxu0 0
      %671 = vmatmul.mubr.bf16.gmra.mrb[0].mxu0 %v409
      %v672 = vpop.f32.mrb[0].mxu0
      %v673 = vadd.f32 %v458, %v672
      %v674 = vpop.f32.mrb[0].mxu0
      %v675 = vadd.f32 %v462, %v674
      %v676 = vpop.f32.mrb[0].mxu0
      %v677 = vadd.f32 %v458, %v676
      %v678 = vpop.f32.mrb[0].mxu0
      %v679 = vadd.f32 %v462, %v678
      %680 = vmatprep.mubr.bf16.mxu0 0
      %681 = vmatmul.mubr.bf16.gmra.mrb[0].mxu0 %v410
      %v682 = vpop.f32.mrb[0].mxu0
      %v683 = vadd.f32 %v458, %v682
      %v684 = vpop.f32.mrb[0].mxu0
      %v685 = vadd.f32 %v462, %v684
      %v686 = vpop.f32.mrb[0].mxu0
      %v687 = vadd.f32 %v458, %v686
      %v688 = vpop.f32.mrb[0].mxu0
      %v689 = vadd.f32 %v462, %v688
      %690 = vmatprep.mubr.bf16.mxu0 0
      %691 = vmatmul.mubr.bf16.gmra.mrb[0].mxu0 %v411
      %v692 = vpop.f32.mrb[0].mxu0
      %v693 = vadd.f32 %v458, %v692
      %v694 = vpop.f32.mrb[0].mxu0
      %v695 = vadd.f32 %v462, %v694
      %v696 = vpop.f32.mrb[0].mxu0
      %v697 = vadd.f32 %v458, %v696
      %v698 = vpop.f32.mrb[0].mxu0
      %v699 = vadd.f32 %v462, %v698
      %700 = vmatprep.mubr.bf16.mxu0 0
      %701 = vmatmul.mubr.bf16.gmra.mrb[0].mxu0 %v412
      %v702 = vpop.f32.mrb[0].mxu0
      %v703 = vadd.f32 %v458, %v702
      %v704 = vpop.f32.mrb[0].mxu0
      %v705 = vadd.f32 %v462, %v704
      %v706 = vpop.f32.mrb[0].mxu0
      %v707 = vadd.f32 %v458, %v706
      %v708 = vpop.f32.mrb[0].mxu0
      %v709 = vadd.f32 %v462, %v708
      %710 = vmatprep.mubr.bf16.mxu0 0
      %711 = vmatmul.mubr.bf16.gmra.mrb[0].mxu0 %v413
      %v712 = vpop.f32.mrb[0].mxu0
      %v713 = vadd.f32 %v458, %v712
      %v714 = vpop.f32.mrb[0].mxu0
      %v715 = vadd.f32 %v462, %v714
      %v716 = vpop.f32.mrb[0].mxu0
      %v717 = vadd.f32 %v458, %v716
      %v718 = vpop.f32.mrb[0].mxu0
      %v719 = vadd.f32 %v462, %v718
      %720 = vmatprep.mubr.bf16.mxu0 0
      %721 = vmatmul.mubr.bf16.gmra.mrb[0].mxu0 %v414
      %v722 = vpop.f32.mrb[0].mxu0
      %v723 = vadd.f32 %v458, %v722
      %v724 = vpop.f32.mrb[0].mxu0
      %v725 = vadd.f32 %v462, %v724
      %v726 = vpop.f32.mrb[0].mxu0
      %v727 = vadd.f32 %v458, %v726
      %v728 = vpop.f32.mrb[0].mxu0
      %v729 = vadd.f32 %v462, %v728
      %730 = vmatprep.mubr.bf16.mxu0 0
      %731 = vmatmul.mubr.bf16.gmra.mrb[0].mxu0 %v415
      %v732 = vpop.f32.mrb[0].mxu0
      %v733 = vadd.f32 %v458, %v732
      %v734 = vpop.f32.mrb[0].mxu0
      %v735 = vadd.f32 %v462, %v734
      %v736 = vpop.f32.mrb[0].mxu0
      %v737 = vadd.f32 %v458, %v736
      %v738 = vpop.f32.mrb[0].mxu0
      %v739 = vadd.f32 %v462, %v738
      %740 = vmatprep.mubr.bf16.mxu0 0
      %741 = vmatmul.mubr.bf16.gmra.mrb[0].mxu0 %v416
      %v742 = vpop.f32.mrb[0].mxu0
      %v743 = vadd.f32 %v458, %v742
      %v744 = vpop.f32.mrb[0].mxu0
      %v745 = vadd.f32 %v462, %v744
      %v746 = vpop.f32.mrb[0].mxu0
      %v747 = vadd.f32 %v458, %v746
      %v748 = vpop.f32.mrb[0].mxu0
      %v749 = vadd.f32 %v462, %v748
      %750 = vmatprep.mubr.bf16.mxu0 0
      %751 = vmatmul.mubr.bf16.gmra.mrb[0].mxu0 %v417
      %v752 = vpop.f32.mrb[0].mxu0
      %v753 = vadd.f32 %v458, %v752
      %v754 = vpop.f32.mrb[0].mxu0
      %v755 = vadd.f32 %v462, %v754
      %v756 = vpop.f32.mrb[0].mxu0
      %v757 = vadd.f32 %v458, %v756
      %v758 = vpop.f32.mrb[0].mxu0
      %v759 = vadd.f32 %v462, %v758
      %760 = vmatprep.mubr.bf16.mxu0 0
      %761 = vmatmul.mubr.bf16.gmra.mrb[0].mxu0 %v418
      %v762 = vpop.f32.mrb[0].mxu0
      %v763 = vadd.f32 %v458, %v762
      %v764 = vpop.f32.mrb[0].mxu0
      %v765 = vadd.f32 %v462, %v764
      %v766 = vpop.f32.mrb[0].mxu0
      %v767 = vadd.f32 %v458, %v766
      %v768 = vpop.f32.mrb[0].mxu0
      %v769 = vadd.f32 %v462, %v768
      %770 = vmatprep.mubr.bf16.mxu0 0
      %771 = vmatmul.mubr.bf16.gmra.mrb[0].mxu0 %v419
      %v772 = vpop.f32.mrb[0].mxu0
      %v773 = vadd.f32 %v458, %v772
      %v774 = vpop.f32.mrb[0].mxu0
      %v775 = vadd.f32 %v462, %v774
      %v776 = vpop.f32.mrb[0].mxu0
      %v777 = vadd.f32 %v458, %v776
      %v778 = vpop.f32.mrb[0].mxu0
      %v779 = vadd.f32 %v462, %v778
      %780 = vmatprep.mubr.bf16.mxu0 0
      %781 = vmatmul.mubr.bf16.gmra.mrb[0].mxu0 %v420
      %v782 = vpop.f32.mrb[0].mxu0
      %v783 = vadd.f32 %v458, %v782
      %v784 = vpop.f32.mrb[0].mxu0
      %v785 = vadd.f32 %v462, %v784
      %v786 = vpop.f32.mrb[0].mxu0
      %v787 = vadd.f32 %v458, %v786
      %v788 = vpop.f32.mrb[0].mxu0
      %v789 = vadd.f32 %v462, %v788
      %790 = vdwg.mxu0
      %791 = vmatprep.subr.bf16.mxu0 0
      %792 = vmatpush1.bf16.msra.mxu0 %v552
      %793 = vmatprep.subr.bf16.mxu0 0
      %794 = vmatpush1.bf16.msra.mxu0 %v555
      %795 = vmatprep.subr.bf16.mxu0 0
      %796 = vmatpush1.bf16.msra.mxu0 %v558
      %797 = vmatprep.subr.bf16.mxu0 0
      %798 = vmatpush1.bf16.msra.mxu0 %v561
      %799 = vmatprep.subr.bf16.mxu0 0
      %800 = vmatpush1.bf16.msra.mxu0 %v564
      %801 = vmatprep.subr.bf16.mxu0 0
      %802 = vmatpush1.bf16.msra.mxu0 %v567
      %803 = vmatprep.subr.bf16.mxu0 0
      %804 = vmatpush1.bf16.msra.mxu0 %v570
      %805 = vmatprep.subr.bf16.mxu0 0
      %806 = vmatpush1.bf16.msra.mxu0 %v573
      %807 = vmatprep.subr.bf16.mxu0 0
      %808 = vmatpush1.bf16.msra.mxu0 0
      %809 = vmatprep.subr.bf16.mxu0 0
      %810 = vmatpush1.bf16.msra.mxu0 0
      %811 = vmatprep.subr.bf16.mxu0 0
      %812 = vmatpush1.bf16.msra.mxu0 0
      %813 = vmatprep.subr.bf16.mxu0 0
      %814 = vmatpush1.bf16.msra.mxu0 0
      %815 = vmatprep.subr.bf16.mxu0 0
      %816 = vmatpush1.bf16.msra.mxu0 0
      %817 = vmatprep.subr.bf16.mxu0 0
      %818 = vmatpush1.bf16.msra.mxu0 0
      %819 = vmatprep.subr.bf16.mxu0 0
      %820 = vmatpush1.bf16.msra.mxu0 0
      %821 = vmatprep.subr.bf16.mxu0 0
      %822 = vmatpush1.bf16.msra.mxu0 0
      %823 = vmatprep.mubr.bf16.mxu0 0
      %824 = vmatmul.mubr.bf16.gmra.mrb[0].mxu0 %v405
      %v825 = vpop.f32.mrb[0].mxu0
      %v826 = vadd.f32 %v466, %v825
      %v827 = vpop.f32.mrb[0].mxu0
      %v828 = vpop.f32.mrb[0].mxu0
      %v829 = vadd.f32 %v466, %v828
      %v830 = vpop.f32.mrb[0].mxu0
      %831 = vmatprep.mubr.bf16.mxu0 0
      %832 = vmatmul.mubr.bf16.gmra.mrb[0].mxu0 %v406
      %v833 = vpop.f32.mrb[0].mxu0
      %v834 = vadd.f32 %v466, %v833
      %v835 = vpop.f32.mrb[0].mxu0
      %v836 = vpop.f32.mrb[0].mxu0
      %v837 = vadd.f32 %v466, %v836
      %v838 = vpop.f32.mrb[0].mxu0
      %839 = vmatprep.mubr.bf16.mxu0 0
      %840 = vmatmul.mubr.bf16.gmra.mrb[0].mxu0 %v407
      %v841 = vpop.f32.mrb[0].mxu0
      %v842 = vadd.f32 %v466, %v841
      %v843 = vpop.f32.mrb[0].mxu0
      %v844 = vpop.f32.mrb[0].mxu0
      %v845 = vadd.f32 %v466, %v844
      %v846 = vpop.f32.mrb[0].mxu0
      %847 = vmatprep.mubr.bf16.mxu0 0
      %848 = vmatmul.mubr.bf16.gmra.mrb[0].mxu0 %v408
      %v849 = vpop.f32.mrb[0].mxu0
      %v850 = vadd.f32 %v466, %v849
      %v851 = vpop.f32.mrb[0].mxu0
      %v852 = vpop.f32.mrb[0].mxu0
      %v853 = vadd.f32 %v466, %v852
      %v854 = vpop.f32.mrb[0].mxu0
      %855 = vmatprep.mubr.bf16.mxu0 0
      %856 = vmatmul.mubr.bf16.gmra.mrb[0].mxu0 %v409
      %v857 = vpop.f32.mrb[0].mxu0
      %v858 = vadd.f32 %v466, %v857
      %v859 = vpop.f32.mrb[0].mxu0
      %v860 = vpop.f32.mrb[0].mxu0
      %v861 = vadd.f32 %v466, %v860
      %v862 = vpop.f32.mrb[0].mxu0
      %863 = vmatprep.mubr.bf16.mxu0 0
      %864 = vmatmul.mubr.bf16.gmra.mrb[0].mxu0 %v410
      %v865 = vpop.f32.mrb[0].mxu0
      %v866 = vadd.f32 %v466, %v865
      %v867 = vpop.f32.mrb[0].mxu0
      %v868 = vpop.f32.mrb[0].mxu0
      %v869 = vadd.f32 %v466, %v868
      %v870 = vpop.f32.mrb[0].mxu0
      %871 = vmatprep.mubr.bf16.mxu0 0
      %872 = vmatmul.mubr.bf16.gmra.mrb[0].mxu0 %v411
      %v873 = vpop.f32.mrb[0].mxu0
      %v874 = vadd.f32 %v466, %v873
      %v875 = vpop.f32.mrb[0].mxu0
      %v876 = vpop.f32.mrb[0].mxu0
      %v877 = vadd.f32 %v466, %v876
      %v878 = vpop.f32.mrb[0].mxu0
      %879 = vmatprep.mubr.bf16.mxu0 0
      %880 = vmatmul.mubr.bf16.gmra.mrb[0].mxu0 %v412
      %v881 = vpop.f32.mrb[0].mxu0
      %v882 = vadd.f32 %v466, %v881
      %v883 = vpop.f32.mrb[0].mxu0
      %v884 = vpop.f32.mrb[0].mxu0
      %v885 = vadd.f32 %v466, %v884
      %v886 = vpop.f32.mrb[0].mxu0
      %887 = vmatprep.mubr.bf16.mxu0 0
      %888 = vmatmul.mubr.bf16.gmra.mrb[0].mxu0 %v413
      %v889 = vpop.f32.mrb[0].mxu0
      %v890 = vadd.f32 %v466, %v889
      %v891 = vpop.f32.mrb[0].mxu0
      %v892 = vpop.f32.mrb[0].mxu0
      %v893 = vadd.f32 %v466, %v892
      %v894 = vpop.f32.mrb[0].mxu0
      %895 = vmatprep.mubr.bf16.mxu0 0
      %896 = vmatmul.mubr.bf16.gmra.mrb[0].mxu0 %v414
      %v897 = vpop.f32.mrb[0].mxu0
      %v898 = vadd.f32 %v466, %v897
      %v899 = vpop.f32.mrb[0].mxu0
      %v900 = vpop.f32.mrb[0].mxu0
      %v901 = vadd.f32 %v466, %v900
      %v902 = vpop.f32.mrb[0].mxu0
      %903 = vmatprep.mubr.bf16.mxu0 0
      %904 = vmatmul.mubr.bf16.gmra.mrb[0].mxu0 %v415
      %v905 = vpop.f32.mrb[0].mxu0
      %v906 = vadd.f32 %v466, %v905
      %v907 = vpop.f32.mrb[0].mxu0
      %v908 = vpop.f32.mrb[0].mxu0
      %v909 = vadd.f32 %v466, %v908
      %v910 = vpop.f32.mrb[0].mxu0
      %911 = vmatprep.mubr.bf16.mxu0 0
      %912 = vmatmul.mubr.bf16.gmra.mrb[0].mxu0 %v416
      %v913 = vpop.f32.mrb[0].mxu0
      %v914 = vadd.f32 %v466, %v913
      %v915 = vpop.f32.mrb[0].mxu0
      %v916 = vpop.f32.mrb[0].mxu0
      %v917 = vadd.f32 %v466, %v916
      %v918 = vpop.f32.mrb[0].mxu0
      %919 = vmatprep.mubr.bf16.mxu0 0
      %920 = vmatmul.mubr.bf16.gmra.mrb[0].mxu0 %v417
      %v921 = vpop.f32.mrb[0].mxu0
      %v922 = vadd.f32 %v466, %v921
      %v923 = vpop.f32.mrb[0].mxu0
      %v924 = vpop.f32.mrb[0].mxu0
      %v925 = vadd.f32 %v466, %v924
      %v926 = vpop.f32.mrb[0].mxu0
      %927 = vmatprep.mubr.bf16.mxu0 0
      %928 = vmatmul.mubr.bf16.gmra.mrb[0].mxu0 %v418
      %v929 = vpop.f32.mrb[0].mxu0
      %v930 = vadd.f32 %v466, %v929
      %v931 = vpop.f32.mrb[0].mxu0
      %v932 = vpop.f32.mrb[0].mxu0
      %v933 = vadd.f32 %v466, %v932
      %v934 = vpop.f32.mrb[0].mxu0
      %935 = vmatprep.mubr.bf16.mxu0 0
      %936 = vmatmul.mubr.bf16.gmra.mrb[0].mxu0 %v419
      %v937 = vpop.f32.mrb[0].mxu0
      %v938 = vadd.f32 %v466, %v937
      %v939 = vpop.f32.mrb[0].mxu0
      %v940 = vpop.f32.mrb[0].mxu0
      %v941 = vadd.f32 %v466, %v940
      %v942 = vpop.f32.mrb[0].mxu0
      %943 = vmatprep.mubr.bf16.mxu0 0
      %944 = vmatmul.mubr.bf16.gmra.mrb[0].mxu0 %v420
      %v945 = vpop.f32.mrb[0].mxu0
      %v946 = vadd.f32 %v466, %v945
      %v947 = vpop.f32.mrb[0].mxu0
      %v948 = vpop.f32.mrb[0].mxu0
      %v949 = vadd.f32 %v466, %v948
      %v950 = vpop.f32.mrb[0].mxu0
      %951 = vdwg.mxu0
      %v952 = vpack.c.bf16 %v637, %v633
      %v953 = vpack.c.bf16 %v639, %v635
      %v954 = vpack.c.bf16 %v829, %v826
      %v955 = vpack.c.bf16 %v647, %v643
      %v956 = vpack.c.bf16 %v649, %v645
      %v957 = vpack.c.bf16 %v837, %v834
      %v958 = vpack.c.bf16 %v657, %v653
      %v959 = vpack.c.bf16 %v659, %v655
      %v960 = vpack.c.bf16 %v845, %v842
      %v961 = vpack.c.bf16 %v667, %v663
      %v962 = vpack.c.bf16 %v669, %v665
      %v963 = vpack.c.bf16 %v853, %v850
      %v964 = vpack.c.bf16 %v677, %v673
      %v965 = vpack.c.bf16 %v679, %v675
      %v966 = vpack.c.bf16 %v861, %v858
      %v967 = vpack.c.bf16 %v687, %v683
      %v968 = vpack.c.bf16 %v689, %v685
      %v969 = vpack.c.bf16 %v869, %v866
      %v970 = vpack.c.bf16 %v697, %v693
      %v971 = vpack.c.bf16 %v699, %v695
      %v972 = vpack.c.bf16 %v877, %v874
      %v973 = vpack.c.bf16 %v707, %v703
      %v974 = vpack.c.bf16 %v709, %v705
      %v975 = vpack.c.bf16 %v885, %v882
      %v976 = vpack.c.bf16 %v717, %v713
      %v977 = vpack.c.bf16 %v719, %v715
      %v978 = vpack.c.bf16 %v893, %v890
      %v979 = vpack.c.bf16 %v727, %v723
      %v980 = vpack.c.bf16 %v729, %v725
      %v981 = vpack.c.bf16 %v901, %v898
      %v982 = vpack.c.bf16 %v737, %v733
      %v983 = vpack.c.bf16 %v739, %v735
      %v984 = vpack.c.bf16 %v909, %v906
      %v985 = vpack.c.bf16 %v747, %v743
      %v986 = vpack.c.bf16 %v749, %v745
      %v987 = vpack.c.bf16 %v917, %v914
      %v988 = vpack.c.bf16 %v757, %v753
      %v989 = vpack.c.bf16 %v759, %v755
      %v990 = vpack.c.bf16 %v925, %v922
      %v991 = vpack.c.bf16 %v767, %v763
      %v992 = vpack.c.bf16 %v769, %v765
      %v993 = vpack.c.bf16 %v933, %v930
      %v994 = vpack.c.bf16 %v777, %v773
      %v995 = vpack.c.bf16 %v779, %v775
      %v996 = vpack.c.bf16 %v941, %v938
      %v997 = vpack.c.bf16 %v787, %v783
      %v998 = vpack.c.bf16 %v789, %v785
      %v999 = vpack.c.bf16 %v949, %v946
      %v1048 = vunpack.c.l.b16 %v952
      %v1049 = vunpack.c.l.b16 %v953
      %v1050 = vunpack.c.l.b16 %v954
      %v1051 = vunpack.c.h.b16 %v952
      %v1052 = vunpack.c.h.b16 %v953
      %v1053 = vunpack.c.h.b16 %v954
      %v1054 = vunpack.c.l.b16 %v955
      %v1055 = vunpack.c.l.b16 %v956
      %v1056 = vunpack.c.l.b16 %v957
      %v1057 = vunpack.c.h.b16 %v955
      %v1058 = vunpack.c.h.b16 %v956
      %v1059 = vunpack.c.h.b16 %v957
      %v1060 = vunpack.c.l.b16 %v958
      %v1061 = vunpack.c.l.b16 %v959
      %v1062 = vunpack.c.l.b16 %v960
      %v1063 = vunpack.c.h.b16 %v958
      %v1064 = vunpack.c.h.b16 %v959
      %v1065 = vunpack.c.h.b16 %v960
      %v1066 = vunpack.c.l.b16 %v961
      %v1067 = vunpack.c.l.b16 %v962
      %v1068 = vunpack.c.l.b16 %v963
      %v1069 = vunpack.c.h.b16 %v961
      %v1070 = vunpack.c.h.b16 %v962
      %v1071 = vunpack.c.h.b16 %v963
      %v1072 = vunpack.c.l.b16 %v964
      %v1073 = vunpack.c.l.b16 %v965
      %v1074 = vunpack.c.l.b16 %v966
      %v1075 = vunpack.c.h.b16 %v964
      %v1076 = vunpack.c.h.b16 %v965
      %v1077 = vunpack.c.h.b16 %v966
      %v1078 = vunpack.c.l.b16 %v967
      %v1079 = vunpack.c.l.b16 %v968
      %v1080 = vunpack.c.l.b16 %v969
      %v1081 = vunpack.c.h.b16 %v967
      %v1082 = vunpack.c.h.b16 %v968
      %v1083 = vunpack.c.h.b16 %v969
      %v1084 = vunpack.c.l.b16 %v970
      %v1085 = vunpack.c.l.b16 %v971
      %v1086 = vunpack.c.l.b16 %v972
      %v1087 = vunpack.c.h.b16 %v970
      %v1088 = vunpack.c.h.b16 %v971
      %v1089 = vunpack.c.h.b16 %v972
      %v1090 = vunpack.c.l.b16 %v973
      %v1091 = vunpack.c.l.b16 %v974
      %v1092 = vunpack.c.l.b16 %v975
      %v1093 = vunpack.c.h.b16 %v973
      %v1094 = vunpack.c.h.b16 %v974
      %v1095 = vunpack.c.h.b16 %v975
      %v1096 = vunpack.c.l.b16 %v976
      %v1097 = vunpack.c.l.b16 %v977
      %v1098 = vunpack.c.l.b16 %v978
      %v1099 = vunpack.c.h.b16 %v976
      %v1100 = vunpack.c.h.b16 %v977
      %v1101 = vunpack.c.h.b16 %v978
      %v1102 = vunpack.c.l.b16 %v979
      %v1103 = vunpack.c.l.b16 %v980
      %v1104 = vunpack.c.l.b16 %v981
      %v1105 = vunpack.c.h.b16 %v979
      %v1106 = vunpack.c.h.b16 %v980
      %v1107 = vunpack.c.h.b16 %v981
      %v1108 = vunpack.c.l.b16 %v982
      %v1109 = vunpack.c.l.b16 %v983
      %v1110 = vunpack.c.l.b16 %v984
      %v1111 = vunpack.c.h.b16 %v982
      %v1112 = vunpack.c.h.b16 %v983
      %v1113 = vunpack.c.h.b16 %v984
      %v1114 = vunpack.c.l.b16 %v985
      %v1115 = vunpack.c.l.b16 %v986
      %v1116 = vunpack.c.l.b16 %v987
      %v1117 = vunpack.c.h.b16 %v985
      %v1118 = vunpack.c.h.b16 %v986
      %v1119 = vunpack.c.h.b16 %v987
      %v1120 = vunpack.c.l.b16 %v988
      %v1121 = vunpack.c.l.b16 %v989
      %v1122 = vunpack.c.l.b16 %v990
      %v1123 = vunpack.c.h.b16 %v988
      %v1124 = vunpack.c.h.b16 %v989
      %v1125 = vunpack.c.h.b16 %v990
      %v1126 = vunpack.c.l.b16 %v991
      %v1127 = vunpack.c.l.b16 %v992
      %v1128 = vunpack.c.l.b16 %v993
      %v1129 = vunpack.c.h.b16 %v991
      %v1130 = vunpack.c.h.b16 %v992
      %v1131 = vunpack.c.h.b16 %v993
      %v1132 = vunpack.c.l.b16 %v994
      %v1133 = vunpack.c.l.b16 %v995
      %v1134 = vunpack.c.l.b16 %v996
      %v1135 = vunpack.c.h.b16 %v994
      %v1136 = vunpack.c.h.b16 %v995
      %v1137 = vunpack.c.h.b16 %v996
      %v1138 = vunpack.c.l.b16 %v997
      %v1139 = vunpack.c.l.b16 %v998
      %v1140 = vunpack.c.l.b16 %v999
      %v1141 = vunpack.c.h.b16 %v997
      %v1142 = vunpack.c.h.b16 %v998
      %v1143 = vunpack.c.h.b16 %v999
      %v1144 = vpack.c.b16 %v1049, %v1048
      %v1145 = vpack.c.b16 %v1050, %v1050
      %v1146 = vpack.c.b16 %v1052, %v1051
      %v1147 = vpack.c.b16 %v1053, %v1053
      %v1148 = vpack.c.b16 %v1055, %v1054
      %v1149 = vpack.c.b16 %v1056, %v1056
      %v1150 = vpack.c.b16 %v1058, %v1057
      %v1151 = vpack.c.b16 %v1059, %v1059
      %v1152 = vpack.c.b16 %v1061, %v1060
      %v1153 = vpack.c.b16 %v1062, %v1062
      %v1154 = vpack.c.b16 %v1064, %v1063
      %v1155 = vpack.c.b16 %v1065, %v1065
      %v1156 = vpack.c.b16 %v1067, %v1066
      %v1157 = vpack.c.b16 %v1068, %v1068
      %v1158 = vpack.c.b16 %v1070, %v1069
      %v1159 = vpack.c.b16 %v1071, %v1071
      %v1160 = vpack.c.b16 %v1073, %v1072
      %v1161 = vpack.c.b16 %v1074, %v1074
      %v1162 = vpack.c.b16 %v1076, %v1075
      %v1163 = vpack.c.b16 %v1077, %v1077
      %v1164 = vpack.c.b16 %v1079, %v1078
      %v1165 = vpack.c.b16 %v1080, %v1080
      %v1166 = vpack.c.b16 %v1082, %v1081
      %v1167 = vpack.c.b16 %v1083, %v1083
      %v1168 = vpack.c.b16 %v1085, %v1084
      %v1169 = vpack.c.b16 %v1086, %v1086
      %v1170 = vpack.c.b16 %v1088, %v1087
      %v1171 = vpack.c.b16 %v1089, %v1089
      %v1172 = vpack.c.b16 %v1091, %v1090
      %v1173 = vpack.c.b16 %v1092, %v1092
      %v1174 = vpack.c.b16 %v1094, %v1093
      %v1175 = vpack.c.b16 %v1095, %v1095
      %v1176 = vpack.c.b16 %v1097, %v1096
      %v1177 = vpack.c.b16 %v1098, %v1098
      %v1178 = vpack.c.b16 %v1100, %v1099
      %v1179 = vpack.c.b16 %v1101, %v1101
      %v1180 = vpack.c.b16 %v1103, %v1102
      %v1181 = vpack.c.b16 %v1104, %v1104
      %v1182 = vpack.c.b16 %v1106, %v1105
      %v1183 = vpack.c.b16 %v1107, %v1107
      %v1184 = vpack.c.b16 %v1109, %v1108
      %v1185 = vpack.c.b16 %v1110, %v1110
      %v1186 = vpack.c.b16 %v1112, %v1111
      %v1187 = vpack.c.b16 %v1113, %v1113
      %v1188 = vpack.c.b16 %v1115, %v1114
      %v1189 = vpack.c.b16 %v1116, %v1116
      %v1190 = vpack.c.b16 %v1118, %v1117
      %v1191 = vpack.c.b16 %v1119, %v1119
      %v1192 = vpack.c.b16 %v1121, %v1120
      %v1193 = vpack.c.b16 %v1122, %v1122
      %v1194 = vpack.c.b16 %v1124, %v1123
      %v1195 = vpack.c.b16 %v1125, %v1125
      %v1196 = vpack.c.b16 %v1127, %v1126
      %v1197 = vpack.c.b16 %v1128, %v1128
      %v1198 = vpack.c.b16 %v1130, %v1129
      %v1199 = vpack.c.b16 %v1131, %v1131
      %v1200 = vpack.c.b16 %v1133, %v1132
      %v1201 = vpack.c.b16 %v1134, %v1134
      %v1202 = vpack.c.b16 %v1136, %v1135
      %v1203 = vpack.c.b16 %v1137, %v1137
      %v1204 = vpack.c.b16 %v1139, %v1138
      %v1205 = vpack.c.b16 %v1140, %v1140
      %v1206 = vpack.c.b16 %v1142, %v1141
      %v1207 = vpack.c.b16 %v1143, %v1143
      %1272 = vst [vmem:[%s292] sm:$0xff] %v1144
      %1273 = vst [vmem:[%s292 + $0x8] sm:$0xf] %v1145
      %1274 = vst [vmem:[%s292 + $0xc] sm:$0xff] %v1146
      %1275 = vst [vmem:[%s292 + $0x14] sm:$0xf] %v1147
      %1276 = vst [vmem:[%s292 + $0x18] sm:$0xff] %v1148
      %1277 = vst [vmem:[%s292 + $0x20] sm:$0xf] %v1149
      %1278 = vst [vmem:[%s292 + $0x24] sm:$0xff] %v1150
      %1279 = vst [vmem:[%s292 + $0x2c] sm:$0xf] %v1151
      %1280 = vst [vmem:[%s292 + $0x30] sm:$0xff] %v1152
      %1281 = vst [vmem:[%s292 + $0x38] sm:$0xf] %v1153
      %1282 = vst [vmem:[%s292 + $0x3c] sm:$0xff] %v1154
      %1283 = vst [vmem:[%s292 + $0x44] sm:$0xf] %v1155
      %1284 = vst [vmem:[%s292 + $0x48] sm:$0xff] %v1156
      %1285 = vst [vmem:[%s292 + $0x50] sm:$0xf] %v1157
      %1286 = vst [vmem:[%s292 + $0x54] sm:$0xff] %v1158
      %1287 = vst [vmem:[%s292 + $0x5c] sm:$0xf] %v1159
      %1288 = vst [vmem:[%s292 + $0x60] sm:$0xff] %v1160
      %1289 = vst [vmem:[%s292 + $0x68] sm:$0xf] %v1161
      %1290 = vst [vmem:[%s292 + $0x6c] sm:$0xff] %v1162
      %1291 = vst [vmem:[%s292 + $0x74] sm:$0xf] %v1163
      %1292 = vst [vmem:[%s292 + $0x78] sm:$0xff] %v1164
      %1293 = vst [vmem:[%s292 + $0x80] sm:$0xf] %v1165
      %1294 = vst [vmem:[%s292 + $0x84] sm:$0xff] %v1166
      %1295 = vst [vmem:[%s292 + $0x8c] sm:$0xf] %v1167
      %1296 = vst [vmem:[%s292 + $0x90] sm:$0xff] %v1168
      %1297 = vst [vmem:[%s292 + $0x98] sm:$0xf] %v1169
      %1298 = vst [vmem:[%s292 + $0x9c] sm:$0xff] %v1170
      %1299 = vst [vmem:[%s292 + $0xa4] sm:$0xf] %v1171
      %1300 = vst [vmem:[%s292 + $0xa8] sm:$0xff] %v1172
      %1301 = vst [vmem:[%s292 + $0xb0] sm:$0xf] %v1173
      %1302 = vst [vmem:[%s292 + $0xb4] sm:$0xff] %v1174
      %1303 = vst [vmem:[%s292 + $0xbc] sm:$0xf] %v1175
      %1304 = vst [vmem:[%s292 + $0xc0] sm:$0xff] %v1176
      %1305 = vst [vmem:[%s292 + $0xc8] sm:$0xf] %v1177
      %1306 = vst [vmem:[%s292 + $0xcc] sm:$0xff] %v1178
      %1307 = vst [vmem:[%s292 + $0xd4] sm:$0xf] %v1179
      %1308 = vst [vmem:[%s292 + $0xd8] sm:$0xff] %v1180
      %1309 = vst [vmem:[%s292 + $0xe0] sm:$0xf] %v1181
      %1310 = vst [vmem:[%s292 + $0xe4] sm:$0xff] %v1182
      %1311 = vst [vmem:[%s292 + $0xec] sm:$0xf] %v1183
      %1312 = vst [vmem:[%s292 + $0xf0] sm:$0xff] %v1184
      %1313 = vst [vmem:[%s292 + $0xf8] sm:$0xf] %v1185
      %1314 = vst [vmem:[%s292 + $0xfc] sm:$0xff] %v1186
      %1315 = vst [vmem:[%s292 + $0x104] sm:$0xf] %v1187
      %1316 = vst [vmem:[%s292 + $0x108] sm:$0xff] %v1188
      %1317 = vst [vmem:[%s292 + $0x110] sm:$0xf] %v1189
      %1318 = vst [vmem:[%s292 + $0x114] sm:$0xff] %v1190
      %1319 = vst [vmem:[%s292 + $0x11c] sm:$0xf] %v1191
      %1320 = vst [vmem:[%s292 + $0x120] sm:$0xff] %v1192
      %1321 = vst [vmem:[%s292 + $0x128] sm:$0xf] %v1193
      %1322 = vst [vmem:[%s292 + $0x12c] sm:$0xff] %v1194
      %1323 = vst [vmem:[%s292 + $0x134] sm:$0xf] %v1195
      %1324 = vst [vmem:[%s292 + $0x138] sm:$0xff] %v1196
      %1325 = vst [vmem:[%s292 + $0x140] sm:$0xf] %v1197
      %1326 = vst [vmem:[%s292 + $0x144] sm:$0xff] %v1198
      %1327 = vst [vmem:[%s292 + $0x14c] sm:$0xf] %v1199
      %1328 = vst [vmem:[%s292 + $0x150] sm:$0xff] %v1200
      %1329 = vst [vmem:[%s292 + $0x158] sm:$0xf] %v1201
      %1330 = vst [vmem:[%s292 + $0x15c] sm:$0xff] %v1202
      %1331 = vst [vmem:[%s292 + $0x164] sm:$0xf] %v1203
      %1332 = vst [vmem:[%s292 + $0x168] sm:$0xff] %v1204
      %1333 = vst [vmem:[%s292 + $0x170] sm:$0xf] %v1205
      %1334 = vst [vmem:[%s292 + $0x174] sm:$0xff] %v1206
      %1335 = vst [vmem:[%s292 + $0x17c] sm:$0xf] %v1207
      %s1336 = smul.u32 32, %s21
      %p1337 = scmp.lt.s32.totalorder %s20, 1
      %s1338 = scalar_select %p1337, %s20, 1
      %p1339 = scmp.lt.s32.totalorder %s1336, 31
      %s1340 = scalar_select %p1339, %s1336, 31
      %s1341 = smul.addr %s1340, 3
      %s1342 = smul.addr %s1338, 96
      %s1343 = sadd.s32 %s1341, %s1342
      %s1344 = smul.addr %s1343, 4
      %s1345 = scalar_lea.vmem %s5, %s1344
      // Predicated region
      $region41: #{attn_block_pallas.4} parent=39 // pred_check
        %p1346 = pneg %p170
      $region42: #{attn_block_pallas.4} parent=39 // pred_check_branch
        %1348 = sbr.rel (%p1346) target = $region44
      $region43: #{attn_block_pallas.4} parent=39 // pred_region
        %s1349 = smul.u32 32, %s21
      $region44: #{attn_block_pallas.4} parent=39 // pred_fallthru
        _
    $region40: #{attn_block_pallas.4} parent=5 // pred_fallthru
      _
    %p1350 = scmp.le.s32.totalorder 2, %s11
    // Predicated region
    $region45: #{attn_block_pallas.4} parent=5 // pred_check
      %p1351 = pneg %p1350
    $region46: #{attn_block_pallas.4} parent=5 // pred_check_branch
      %1353 = sbr.rel (%p1351) target = $region48
    $region47: #{attn_block_pallas.4} parent=5 // pred_region
      %s1354 = ssub.s32 %s11, 2
      // Predicated region
      $region49: #{attn_block_pallas.4} parent=47 // pred_check
        %p1355 = pneg %p176
      $region50: #{attn_block_pallas.4} parent=47 // pred_check_branch
        %1357 = sbr.rel (%p1355) target = $region52
      $region51: #{attn_block_pallas.4} parent=47 // pred_region
        %s1358 = smul.u32 32, %s23
        %p1359 = scmp.lt.s32.totalorder %s22, 1
        %s1360 = scalar_select %p1359, %s22, 1
        %p1361 = scmp.lt.s32.totalorder %s1358, 31
        %s1362 = scalar_select %p1361, %s1358, 31
        %s1363 = smul.addr %s1362, 3
        %s1364 = smul.addr %s1360, 96
        %s1365 = sadd.s32 %s1363, %s1364
        %s1366 = smul.addr %s1365, 4
        %s1367 = scalar_lea.vmem %s5, %s1366
      $region52: #{attn_block_pallas.4} parent=47 // pred_fallthru
        _
    $region48: #{attn_block_pallas.4} parent=5 // pred_fallthru
      _
  $region6: #{attn_block_pallas.4} parent=0 // loop_footer
    %s15 = sadd.s32 1, %s11
  $region7: #{attn_block_pallas.4} parent=0 // loop_footer_branch
    %10 = sbr.rel target = $region3
  $region8: #{attn_block_pallas.4} parent=0 // loop_exit
    _

// kernel: attn_block_pallas.5
$region0: #{attn_block_pallas.5}
  #allocation0 [shape = 'u32[]', space=smem, size = 0x4, offset = 0x4, fixed_abs, tag = 'smem constant byte address 0x4 - core index']
  #allocation1 [shape = 'u32[144,128]{1,0:T(1,128)}', space=vmem, size = 0x12000, scoped, tag = 'internal scratch']
  %s0 = inlined_call_operand.vmem [shape: bf16[2,256,384], index: 0, kind: input, shape index: {}, may-alias: {0,1,2}]
  %s1 = inlined_call_operand.vmem [shape: bf16[2,256,384], index: 1, kind: input, shape index: {}, may-alias: {0,1,2}]
  %s2 = inlined_call_operand.vmem [shape: bf16[2,256,384], index: 2, kind: input, shape index: {}, may-alias: {0,1,2}]
  %s3 = inlined_call_operand.vmem [shape: f32[2,128,256], index: 3, kind: input, shape index: {}]
  %s4 = inlined_call_operand.vmem [shape: bf16[128,128], index: 4, kind: input, shape index: {}]
  %s5 = inlined_call_operand.vmem [shape: f32[128,1], index: 5, kind: input, shape index: {}]
  %s6 = inlined_call_operand.vmem [shape: f32[2,128,256], index: 6, kind: output, shape index: {}]
  %s7 = sld [smem:[#allocation0]]
  $region180: #{attn_block_pallas.5} parent=0
    _
  %s9 = ssub.s32 1, %s7
  %s10 = scalar_select 0, %s9, %s7
  $region1: #{attn_block_pallas.5} parent=0
    #allocation2 [shape = 'u8[131072]{0}', space=vmem, size = 0x20000, scoped, tag = 'input window, operand 0']
    #allocation3 [shape = 'u8[131072]{0}', space=vmem, size = 0x20000, scoped, tag = 'input window, operand 1']
    #allocation4 [shape = 'u8[131072]{0}', space=vmem, size = 0x20000, scoped, tag = 'input window, operand 2']
    loop: start=0, step=1, limit=4
    $region2: #{attn_block_pallas.5} parent=1 // loop_pre_header
      _
    $region3: #{attn_block_pallas.5} parent=1 // loop_header
      %s12 = sphi 0, %s16
      %p13 = scmp.ge.s32.totalorder %s12, 4
      %s19 = sphi 0, %s31
      %s20 = sphi 0, %s27
      %s21 = sphi 0, %s19
      %s22 = sphi 0, %s20
      %s23 = sphi 0, %s21
      %s24 = sphi 0, %s22
      %s36 = sphi 0, %s38
      %s39 = sphi 0, %s36
      %s40 = sphi 0, %s39
      %s56 = sphi 0, %s40
      %s62 = sphi 0, %s64
      %s65 = sphi 0, %s62
      %s66 = sphi 0, %s65
      %s82 = sphi 0, %s66
      %s88 = sphi 0, %s90
      %s91 = sphi 0, %s88
      %s92 = sphi 0, %s91
      %s108 = sphi 0, %s92
      %s116 = sphi 0, %s118
      %s119 = sphi 0, %s116
      %s120 = sphi 0, %s119
      %s136 = sphi 0, %s120
      %s140 = sphi 0, %s140
      %s142 = sphi 0, %s140
      %s143 = sphi 0, %s142
      %s157 = sphi 0, %s143
      %s161 = sphi 0, %s161
      %s163 = sphi 0, %s161
      %s164 = sphi 0, %s163
      %s178 = sphi 0, %s164
      %s186 = sphi 0, %s188
      %s189 = sphi 0, %s186
      %s190 = sphi 0, %s189
      %s206 = sphi 0, %s190
    $region4: #{attn_block_pallas.5} parent=1 // loop_header_branch
      %15 = sbr.rel (%p13) target = $region8
    $region5: #{attn_block_pallas.5} parent=1 // loop_body
      %s17 = ssub.s32 %s12, 1
      %s18 = ssub.s32 %s12, 2
      %s25 = sadd.s32 1, %s20
      %p26 = scmp.ge.s32.totalorder %s25, 1
      %s27 = scalar_select %p26, 0, %s25
      %s28 = sadd.s32 1, %s19
      %s29 = scalar_select %p26, %s28, %s19
      %p30 = scmp.ge.s32.totalorder %s29, 2
      %s31 = scalar_select %p30, 0, %s29
      %s32 = ssub.s32 %s19, %s31
      %s33 = ssub.s32 %s20, %s27
      %s34 = sor.u32 %s32, %s33
      %p35 = scmp.eq.s32.totalorder %s34, 0
      %s37 = sadd.s32 %s36, 1
      %s38 = scalar_select %p35, %s36, %s37
      %p41 = pneg %p35
      %p42 = scmp.eq.s32.totalorder %s12, 1
      %p43 = por %p41, %p42
      %p44 = scmp.ne.s32.totalorder %s36, %s39
      %p45 = scmp.eq.s32.totalorder %s12, 0
      %p46 = por %p44, %p45
      %p47 = scmp.ne.s32.totalorder %s36, %s39
      %p48 = scmp.eq.s32.totalorder %s17, 1
      %p49 = por %p47, %p48
      %p50 = scmp.ne.s32.totalorder %s39, %s40
      %p51 = scmp.eq.s32.totalorder %s17, 0
      %p52 = por %p50, %p51
      %p53 = scmp.ne.s32.totalorder %s39, %s40
      %p54 = scmp.eq.s32.totalorder %s18, 1
      %p55 = por %p53, %p54
      %p57 = scmp.ne.s32.totalorder %s40, %s56
      %p58 = scmp.eq.s32.totalorder %s18, 0
      %p59 = por %p57, %p58
      %s60 = ssub.s32 %s19, %s31
      %p61 = scmp.eq.s32.totalorder %s60, 0
      %s63 = sadd.s32 %s62, 1
      %s64 = scalar_select %p61, %s62, %s63
      %p67 = pneg %p61
      %p68 = scmp.eq.s32.totalorder %s12, 1
      %p69 = por %p67, %p68
      %p70 = scmp.ne.s32.totalorder %s62, %s65
      %p71 = scmp.eq.s32.totalorder %s12, 0
      %p72 = por %p70, %p71
      %p73 = scmp.ne.s32.totalorder %s62, %s65
      %p74 = scmp.eq.s32.totalorder %s17, 1
      %p75 = por %p73, %p74
      %p76 = scmp.ne.s32.totalorder %s65, %s66
      %p77 = scmp.eq.s32.totalorder %s17, 0
      %p78 = por %p76, %p77
      %p79 = scmp.ne.s32.totalorder %s65, %s66
      %p80 = scmp.eq.s32.totalorder %s18, 1
      %p81 = por %p79, %p80
      %p83 = scmp.ne.s32.totalorder %s66, %s82
      %p84 = scmp.eq.s32.totalorder %s18, 0
      %p85 = por %p83, %p84
      %s86 = ssub.s32 %s19, %s31
      %p87 = scmp.eq.s32.totalorder %s86, 0
      %s89 = sadd.s32 %s88, 1
      %s90 = scalar_select %p87, %s88, %s89
      %p93 = pneg %p87
      %p94 = scmp.eq.s32.totalorder %s12, 1
      %p95 = por %p93, %p94
      %p96 = scmp.ne.s32.totalorder %s88, %s91
      %p97 = scmp.eq.s32.totalorder %s12, 0
      %p98 = por %p96, %p97
      %p99 = scmp.ne.s32.totalorder %s88, %s91
      %p100 = scmp.eq.s32.totalorder %s17, 1
      %p101 = por %p99, %p100
      %p102 = scmp.ne.s32.totalorder %s91, %s92
      %p103 = scmp.eq.s32.totalorder %s17, 0
      %p104 = por %p102, %p103
      %p105 = scmp.ne.s32.totalorder %s91, %s92
      %p106 = scmp.eq.s32.totalorder %s18, 1
      %p107 = por %p105, %p106
      %p109 = scmp.ne.s32.totalorder %s92, %s108
      %p110 = scmp.eq.s32.totalorder %s18, 0
      %p111 = por %p109, %p110
      %s112 = ssub.s32 %s19, %s31
      %s113 = ssub.s32 %s20, %s27
      %s114 = sor.u32 %s112, %s113
      %p115 = scmp.eq.s32.totalorder %s114, 0
      %s117 = sadd.s32 %s116, 1
      %s118 = scalar_select %p115, %s116, %s117
      %p121 = pneg %p115
      %p122 = scmp.eq.s32.totalorder %s12, 1
      %p123 = por %p121, %p122
      %p124 = scmp.ne.s32.totalorder %s116, %s119
      %p125 = scmp.eq.s32.totalorder %s12, 0
      %p126 = por %p124, %p125
      %p127 = scmp.ne.s32.totalorder %s116, %s119
      %p128 = scmp.eq.s32.totalorder %s17, 1
      %p129 = por %p127, %p128
      %p130 = scmp.ne.s32.totalorder %s119, %s120
      %p131 = scmp.eq.s32.totalorder %s17, 0
      %p132 = por %p130, %p131
      %p133 = scmp.ne.s32.totalorder %s119, %s120
      %p134 = scmp.eq.s32.totalorder %s18, 1
      %p135 = por %p133, %p134
      %p137 = scmp.ne.s32.totalorder %s120, %s136
      %p138 = scmp.eq.s32.totalorder %s18, 0
      %p139 = por %p137, %p138
      %s141 = sadd.s32 %s140, 1
      %p144 = scmp.eq.s32.totalorder %s12, 1
      %p145 = scmp.ne.s32.totalorder %s140, %s142
      %p146 = scmp.eq.s32.totalorder %s12, 0
      %p147 = por %p145, %p146
      %p148 = scmp.ne.s32.totalorder %s140, %s142
      %p149 = scmp.eq.s32.totalorder %s17, 1
      %p150 = por %p148, %p149
      %p151 = scmp.ne.s32.totalorder %s142, %s143
      %p152 = scmp.eq.s32.totalorder %s17, 0
      %p153 = por %p151, %p152
      %p154 = scmp.ne.s32.totalorder %s142, %s143
      %p155 = scmp.eq.s32.totalorder %s18, 1
      %p156 = por %p154, %p155
      %p158 = scmp.ne.s32.totalorder %s143, %s157
      %p159 = scmp.eq.s32.totalorder %s18, 0
      %p160 = por %p158, %p159
      %s162 = sadd.s32 %s161, 1
      %p165 = scmp.eq.s32.totalorder %s12, 1
      %p166 = scmp.ne.s32.totalorder %s161, %s163
      %p167 = scmp.eq.s32.totalorder %s12, 0
      %p168 = por %p166, %p167
      %p169 = scmp.ne.s32.totalorder %s161, %s163
      %p170 = scmp.eq.s32.totalorder %s17, 1
      %p171 = por %p169, %p170
      %p172 = scmp.ne.s32.totalorder %s163, %s164
      %p173 = scmp.eq.s32.totalorder %s17, 0
      %p174 = por %p172, %p173
      %p175 = scmp.ne.s32.totalorder %s163, %s164
      %p176 = scmp.eq.s32.totalorder %s18, 1
      %p177 = por %p175, %p176
      %p179 = scmp.ne.s32.totalorder %s164, %s178
      %p180 = scmp.eq.s32.totalorder %s18, 0
      %p181 = por %p179, %p180
      %s182 = ssub.s32 %s19, %s31
      %s183 = ssub.s32 %s20, %s27
      %s184 = sor.u32 %s182, %s183
      %p185 = scmp.eq.s32.totalorder %s184, 0
      %s187 = sadd.s32 %s186, 1
      %s188 = scalar_select %p185, %s186, %s187
      %p191 = pneg %p185
      %p192 = scmp.eq.s32.totalorder %s12, 1
      %p193 = por %p191, %p192
      %p194 = scmp.ne.s32.totalorder %s186, %s189
      %p195 = scmp.eq.s32.totalorder %s12, 0
      %p196 = por %p194, %p195
      %p197 = scmp.ne.s32.totalorder %s186, %s189
      %p198 = scmp.eq.s32.totalorder %s17, 1
      %p199 = por %p197, %p198
      %p200 = scmp.ne.s32.totalorder %s189, %s190
      %p201 = scmp.eq.s32.totalorder %s17, 0
      %p202 = por %p200, %p201
      %p203 = scmp.ne.s32.totalorder %s189, %s190
      %p204 = scmp.eq.s32.totalorder %s18, 1
      %p205 = por %p203, %p204
      %p207 = scmp.ne.s32.totalorder %s190, %s206
      %p208 = scmp.eq.s32.totalorder %s18, 0
      %p209 = por %p207, %p208
      %p210 = scmp.le.s32.totalorder 1, %s12
      %p211 = scmp.lt.s32.totalorder %s12, 3
      %p212 = pnand %p210, %p211
      %p213 = pneg %p212
      // Predicated region
      $region9: #{attn_block_pallas.5} parent=5 // pred_check
        _
      $region10: #{attn_block_pallas.5} parent=5 // pred_check_branch
        %215 = sbr.rel (%p212) target = $region12
      $region11: #{attn_block_pallas.5} parent=5 // pred_region
        %s216 = ssub.s32 %s12, 1
        // Predicated region
        $region13: #{attn_block_pallas.5} parent=11 // pred_check
          %p217 = pneg %p153
        $region14: #{attn_block_pallas.5} parent=11 // pred_check_branch
          %219 = sbr.rel (%p217) target = $region16
        $region15: #{attn_block_pallas.5} parent=11 // pred_region
          _
        $region16: #{attn_block_pallas.5} parent=11 // pred_fallthru
          _
        // Predicated region
        $region17: #{attn_block_pallas.5} parent=11 // pred_check
          %p220 = pneg %p174
        $region18: #{attn_block_pallas.5} parent=11 // pred_check_branch
          %222 = sbr.rel (%p220) target = $region20
        $region19: #{attn_block_pallas.5} parent=11 // pred_region
          _
        $region20: #{attn_block_pallas.5} parent=11 // pred_fallthru
          _
      $region12: #{attn_block_pallas.5} parent=5 // pred_fallthru
        _
      %p223 = scmp.lt.s32.totalorder %s12, 2
      // Predicated region
      $region21: #{attn_block_pallas.5} parent=5 // pred_check
        %p224 = pneg %p223
      $region22: #{attn_block_pallas.5} parent=5 // pred_check_branch
        %226 = sbr.rel (%p224) target = $region24
      $region23: #{attn_block_pallas.5} parent=5 // pred_region
        // Predicated region
        $region25: #{attn_block_pallas.5} parent=23 // pred_check
          %p227 = pneg %p46
        $region26: #{attn_block_pallas.5} parent=23 // pred_check_branch
          %229 = sbr.rel (%p227) target = $region28
        $region27: #{attn_block_pallas.5} parent=23 // pred_region
          %s230 = sand.u32 %s36, 1
          %s231 = sand.u32 %s36, 1
          %s232 = smul.addr %s231, 128
          %s233 = scalar_lea.vmem [#allocation2], %s232
          %s234 = smul.u32 32, %s20
          %s235 = smul.addr %s234, 3
          %s236 = smul.addr %s19, 96
          %s237 = sadd.s32 %s235, %s236
          %s238 = smul.addr %s237, 4
          %s239 = scalar_lea.vmem %s0, %s238
          // Predicated region
          $region29: #{attn_block_pallas.5} parent=27 // pred_check
            _
          $region30: #{attn_block_pallas.5} parent=27 // pred_check_branch
            %241 = sbr.rel (0) target = $region32
          $region31: #{attn_block_pallas.5} parent=27 // pred_region
            // Predicated region
            $region33: #{attn_block_pallas.5} parent=31 // pred_check
              _
            $region34: #{attn_block_pallas.5} parent=31 // pred_check_branch
              %243 = sbr.rel target = $region36
            $region35: #{attn_block_pallas.5} parent=31 // pred_region
              // Predicated region
              $region48: #{attn_block_pallas.5} parent=35 // pred_check
                _
              $region49: #{attn_block_pallas.5} parent=35 // pred_check_branch
                %320 = sbr.rel (0) target = $region51
              $region50: #{attn_block_pallas.5} parent=35 // pred_region
                loop: start=0, step=1, limit=1
                $region52: #{attn_block_pallas.5} parent=50 // loop_pre_header
                  _
                $region53: #{attn_block_pallas.5} parent=50 // loop_header
                  %s322 = sphi 0, %s326
                  %p323 = scmp.ge.s32.totalorder %s322, 1
                  %s327 = sphi %s239, %s239
                  %s328 = sphi %s233, %s233
                $region54: #{attn_block_pallas.5} parent=50 // loop_header_branch
                  %325 = sbr.rel (%p323) target = $region58
                $region55: #{attn_block_pallas.5} parent=50 // loop_body
                  _
                $region56: #{attn_block_pallas.5} parent=50 // loop_footer
                  %s326 = sadd.s32 1, %s322
                $region57: #{attn_block_pallas.5} parent=50 // loop_footer_branch
                  %321 = sbr.rel target = $region53
                $region58: #{attn_block_pallas.5} parent=50 // loop_exit
                  _
                loop: start=0, step=1, limit=1
                $region59: #{attn_block_pallas.5} parent=50 // loop_pre_header
                  _
                $region60: #{attn_block_pallas.5} parent=50 // loop_header
                  %s331 = sphi 0, %s335
                  %p332 = scmp.ge.s32.totalorder %s331, 1
                  %s336 = sphi %s239, %s239
                  %s337 = sphi %s233, %s233
                $region61: #{attn_block_pallas.5} parent=50 // loop_header_branch
                  %334 = sbr.rel (%p332) target = $region65
                $region62: #{attn_block_pallas.5} parent=50 // loop_body
                  %v338 = vld [vmem:[%s336] sm:$0xf]
                  %339 = vst [vmem:[%s337] sm:$0xf] %v338
                  %v340 = vld [vmem:[%s336 + $0xc] sm:$0xf]
                  %341 = vst [vmem:[%s337 + $0x4] sm:$0xf] %v340
                  %v342 = vld [vmem:[%s336 + $0x18] sm:$0xf]
                  %343 = vst [vmem:[%s337 + $0x8] sm:$0xf] %v342
                  %v344 = vld [vmem:[%s336 + $0x24] sm:$0xf]
                  %345 = vst [vmem:[%s337 + $0xc] sm:$0xf] %v344
                  %v346 = vld [vmem:[%s336 + $0x30] sm:$0xf]
                  %347 = vst [vmem:[%s337 + $0x10] sm:$0xf] %v346
                  %v348 = vld [vmem:[%s336 + $0x3c] sm:$0xf]
                  %349 = vst [vmem:[%s337 + $0x14] sm:$0xf] %v348
                  %v350 = vld [vmem:[%s336 + $0x48] sm:$0xf]
                  %351 = vst [vmem:[%s337 + $0x18] sm:$0xf] %v350
                  %v352 = vld [vmem:[%s336 + $0x54] sm:$0xf]
                  %353 = vst [vmem:[%s337 + $0x1c] sm:$0xf] %v352
                  %v354 = vld [vmem:[%s336 + $0x60] sm:$0xf]
                  %355 = vst [vmem:[%s337 + $0x20] sm:$0xf] %v354
                  %v356 = vld [vmem:[%s336 + $0x6c] sm:$0xf]
                  %357 = vst [vmem:[%s337 + $0x24] sm:$0xf] %v356
                  %v358 = vld [vmem:[%s336 + $0x78] sm:$0xf]
                  %359 = vst [vmem:[%s337 + $0x28] sm:$0xf] %v358
                  %v360 = vld [vmem:[%s336 + $0x84] sm:$0xf]
                  %361 = vst [vmem:[%s337 + $0x2c] sm:$0xf] %v360
                  %v362 = vld [vmem:[%s336 + $0x90] sm:$0xf]
                  %363 = vst [vmem:[%s337 + $0x30] sm:$0xf] %v362
                  %v364 = vld [vmem:[%s336 + $0x9c] sm:$0xf]
                  %365 = vst [vmem:[%s337 + $0x34] sm:$0xf] %v364
                  %v366 = vld [vmem:[%s336 + $0xa8] sm:$0xf]
                  %367 = vst [vmem:[%s337 + $0x38] sm:$0xf] %v366
                  %v368 = vld [vmem:[%s336 + $0xb4] sm:$0xf]
                  %369 = vst [vmem:[%s337 + $0x3c] sm:$0xf] %v368
                  %v370 = vld [vmem:[%s336 + $0xc0] sm:$0xf]
                  %371 = vst [vmem:[%s337 + $0x40] sm:$0xf] %v370
                  %v372 = vld [vmem:[%s336 + $0xcc] sm:$0xf]
                  %373 = vst [vmem:[%s337 + $0x44] sm:$0xf] %v372
                  %v374 = vld [vmem:[%s336 + $0xd8] sm:$0xf]
                  %375 = vst [vmem:[%s337 + $0x48] sm:$0xf] %v374
                  %v376 = vld [vmem:[%s336 + $0xe4] sm:$0xf]
                  %377 = vst [vmem:[%s337 + $0x4c] sm:$0xf] %v376
                  %v378 = vld [vmem:[%s336 + $0xf0] sm:$0xf]
                  %379 = vst [vmem:[%s337 + $0x50] sm:$0xf] %v378
                  %v380 = vld [vmem:[%s336 + $0xfc] sm:$0xf]
                  %381 = vst [vmem:[%s337 + $0x54] sm:$0xf] %v380
                  %v382 = vld [vmem:[%s336 + $0x108] sm:$0xf]
                  %383 = vst [vmem:[%s337 + $0x58] sm:$0xf] %v382
                  %v384 = vld [vmem:[%s336 + $0x114] sm:$0xf]
                  %385 = vst [vmem:[%s337 + $0x5c] sm:$0xf] %v384
                  %v386 = vld [vmem:[%s336 + $0x120] sm:$0xf]
                  %387 = vst [vmem:[%s337 + $0x60] sm:$0xf] %v386
                  %v388 = vld [vmem:[%s336 + $0x12c] sm:$0xf]
                  %389 = vst [vmem:[%s337 + $0x64] sm:$0xf] %v388
                  %v390 = vld [vmem:[%s336 + $0x138] sm:$0xf]
                  %391 = vst [vmem:[%s337 + $0x68] sm:$0xf] %v390
                  %v392 = vld [vmem:[%s336 + $0x144] sm:$0xf]
                  %393 = vst [vmem:[%s337 + $0x6c] sm:$0xf] %v392
                  %v394 = vld [vmem:[%s336 + $0x150] sm:$0xf]
                  %395 = vst [vmem:[%s337 + $0x70] sm:$0xf] %v394
                  %v396 = vld [vmem:[%s336 + $0x15c] sm:$0xf]
                  %397 = vst [vmem:[%s337 + $0x74] sm:$0xf] %v396
                  %v398 = vld [vmem:[%s336 + $0x168] sm:$0xf]
                  %399 = vst [vmem:[%s337 + $0x78] sm:$0xf] %v398
                  %v400 = vld [vmem:[%s336 + $0x174] sm:$0xf]
                  %401 = vst [vmem:[%s337 + $0x7c] sm:$0xf] %v400
                $region63: #{attn_block_pallas.5} parent=50 // loop_footer
                  %s335 = sadd.s32 1, %s331
                $region64: #{attn_block_pallas.5} parent=50 // loop_footer_branch
                  %330 = sbr.rel target = $region60
                $region65: #{attn_block_pallas.5} parent=50 // loop_exit
                  _
              $region51: #{attn_block_pallas.5} parent=35 // pred_fallthru
                _
            $region36: #{attn_block_pallas.5} parent=31 // pred_fallthru
              _
            // Predicated region
            $region37: #{attn_block_pallas.5} parent=31 // pred_check
              _
            $region38: #{attn_block_pallas.5} parent=31 // pred_check_branch
              %245 = sbr.rel (0) target = $region40
            $region39: #{attn_block_pallas.5} parent=31 // pred_region
              loop: start=0, step=1, limit=1
              $region41: #{attn_block_pallas.5} parent=39 // loop_pre_header
                _
              $region42: #{attn_block_pallas.5} parent=39 // loop_header
                %s248 = sphi 0, %s252
                %p249 = scmp.ge.s32.totalorder %s248, 1
                %s253 = sphi %s239, %s239
                %s254 = sphi %s233, %s233
              $region43: #{attn_block_pallas.5} parent=39 // loop_header_branch
                %251 = sbr.rel (%p249) target = $region47
              $region44: #{attn_block_pallas.5} parent=39 // loop_body
                %v255 = vld [vmem:[%s253] sm:$0xf]
                %256 = vst [vmem:[%s254] sm:$0xf] %v255
                %v257 = vld [vmem:[%s253 + $0xc] sm:$0xf]
                %258 = vst [vmem:[%s254 + $0x4] sm:$0xf] %v257
                %v259 = vld [vmem:[%s253 + $0x18] sm:$0xf]
                %260 = vst [vmem:[%s254 + $0x8] sm:$0xf] %v259
                %v261 = vld [vmem:[%s253 + $0x24] sm:$0xf]
                %262 = vst [vmem:[%s254 + $0xc] sm:$0xf] %v261
                %v263 = vld [vmem:[%s253 + $0x30] sm:$0xf]
                %264 = vst [vmem:[%s254 + $0x10] sm:$0xf] %v263
                %v265 = vld [vmem:[%s253 + $0x3c] sm:$0xf]
                %266 = vst [vmem:[%s254 + $0x14] sm:$0xf] %v265
                %v267 = vld [vmem:[%s253 + $0x48] sm:$0xf]
                %268 = vst [vmem:[%s254 + $0x18] sm:$0xf] %v267
                %v269 = vld [vmem:[%s253 + $0x54] sm:$0xf]
                %270 = vst [vmem:[%s254 + $0x1c] sm:$0xf] %v269
                %v271 = vld [vmem:[%s253 + $0x60] sm:$0xf]
                %272 = vst [vmem:[%s254 + $0x20] sm:$0xf] %v271
                %v273 = vld [vmem:[%s253 + $0x6c] sm:$0xf]
                %274 = vst [vmem:[%s254 + $0x24] sm:$0xf] %v273
                %v275 = vld [vmem:[%s253 + $0x78] sm:$0xf]
                %276 = vst [vmem:[%s254 + $0x28] sm:$0xf] %v275
                %v277 = vld [vmem:[%s253 + $0x84] sm:$0xf]
                %278 = vst [vmem:[%s254 + $0x2c] sm:$0xf] %v277
                %v279 = vld [vmem:[%s253 + $0x90] sm:$0xf]
                %280 = vst [vmem:[%s254 + $0x30] sm:$0xf] %v279
                %v281 = vld [vmem:[%s253 + $0x9c] sm:$0xf]
                %282 = vst [vmem:[%s254 + $0x34] sm:$0xf] %v281
                %v283 = vld [vmem:[%s253 + $0xa8] sm:$0xf]
                %284 = vst [vmem:[%s254 + $0x38] sm:$0xf] %v283
                %v285 = vld [vmem:[%s253 + $0xb4] sm:$0xf]
                %286 = vst [vmem:[%s254 + $0x3c] sm:$0xf] %v285
                %v287 = vld [vmem:[%s253 + $0xc0] sm:$0xf]
                %288 = vst [vmem:[%s254 + $0x40] sm:$0xf] %v287
                %v289 = vld [vmem:[%s253 + $0xcc] sm:$0xf]
                %290 = vst [vmem:[%s254 + $0x44] sm:$0xf] %v289
                %v291 = vld [vmem:[%s253 + $0xd8] sm:$0xf]
                %292 = vst [vmem:[%s254 + $0x48] sm:$0xf] %v291
                %v293 = vld [vmem:[%s253 + $0xe4] sm:$0xf]
                %294 = vst [vmem:[%s254 + $0x4c] sm:$0xf] %v293
                %v295 = vld [vmem:[%s253 + $0xf0] sm:$0xf]
                %296 = vst [vmem:[%s254 + $0x50] sm:$0xf] %v295
                %v297 = vld [vmem:[%s253 + $0xfc] sm:$0xf]
                %298 = vst [vmem:[%s254 + $0x54] sm:$0xf] %v297
                %v299 = vld [vmem:[%s253 + $0x108] sm:$0xf]
                %300 = vst [vmem:[%s254 + $0x58] sm:$0xf] %v299
                %v301 = vld [vmem:[%s253 + $0x114] sm:$0xf]
                %302 = vst [vmem:[%s254 + $0x5c] sm:$0xf] %v301
                %v303 = vld [vmem:[%s253 + $0x120] sm:$0xf]
                %304 = vst [vmem:[%s254 + $0x60] sm:$0xf] %v303
                %v305 = vld [vmem:[%s253 + $0x12c] sm:$0xf]
                %306 = vst [vmem:[%s254 + $0x64] sm:$0xf] %v305
                %v307 = vld [vmem:[%s253 + $0x138] sm:$0xf]
                %308 = vst [vmem:[%s254 + $0x68] sm:$0xf] %v307
                %v309 = vld [vmem:[%s253 + $0x144] sm:$0xf]
                %310 = vst [vmem:[%s254 + $0x6c] sm:$0xf] %v309
                %v311 = vld [vmem:[%s253 + $0x150] sm:$0xf]
                %312 = vst [vmem:[%s254 + $0x70] sm:$0xf] %v311
                %v313 = vld [vmem:[%s253 + $0x15c] sm:$0xf]
                %314 = vst [vmem:[%s254 + $0x74] sm:$0xf] %v313
                %v315 = vld [vmem:[%s253 + $0x168] sm:$0xf]
                %316 = vst [vmem:[%s254 + $0x78] sm:$0xf] %v315
                %v317 = vld [vmem:[%s253 + $0x174] sm:$0xf]
                %318 = vst [vmem:[%s254 + $0x7c] sm:$0xf] %v317
              $region45: #{attn_block_pallas.5} parent=39 // loop_footer
                %s252 = sadd.s32 1, %s248
              $region46: #{attn_block_pallas.5} parent=39 // loop_footer_branch
                %247 = sbr.rel target = $region42
              $region47: #{attn_block_pallas.5} parent=39 // loop_exit
                _
            $region40: #{attn_block_pallas.5} parent=31 // pred_fallthru
              _
          $region32: #{attn_block_pallas.5} parent=27 // pred_fallthru
            _
          %402 = vnop
        $region28: #{attn_block_pallas.5} parent=23 // pred_fallthru
          _
        // Predicated region
        $region66: #{attn_block_pallas.5} parent=23 // pred_check
          %p403 = pneg %p72
        $region67: #{attn_block_pallas.5} parent=23 // pred_check_branch
          %405 = sbr.rel (%p403) target = $region69
        $region68: #{attn_block_pallas.5} parent=23 // pred_region
          %s406 = sand.u32 %s62, 1
          %s407 = sand.u32 %s62, 1
          %s408 = smul.addr %s407, 128
          %s409 = scalar_lea.vmem [#allocation3], %s408
          %s410 = smul.addr %s19, 96
          %s411 = sadd.s32 1, %s410
          %s412 = smul.addr %s411, 4
          %s413 = scalar_lea.vmem %s1, %s412
          // Predicated region
          $region70: #{attn_block_pallas.5} parent=68 // pred_check
            _
          $region71: #{attn_block_pallas.5} parent=68 // pred_check_branch
            %415 = sbr.rel (0) target = $region73
          $region72: #{attn_block_pallas.5} parent=68 // pred_region
            // Predicated region
            $region74: #{attn_block_pallas.5} parent=72 // pred_check
              _
            $region75: #{attn_block_pallas.5} parent=72 // pred_check_branch
              %417 = sbr.rel target = $region77
            $region76: #{attn_block_pallas.5} parent=72 // pred_region
              // Predicated region
              $region89: #{attn_block_pallas.5} parent=76 // pred_check
                _
              $region90: #{attn_block_pallas.5} parent=76 // pred_check_branch
                %494 = sbr.rel (0) target = $region92
              $region91: #{attn_block_pallas.5} parent=76 // pred_region
                loop: start=0, step=1, limit=1
                $region93: #{attn_block_pallas.5} parent=91 // loop_pre_header
                  _
                $region94: #{attn_block_pallas.5} parent=91 // loop_header
                  %s496 = sphi 0, %s500
                  %p497 = scmp.ge.s32.totalorder %s496, 1
                  %s501 = sphi %s413, %s413
                  %s502 = sphi %s409, %s409
                $region95: #{attn_block_pallas.5} parent=91 // loop_header_branch
                  %499 = sbr.rel (%p497) target = $region99
                $region96: #{attn_block_pallas.5} parent=91 // loop_body
                  _
                $region97: #{attn_block_pallas.5} parent=91 // loop_footer
                  %s500 = sadd.s32 1, %s496
                $region98: #{attn_block_pallas.5} parent=91 // loop_footer_branch
                  %495 = sbr.rel target = $region94
                $region99: #{attn_block_pallas.5} parent=91 // loop_exit
                  _
                loop: start=0, step=1, limit=1
                $region100: #{attn_block_pallas.5} parent=91 // loop_pre_header
                  _
                $region101: #{attn_block_pallas.5} parent=91 // loop_header
                  %s505 = sphi 0, %s509
                  %p506 = scmp.ge.s32.totalorder %s505, 1
                  %s510 = sphi %s413, %s413
                  %s511 = sphi %s409, %s409
                $region102: #{attn_block_pallas.5} parent=91 // loop_header_branch
                  %508 = sbr.rel (%p506) target = $region106
                $region103: #{attn_block_pallas.5} parent=91 // loop_body
                  %v512 = vld [vmem:[%s510] sm:$0xf]
                  %513 = vst [vmem:[%s511] sm:$0xf] %v512
                  %v514 = vld [vmem:[%s510 + $0xc] sm:$0xf]
                  %515 = vst [vmem:[%s511 + $0x4] sm:$0xf] %v514
                  %v516 = vld [vmem:[%s510 + $0x18] sm:$0xf]
                  %517 = vst [vmem:[%s511 + $0x8] sm:$0xf] %v516
                  %v518 = vld [vmem:[%s510 + $0x24] sm:$0xf]
                  %519 = vst [vmem:[%s511 + $0xc] sm:$0xf] %v518
                  %v520 = vld [vmem:[%s510 + $0x30] sm:$0xf]
                  %521 = vst [vmem:[%s511 + $0x10] sm:$0xf] %v520
                  %v522 = vld [vmem:[%s510 + $0x3c] sm:$0xf]
                  %523 = vst [vmem:[%s511 + $0x14] sm:$0xf] %v522
                  %v524 = vld [vmem:[%s510 + $0x48] sm:$0xf]
                  %525 = vst [vmem:[%s511 + $0x18] sm:$0xf] %v524
                  %v526 = vld [vmem:[%s510 + $0x54] sm:$0xf]
                  %527 = vst [vmem:[%s511 + $0x1c] sm:$0xf] %v526
                  %v528 = vld [vmem:[%s510 + $0x60] sm:$0xf]
                  %529 = vst [vmem:[%s511 + $0x20] sm:$0xf] %v528
                  %v530 = vld [vmem:[%s510 + $0x6c] sm:$0xf]
                  %531 = vst [vmem:[%s511 + $0x24] sm:$0xf] %v530
                  %v532 = vld [vmem:[%s510 + $0x78] sm:$0xf]
                  %533 = vst [vmem:[%s511 + $0x28] sm:$0xf] %v532
                  %v534 = vld [vmem:[%s510 + $0x84] sm:$0xf]
                  %535 = vst [vmem:[%s511 + $0x2c] sm:$0xf] %v534
                  %v536 = vld [vmem:[%s510 + $0x90] sm:$0xf]
                  %537 = vst [vmem:[%s511 + $0x30] sm:$0xf] %v536
                  %v538 = vld [vmem:[%s510 + $0x9c] sm:$0xf]
                  %539 = vst [vmem:[%s511 + $0x34] sm:$0xf] %v538
                  %v540 = vld [vmem:[%s510 + $0xa8] sm:$0xf]
                  %541 = vst [vmem:[%s511 + $0x38] sm:$0xf] %v540
                  %v542 = vld [vmem:[%s510 + $0xb4] sm:$0xf]
                  %543 = vst [vmem:[%s511 + $0x3c] sm:$0xf] %v542
                  %v544 = vld [vmem:[%s510 + $0xc0] sm:$0xf]
                  %545 = vst [vmem:[%s511 + $0x40] sm:$0xf] %v544
                  %v546 = vld [vmem:[%s510 + $0xcc] sm:$0xf]
                  %547 = vst [vmem:[%s511 + $0x44] sm:$0xf] %v546
                  %v548 = vld [vmem:[%s510 + $0xd8] sm:$0xf]
                  %549 = vst [vmem:[%s511 + $0x48] sm:$0xf] %v548
                  %v550 = vld [vmem:[%s510 + $0xe4] sm:$0xf]
                  %551 = vst [vmem:[%s511 + $0x4c] sm:$0xf] %v550
                  %v552 = vld [vmem:[%s510 + $0xf0] sm:$0xf]
                  %553 = vst [vmem:[%s511 + $0x50] sm:$0xf] %v552
                  %v554 = vld [vmem:[%s510 + $0xfc] sm:$0xf]
                  %555 = vst [vmem:[%s511 + $0x54] sm:$0xf] %v554
                  %v556 = vld [vmem:[%s510 + $0x108] sm:$0xf]
                  %557 = vst [vmem:[%s511 + $0x58] sm:$0xf] %v556
                  %v558 = vld [vmem:[%s510 + $0x114] sm:$0xf]
                  %559 = vst [vmem:[%s511 + $0x5c] sm:$0xf] %v558
                  %v560 = vld [vmem:[%s510 + $0x120] sm:$0xf]
                  %561 = vst [vmem:[%s511 + $0x60] sm:$0xf] %v560
                  %v562 = vld [vmem:[%s510 + $0x12c] sm:$0xf]
                  %563 = vst [vmem:[%s511 + $0x64] sm:$0xf] %v562
                  %v564 = vld [vmem:[%s510 + $0x138] sm:$0xf]
                  %565 = vst [vmem:[%s511 + $0x68] sm:$0xf] %v564
                  %v566 = vld [vmem:[%s510 + $0x144] sm:$0xf]
                  %567 = vst [vmem:[%s511 + $0x6c] sm:$0xf] %v566
                  %v568 = vld [vmem:[%s510 + $0x150] sm:$0xf]
                  %569 = vst [vmem:[%s511 + $0x70] sm:$0xf] %v568
                  %v570 = vld [vmem:[%s510 + $0x15c] sm:$0xf]
                  %571 = vst [vmem:[%s511 + $0x74] sm:$0xf] %v570
                  %v572 = vld [vmem:[%s510 + $0x168] sm:$0xf]
                  %573 = vst [vmem:[%s511 + $0x78] sm:$0xf] %v572
                  %v574 = vld [vmem:[%s510 + $0x174] sm:$0xf]
                  %575 = vst [vmem:[%s511 + $0x7c] sm:$0xf] %v574
                $region104: #{attn_block_pallas.5} parent=91 // loop_footer
                  %s509 = sadd.s32 1, %s505
                $region105: #{attn_block_pallas.5} parent=91 // loop_footer_branch
                  %504 = sbr.rel target = $region101
                $region106: #{attn_block_pallas.5} parent=91 // loop_exit
                  _
              $region92: #{attn_block_pallas.5} parent=76 // pred_fallthru
                _
            $region77: #{attn_block_pallas.5} parent=72 // pred_fallthru
              _
            // Predicated region
            $region78: #{attn_block_pallas.5} parent=72 // pred_check
              _
            $region79: #{attn_block_pallas.5} parent=72 // pred_check_branch
              %419 = sbr.rel (0) target = $region81
            $region80: #{attn_block_pallas.5} parent=72 // pred_region
              loop: start=0, step=1, limit=1
              $region82: #{attn_block_pallas.5} parent=80 // loop_pre_header
                _
              $region83: #{attn_block_pallas.5} parent=80 // loop_header
                %s422 = sphi 0, %s426
                %p423 = scmp.ge.s32.totalorder %s422, 1
                %s427 = sphi %s413, %s413
                %s428 = sphi %s409, %s409
              $region84: #{attn_block_pallas.5} parent=80 // loop_header_branch
                %425 = sbr.rel (%p423) target = $region88
              $region85: #{attn_block_pallas.5} parent=80 // loop_body
                %v429 = vld [vmem:[%s427] sm:$0xf]
                %430 = vst [vmem:[%s428] sm:$0xf] %v429
                %v431 = vld [vmem:[%s427 + $0xc] sm:$0xf]
                %432 = vst [vmem:[%s428 + $0x4] sm:$0xf] %v431
                %v433 = vld [vmem:[%s427 + $0x18] sm:$0xf]
                %434 = vst [vmem:[%s428 + $0x8] sm:$0xf] %v433
                %v435 = vld [vmem:[%s427 + $0x24] sm:$0xf]
                %436 = vst [vmem:[%s428 + $0xc] sm:$0xf] %v435
                %v437 = vld [vmem:[%s427 + $0x30] sm:$0xf]
                %438 = vst [vmem:[%s428 + $0x10] sm:$0xf] %v437
                %v439 = vld [vmem:[%s427 + $0x3c] sm:$0xf]
                %440 = vst [vmem:[%s428 + $0x14] sm:$0xf] %v439
                %v441 = vld [vmem:[%s427 + $0x48] sm:$0xf]
                %442 = vst [vmem:[%s428 + $0x18] sm:$0xf] %v441
                %v443 = vld [vmem:[%s427 + $0x54] sm:$0xf]
                %444 = vst [vmem:[%s428 + $0x1c] sm:$0xf] %v443
                %v445 = vld [vmem:[%s427 + $0x60] sm:$0xf]
                %446 = vst [vmem:[%s428 + $0x20] sm:$0xf] %v445
                %v447 = vld [vmem:[%s427 + $0x6c] sm:$0xf]
                %448 = vst [vmem:[%s428 + $0x24] sm:$0xf] %v447
                %v449 = vld [vmem:[%s427 + $0x78] sm:$0xf]
                %450 = vst [vmem:[%s428 + $0x28] sm:$0xf] %v449
                %v451 = vld [vmem:[%s427 + $0x84] sm:$0xf]
                %452 = vst [vmem:[%s428 + $0x2c] sm:$0xf] %v451
                %v453 = vld [vmem:[%s427 + $0x90] sm:$0xf]
                %454 = vst [vmem:[%s428 + $0x30] sm:$0xf] %v453
                %v455 = vld [vmem:[%s427 + $0x9c] sm:$0xf]
                %456 = vst [vmem:[%s428 + $0x34] sm:$0xf] %v455
                %v457 = vld [vmem:[%s427 + $0xa8] sm:$0xf]
                %458 = vst [vmem:[%s428 + $0x38] sm:$0xf] %v457
                %v459 = vld [vmem:[%s427 + $0xb4] sm:$0xf]
                %460 = vst [vmem:[%s428 + $0x3c] sm:$0xf] %v459
                %v461 = vld [vmem:[%s427 + $0xc0] sm:$0xf]
                %462 = vst [vmem:[%s428 + $0x40] sm:$0xf] %v461
                %v463 = vld [vmem:[%s427 + $0xcc] sm:$0xf]
                %464 = vst [vmem:[%s428 + $0x44] sm:$0xf] %v463
                %v465 = vld [vmem:[%s427 + $0xd8] sm:$0xf]
                %466 = vst [vmem:[%s428 + $0x48] sm:$0xf] %v465
                %v467 = vld [vmem:[%s427 + $0xe4] sm:$0xf]
                %468 = vst [vmem:[%s428 + $0x4c] sm:$0xf] %v467
                %v469 = vld [vmem:[%s427 + $0xf0] sm:$0xf]
                %470 = vst [vmem:[%s428 + $0x50] sm:$0xf] %v469
                %v471 = vld [vmem:[%s427 + $0xfc] sm:$0xf]
                %472 = vst [vmem:[%s428 + $0x54] sm:$0xf] %v471
                %v473 = vld [vmem:[%s427 + $0x108] sm:$0xf]
                %474 = vst [vmem:[%s428 + $0x58] sm:$0xf] %v473
                %v475 = vld [vmem:[%s427 + $0x114] sm:$0xf]
                %476 = vst [vmem:[%s428 + $0x5c] sm:$0xf] %v475
                %v477 = vld [vmem:[%s427 + $0x120] sm:$0xf]
                %478 = vst [vmem:[%s428 + $0x60] sm:$0xf] %v477
                %v479 = vld [vmem:[%s427 + $0x12c] sm:$0xf]
                %480 = vst [vmem:[%s428 + $0x64] sm:$0xf] %v479
                %v481 = vld [vmem:[%s427 + $0x138] sm:$0xf]
                %482 = vst [vmem:[%s428 + $0x68] sm:$0xf] %v481
                %v483 = vld [vmem:[%s427 + $0x144] sm:$0xf]
                %484 = vst [vmem:[%s428 + $0x6c] sm:$0xf] %v483
                %v485 = vld [vmem:[%s427 + $0x150] sm:$0xf]
                %486 = vst [vmem:[%s428 + $0x70] sm:$0xf] %v485
                %v487 = vld [vmem:[%s427 + $0x15c] sm:$0xf]
                %488 = vst [vmem:[%s428 + $0x74] sm:$0xf] %v487
                %v489 = vld [vmem:[%s427 + $0x168] sm:$0xf]
                %490 = vst [vmem:[%s428 + $0x78] sm:$0xf] %v489
                %v491 = vld [vmem:[%s427 + $0x174] sm:$0xf]
                %492 = vst [vmem:[%s428 + $0x7c] sm:$0xf] %v491
              $region86: #{attn_block_pallas.5} parent=80 // loop_footer
                %s426 = sadd.s32 1, %s422
              $region87: #{attn_block_pallas.5} parent=80 // loop_footer_branch
                %421 = sbr.rel target = $region83
              $region88: #{attn_block_pallas.5} parent=80 // loop_exit
                _
            $region81: #{attn_block_pallas.5} parent=72 // pred_fallthru
              _
          $region73: #{attn_block_pallas.5} parent=68 // pred_fallthru
            _
          %576 = vnop
        $region69: #{attn_block_pallas.5} parent=23 // pred_fallthru
          _
        // Predicated region
        $region107: #{attn_block_pallas.5} parent=23 // pred_check
          %p577 = pneg %p98
        $region108: #{attn_block_pallas.5} parent=23 // pred_check_branch
          %579 = sbr.rel (%p577) target = $region110
        $region109: #{attn_block_pallas.5} parent=23 // pred_region
          %s580 = sand.u32 %s88, 1
          %s581 = sand.u32 %s88, 1
          %s582 = smul.addr %s581, 128
          %s583 = scalar_lea.vmem [#allocation4], %s582
          %s584 = smul.addr %s19, 96
          %s585 = sadd.s32 2, %s584
          %s586 = smul.addr %s585, 4
          %s587 = scalar_lea.vmem %s2, %s586
          // Predicated region
          $region111: #{attn_block_pallas.5} parent=109 // pred_check
            _
          $region112: #{attn_block_pallas.5} parent=109 // pred_check_branch
            %589 = sbr.rel (0) target = $region114
          $region113: #{attn_block_pallas.5} parent=109 // pred_region
            // Predicated region
            $region115: #{attn_block_pallas.5} parent=113 // pred_check
              _
            $region116: #{attn_block_pallas.5} parent=113 // pred_check_branch
              %591 = sbr.rel target = $region118
            $region117: #{attn_block_pallas.5} parent=113 // pred_region
              // Predicated region
              $region130: #{attn_block_pallas.5} parent=117 // pred_check
                _
              $region131: #{attn_block_pallas.5} parent=117 // pred_check_branch
                %668 = sbr.rel (0) target = $region133
              $region132: #{attn_block_pallas.5} parent=117 // pred_region
                loop: start=0, step=1, limit=1
                $region134: #{attn_block_pallas.5} parent=132 // loop_pre_header
                  _
                $region135: #{attn_block_pallas.5} parent=132 // loop_header
                  %s670 = sphi 0, %s674
                  %p671 = scmp.ge.s32.totalorder %s670, 1
                  %s675 = sphi %s587, %s587
                  %s676 = sphi %s583, %s583
                $region136: #{attn_block_pallas.5} parent=132 // loop_header_branch
                  %673 = sbr.rel (%p671) target = $region140
                $region137: #{attn_block_pallas.5} parent=132 // loop_body
                  _
                $region138: #{attn_block_pallas.5} parent=132 // loop_footer
                  %s674 = sadd.s32 1, %s670
                $region139: #{attn_block_pallas.5} parent=132 // loop_footer_branch
                  %669 = sbr.rel target = $region135
                $region140: #{attn_block_pallas.5} parent=132 // loop_exit
                  _
                loop: start=0, step=1, limit=1
                $region141: #{attn_block_pallas.5} parent=132 // loop_pre_header
                  _
                $region142: #{attn_block_pallas.5} parent=132 // loop_header
                  %s679 = sphi 0, %s683
                  %p680 = scmp.ge.s32.totalorder %s679, 1
                  %s684 = sphi %s587, %s587
                  %s685 = sphi %s583, %s583
                $region143: #{attn_block_pallas.5} parent=132 // loop_header_branch
                  %682 = sbr.rel (%p680) target = $region147
                $region144: #{attn_block_pallas.5} parent=132 // loop_body
                  %v686 = vld [vmem:[%s684] sm:$0xf]
                  %687 = vst [vmem:[%s685] sm:$0xf] %v686
                  %v688 = vld [vmem:[%s684 + $0xc] sm:$0xf]
                  %689 = vst [vmem:[%s685 + $0x4] sm:$0xf] %v688
                  %v690 = vld [vmem:[%s684 + $0x18] sm:$0xf]
                  %691 = vst [vmem:[%s685 + $0x8] sm:$0xf] %v690
                  %v692 = vld [vmem:[%s684 + $0x24] sm:$0xf]
                  %693 = vst [vmem:[%s685 + $0xc] sm:$0xf] %v692
                  %v694 = vld [vmem:[%s684 + $0x30] sm:$0xf]
                  %695 = vst [vmem:[%s685 + $0x10] sm:$0xf] %v694
                  %v696 = vld [vmem:[%s684 + $0x3c] sm:$0xf]
                  %697 = vst [vmem:[%s685 + $0x14] sm:$0xf] %v696
                  %v698 = vld [vmem:[%s684 + $0x48] sm:$0xf]
                  %699 = vst [vmem:[%s685 + $0x18] sm:$0xf] %v698
                  %v700 = vld [vmem:[%s684 + $0x54] sm:$0xf]
                  %701 = vst [vmem:[%s685 + $0x1c] sm:$0xf] %v700
                  %v702 = vld [vmem:[%s684 + $0x60] sm:$0xf]
                  %703 = vst [vmem:[%s685 + $0x20] sm:$0xf] %v702
                  %v704 = vld [vmem:[%s684 + $0x6c] sm:$0xf]
                  %705 = vst [vmem:[%s685 + $0x24] sm:$0xf] %v704
                  %v706 = vld [vmem:[%s684 + $0x78] sm:$0xf]
                  %707 = vst [vmem:[%s685 + $0x28] sm:$0xf] %v706
                  %v708 = vld [vmem:[%s684 + $0x84] sm:$0xf]
                  %709 = vst [vmem:[%s685 + $0x2c] sm:$0xf] %v708
                  %v710 = vld [vmem:[%s684 + $0x90] sm:$0xf]
                  %711 = vst [vmem:[%s685 + $0x30] sm:$0xf] %v710
                  %v712 = vld [vmem:[%s684 + $0x9c] sm:$0xf]
                  %713 = vst [vmem:[%s685 + $0x34] sm:$0xf] %v712
                  %v714 = vld [vmem:[%s684 + $0xa8] sm:$0xf]
                  %715 = vst [vmem:[%s685 + $0x38] sm:$0xf] %v714
                  %v716 = vld [vmem:[%s684 + $0xb4] sm:$0xf]
                  %717 = vst [vmem:[%s685 + $0x3c] sm:$0xf] %v716
                  %v718 = vld [vmem:[%s684 + $0xc0] sm:$0xf]
                  %719 = vst [vmem:[%s685 + $0x40] sm:$0xf] %v718
                  %v720 = vld [vmem:[%s684 + $0xcc] sm:$0xf]
                  %721 = vst [vmem:[%s685 + $0x44] sm:$0xf] %v720
                  %v722 = vld [vmem:[%s684 + $0xd8] sm:$0xf]
                  %723 = vst [vmem:[%s685 + $0x48] sm:$0xf] %v722
                  %v724 = vld [vmem:[%s684 + $0xe4] sm:$0xf]
                  %725 = vst [vmem:[%s685 + $0x4c] sm:$0xf] %v724
                  %v726 = vld [vmem:[%s684 + $0xf0] sm:$0xf]
                  %727 = vst [vmem:[%s685 + $0x50] sm:$0xf] %v726
                  %v728 = vld [vmem:[%s684 + $0xfc] sm:$0xf]
                  %729 = vst [vmem:[%s685 + $0x54] sm:$0xf] %v728
                  %v730 = vld [vmem:[%s684 + $0x108] sm:$0xf]
                  %731 = vst [vmem:[%s685 + $0x58] sm:$0xf] %v730
                  %v732 = vld [vmem:[%s684 + $0x114] sm:$0xf]
                  %733 = vst [vmem:[%s685 + $0x5c] sm:$0xf] %v732
                  %v734 = vld [vmem:[%s684 + $0x120] sm:$0xf]
                  %735 = vst [vmem:[%s685 + $0x60] sm:$0xf] %v734
                  %v736 = vld [vmem:[%s684 + $0x12c] sm:$0xf]
                  %737 = vst [vmem:[%s685 + $0x64] sm:$0xf] %v736
                  %v738 = vld [vmem:[%s684 + $0x138] sm:$0xf]
                  %739 = vst [vmem:[%s685 + $0x68] sm:$0xf] %v738
                  %v740 = vld [vmem:[%s684 + $0x144] sm:$0xf]
                  %741 = vst [vmem:[%s685 + $0x6c] sm:$0xf] %v740
                  %v742 = vld [vmem:[%s684 + $0x150] sm:$0xf]
                  %743 = vst [vmem:[%s685 + $0x70] sm:$0xf] %v742
                  %v744 = vld [vmem:[%s684 + $0x15c] sm:$0xf]
                  %745 = vst [vmem:[%s685 + $0x74] sm:$0xf] %v744
                  %v746 = vld [vmem:[%s684 + $0x168] sm:$0xf]
                  %747 = vst [vmem:[%s685 + $0x78] sm:$0xf] %v746
                  %v748 = vld [vmem:[%s684 + $0x174] sm:$0xf]
                  %749 = vst [vmem:[%s685 + $0x7c] sm:$0xf] %v748
                $region145: #{attn_block_pallas.5} parent=132 // loop_footer
                  %s683 = sadd.s32 1, %s679
                $region146: #{attn_block_pallas.5} parent=132 // loop_footer_branch
                  %678 = sbr.rel target = $region142
                $region147: #{attn_block_pallas.5} parent=132 // loop_exit
                  _
              $region133: #{attn_block_pallas.5} parent=117 // pred_fallthru
                _
            $region118: #{attn_block_pallas.5} parent=113 // pred_fallthru
              _
            // Predicated region
            $region119: #{attn_block_pallas.5} parent=113 // pred_check
              _
            $region120: #{attn_block_pallas.5} parent=113 // pred_check_branch
              %593 = sbr.rel (0) target = $region122
            $region121: #{attn_block_pallas.5} parent=113 // pred_region
              loop: start=0, step=1, limit=1
              $region123: #{attn_block_pallas.5} parent=121 // loop_pre_header
                _
              $region124: #{attn_block_pallas.5} parent=121 // loop_header
                %s596 = sphi 0, %s600
                %p597 = scmp.ge.s32.totalorder %s596, 1
                %s601 = sphi %s587, %s587
                %s602 = sphi %s583, %s583
              $region125: #{attn_block_pallas.5} parent=121 // loop_header_branch
                %599 = sbr.rel (%p597) target = $region129
              $region126: #{attn_block_pallas.5} parent=121 // loop_body
                %v603 = vld [vmem:[%s601] sm:$0xf]
                %604 = vst [vmem:[%s602] sm:$0xf] %v603
                %v605 = vld [vmem:[%s601 + $0xc] sm:$0xf]
                %606 = vst [vmem:[%s602 + $0x4] sm:$0xf] %v605
                %v607 = vld [vmem:[%s601 + $0x18] sm:$0xf]
                %608 = vst [vmem:[%s602 + $0x8] sm:$0xf] %v607
                %v609 = vld [vmem:[%s601 + $0x24] sm:$0xf]
                %610 = vst [vmem:[%s602 + $0xc] sm:$0xf] %v609
                %v611 = vld [vmem:[%s601 + $0x30] sm:$0xf]
                %612 = vst [vmem:[%s602 + $0x10] sm:$0xf] %v611
                %v613 = vld [vmem:[%s601 + $0x3c] sm:$0xf]
                %614 = vst [vmem:[%s602 + $0x14] sm:$0xf] %v613
                %v615 = vld [vmem:[%s601 + $0x48] sm:$0xf]
                %616 = vst [vmem:[%s602 + $0x18] sm:$0xf] %v615
                %v617 = vld [vmem:[%s601 + $0x54] sm:$0xf]
                %618 = vst [vmem:[%s602 + $0x1c] sm:$0xf] %v617
                %v619 = vld [vmem:[%s601 + $0x60] sm:$0xf]
                %620 = vst [vmem:[%s602 + $0x20] sm:$0xf] %v619
                %v621 = vld [vmem:[%s601 + $0x6c] sm:$0xf]
                %622 = vst [vmem:[%s602 + $0x24] sm:$0xf] %v621
                %v623 = vld [vmem:[%s601 + $0x78] sm:$0xf]
                %624 = vst [vmem:[%s602 + $0x28] sm:$0xf] %v623
                %v625 = vld [vmem:[%s601 + $0x84] sm:$0xf]
                %626 = vst [vmem:[%s602 + $0x2c] sm:$0xf] %v625
                %v627 = vld [vmem:[%s601 + $0x90] sm:$0xf]
                %628 = vst [vmem:[%s602 + $0x30] sm:$0xf] %v627
                %v629 = vld [vmem:[%s601 + $0x9c] sm:$0xf]
                %630 = vst [vmem:[%s602 + $0x34] sm:$0xf] %v629
                %v631 = vld [vmem:[%s601 + $0xa8] sm:$0xf]
                %632 = vst [vmem:[%s602 + $0x38] sm:$0xf] %v631
                %v633 = vld [vmem:[%s601 + $0xb4] sm:$0xf]
                %634 = vst [vmem:[%s602 + $0x3c] sm:$0xf] %v633
                %v635 = vld [vmem:[%s601 + $0xc0] sm:$0xf]
                %636 = vst [vmem:[%s602 + $0x40] sm:$0xf] %v635
                %v637 = vld [vmem:[%s601 + $0xcc] sm:$0xf]
                %638 = vst [vmem:[%s602 + $0x44] sm:$0xf] %v637
                %v639 = vld [vmem:[%s601 + $0xd8] sm:$0xf]
                %640 = vst [vmem:[%s602 + $0x48] sm:$0xf] %v639
                %v641 = vld [vmem:[%s601 + $0xe4] sm:$0xf]
                %642 = vst [vmem:[%s602 + $0x4c] sm:$0xf] %v641
                %v643 = vld [vmem:[%s601 + $0xf0] sm:$0xf]
                %644 = vst [vmem:[%s602 + $0x50] sm:$0xf] %v643
                %v645 = vld [vmem:[%s601 + $0xfc] sm:$0xf]
                %646 = vst [vmem:[%s602 + $0x54] sm:$0xf] %v645
                %v647 = vld [vmem:[%s601 + $0x108] sm:$0xf]
                %648 = vst [vmem:[%s602 + $0x58] sm:$0xf] %v647
                %v649 = vld [vmem:[%s601 + $0x114] sm:$0xf]
                %650 = vst [vmem:[%s602 + $0x5c] sm:$0xf] %v649
                %v651 = vld [vmem:[%s601 + $0x120] sm:$0xf]
                %652 = vst [vmem:[%s602 + $0x60] sm:$0xf] %v651
                %v653 = vld [vmem:[%s601 + $0x12c] sm:$0xf]
                %654 = vst [vmem:[%s602 + $0x64] sm:$0xf] %v653
                %v655 = vld [vmem:[%s601 + $0x138] sm:$0xf]
                %656 = vst [vmem:[%s602 + $0x68] sm:$0xf] %v655
                %v657 = vld [vmem:[%s601 + $0x144] sm:$0xf]
                %658 = vst [vmem:[%s602 + $0x6c] sm:$0xf] %v657
                %v659 = vld [vmem:[%s601 + $0x150] sm:$0xf]
                %660 = vst [vmem:[%s602 + $0x70] sm:$0xf] %v659
                %v661 = vld [vmem:[%s601 + $0x15c] sm:$0xf]
                %662 = vst [vmem:[%s602 + $0x74] sm:$0xf] %v661
                %v663 = vld [vmem:[%s601 + $0x168] sm:$0xf]
                %664 = vst [vmem:[%s602 + $0x78] sm:$0xf] %v663
                %v665 = vld [vmem:[%s601 + $0x174] sm:$0xf]
                %666 = vst [vmem:[%s602 + $0x7c] sm:$0xf] %v665
              $region127: #{attn_block_pallas.5} parent=121 // loop_footer
                %s600 = sadd.s32 1, %s596
              $region128: #{attn_block_pallas.5} parent=121 // loop_footer_branch
                %595 = sbr.rel target = $region124
              $region129: #{attn_block_pallas.5} parent=121 // loop_exit
                _
            $region122: #{attn_block_pallas.5} parent=113 // pred_fallthru
              _
          $region114: #{attn_block_pallas.5} parent=109 // pred_fallthru
            _
          %750 = vnop
        $region110: #{attn_block_pallas.5} parent=23 // pred_fallthru
          _
        // Predicated region
        $region148: #{attn_block_pallas.5} parent=23 // pred_check
          %p751 = pneg %p126
        $region149: #{attn_block_pallas.5} parent=23 // pred_check_branch
          %753 = sbr.rel (%p751) target = $region151
        $region150: #{attn_block_pallas.5} parent=23 // pred_region
          %s754 = smul.u32 2, %s20
          %p755 = scmp.lt.s32.totalorder %s19, 1
          %s756 = scalar_select %p755, %s19, 1
          %p757 = scmp.lt.s32.totalorder %s754, 1
          %s758 = scalar_select %p757, %s754, 1
          %s759 = smul.addr %s756, 32
          %s760 = sadd.s32 %s758, %s759
          %s761 = smul.addr %s760, 8
          %s762 = scalar_lea.vmem %s3, %s761
          %s763 = smul.u32 2, %s20
        $region151: #{attn_block_pallas.5} parent=23 // pred_fallthru
          _
      $region24: #{attn_block_pallas.5} parent=5 // pred_fallthru
        _
      %p764 = scmp.le.s32.totalorder 1, %s12
      %p765 = scmp.lt.s32.totalorder %s12, 3
      %p766 = pnand %p764, %p765
      %p767 = pneg %p766
      // Predicated region
      $region152: #{attn_block_pallas.5} parent=5 // pred_check
        _
      $region153: #{attn_block_pallas.5} parent=5 // pred_check_branch
        %769 = sbr.rel (%p766) target = $region155
      $region154: #{attn_block_pallas.5} parent=5 // pred_region
        %s770 = ssub.s32 %s12, 1
        %s771 = sand.u32 %s39, 1
        %s772 = sand.u32 %s39, 1
        %s773 = smul.addr %s772, 128
        %s774 = scalar_lea.vmem [#allocation2], %s773
        // Predicated region
        $region156: #{attn_block_pallas.5} parent=154 // pred_check
          %p775 = pneg %p52
        $region157: #{attn_block_pallas.5} parent=154 // pred_check_branch
          %777 = sbr.rel (%p775) target = $region159
        $region158: #{attn_block_pallas.5} parent=154 // pred_region
          _
        $region159: #{attn_block_pallas.5} parent=154 // pred_fallthru
          _
        %s778 = sand.u32 %s65, 1
        %s779 = sand.u32 %s65, 1
        %s780 = smul.addr %s779, 128
        %s781 = scalar_lea.vmem [#allocation3], %s780
        // Predicated region
        $region160: #{attn_block_pallas.5} parent=154 // pred_check
          %p782 = pneg %p78
        $region161: #{attn_block_pallas.5} parent=154 // pred_check_branch
          %784 = sbr.rel (%p782) target = $region163
        $region162: #{attn_block_pallas.5} parent=154 // pred_region
          _
        $region163: #{attn_block_pallas.5} parent=154 // pred_fallthru
          _
        %s785 = sand.u32 %s91, 1
        %s786 = sand.u32 %s91, 1
        %s787 = smul.addr %s786, 128
        %s788 = scalar_lea.vmem [#allocation4], %s787
        // Predicated region
        $region164: #{attn_block_pallas.5} parent=154 // pred_check
          %p789 = pneg %p104
        $region165: #{attn_block_pallas.5} parent=154 // pred_check_branch
          %791 = sbr.rel (%p789) target = $region167
        $region166: #{attn_block_pallas.5} parent=154 // pred_region
          _
        $region167: #{attn_block_pallas.5} parent=154 // pred_fallthru
          _
        %s792 = sand.u32 %s39, 1
        %s793 = sand.u32 %s39, 1
        %s794 = smul.addr %s793, 128
        %s795 = scalar_lea.vmem [#allocation2], %s794
        %p796 = pneg %p52
        %p797 = pneg %p49
        %s798 = sand.u32 %s65, 1
        %s799 = sand.u32 %s65, 1
        %s800 = smul.addr %s799, 128
        %s801 = scalar_lea.vmem [#allocation3], %s800
        %p802 = pneg %p78
        %p803 = pneg %p75
        %s804 = sand.u32 %s91, 1
        %s805 = sand.u32 %s91, 1
        %s806 = smul.addr %s805, 128
        %s807 = scalar_lea.vmem [#allocation4], %s806
        %p808 = pneg %p104
        %p809 = pneg %p101
        %s810 = smul.u32 2, %s22
        %p811 = scmp.lt.s32.totalorder %s21, 1
        %s812 = scalar_select %p811, %s21, 1
        %p813 = scmp.lt.s32.totalorder %s810, 1
        %s814 = scalar_select %p813, %s810, 1
        %s815 = smul.addr %s812, 32
        %s816 = sadd.s32 %s814, %s815
        %s817 = smul.addr %s816, 8
        %s818 = scalar_lea.vmem %s3, %s817
        %p819 = pneg %p132
        %p820 = pneg %p129
        %p821 = pneg %p153
        %p822 = pneg %p150
        %p823 = pneg %p174
        %p824 = pneg %p171
        %p825 = pneg %p202
        %p826 = pneg %p199
        %s827 = smul.u32 2, %s22
        %p828 = scmp.lt.s32.totalorder %s21, 1
        %s829 = scalar_select %p828, %s21, 1
        %p830 = scmp.lt.s32.totalorder %s827, 1
        %s831 = scalar_select %p830, %s827, 1
        %s832 = smul.addr %s829, 32
        %s833 = sadd.s32 %s831, %s832
        %s834 = smul.addr %s833, 8
        %s835 = scalar_lea.vmem %s6, %s834
        %s836 = smul.u32 32, %s22
        %s837 = smul.u32 2, %s22
        %p838 = scmp.lt.s32.totalorder %s21, 1
        %s839 = scalar_select %p838, %s21, 1
        %p840 = scmp.lt.s32.totalorder %s837, 1
        %s841 = scalar_select %p840, %s837, 1
        %s842 = smul.addr %s839, 32
        %s843 = sadd.s32 %s841, %s842
        %s844 = smul.addr %s843, 8
        %s845 = scalar_lea.vmem %s3, %s844
        %s846 = smul.u32 2, %s22
        %s847 = smul.u32 2, %s22
        %p848 = scmp.lt.s32.totalorder %s21, 1
        %s849 = scalar_select %p848, %s21, 1
        %p850 = scmp.lt.s32.totalorder %s847, 1
        %s851 = scalar_select %p850, %s847, 1
        %s852 = smul.addr %s849, 32
        %s853 = sadd.s32 %s851, %s852
        %s854 = smul.addr %s853, 8
        %s855 = scalar_lea.vmem %s6, %s854
        %s856 = smul.u32 2, %s22
        %v858 = vld [vmem:[%s774] sm:$0xf]
        %v859 = vld [vmem:[%s774 + $0x4] sm:$0xf]
        %v860 = vld [vmem:[%s774 + $0x8] sm:$0xf]
        %v861 = vld [vmem:[%s774 + $0xc] sm:$0xf]
        %v862 = vld [vmem:[%s774 + $0x10] sm:$0xf]
        %v863 = vld [vmem:[%s774 + $0x14] sm:$0xf]
        %v864 = vld [vmem:[%s774 + $0x18] sm:$0xf]
        %v865 = vld [vmem:[%s774 + $0x1c] sm:$0xf]
        %v866 = vld [vmem:[%s774 + $0x20] sm:$0xf]
        %v867 = vld [vmem:[%s774 + $0x24] sm:$0xf]
        %v868 = vld [vmem:[%s774 + $0x28] sm:$0xf]
        %v869 = vld [vmem:[%s774 + $0x2c] sm:$0xf]
        %v870 = vld [vmem:[%s774 + $0x30] sm:$0xf]
        %v871 = vld [vmem:[%s774 + $0x34] sm:$0xf]
        %v872 = vld [vmem:[%s774 + $0x38] sm:$0xf]
        %v873 = vld [vmem:[%s774 + $0x3c] sm:$0xf]
        %v874 = vld [vmem:[%s774 + $0x40] sm:$0xf]
        %v875 = vld [vmem:[%s774 + $0x44] sm:$0xf]
        %v876 = vld [vmem:[%s774 + $0x48] sm:$0xf]
        %v877 = vld [vmem:[%s774 + $0x4c] sm:$0xf]
        %v878 = vld [vmem:[%s774 + $0x50] sm:$0xf]
        %v879 = vld [vmem:[%s774 + $0x54] sm:$0xf]
        %v880 = vld [vmem:[%s774 + $0x58] sm:$0xf]
        %v881 = vld [vmem:[%s774 + $0x5c] sm:$0xf]
        %v882 = vld [vmem:[%s774 + $0x60] sm:$0xf]
        %v883 = vld [vmem:[%s774 + $0x64] sm:$0xf]
        %v884 = vld [vmem:[%s774 + $0x68] sm:$0xf]
        %v885 = vld [vmem:[%s774 + $0x6c] sm:$0xf]
        %v886 = vld [vmem:[%s774 + $0x70] sm:$0xf]
        %v887 = vld [vmem:[%s774 + $0x74] sm:$0xf]
        %v888 = vld [vmem:[%s774 + $0x78] sm:$0xf]
        %v889 = vld [vmem:[%s774 + $0x7c] sm:$0xf]
        %v890 = vld [vmem:[%s781] sm:$0xf]
        %v891 = vld [vmem:[%s781 + $0x4] sm:$0xf]
        %v892 = vld [vmem:[%s781 + $0x8] sm:$0xf]
        %v893 = vld [vmem:[%s781 + $0xc] sm:$0xf]
        %v894 = vld [vmem:[%s781 + $0x10] sm:$0xf]
        %v895 = vld [vmem:[%s781 + $0x14] sm:$0xf]
        %v896 = vld [vmem:[%s781 + $0x18] sm:$0xf]
        %v897 = vld [vmem:[%s781 + $0x1c] sm:$0xf]
        %v898 = vld [vmem:[%s781 + $0x20] sm:$0xf]
        %v899 = vld [vmem:[%s781 + $0x24] sm:$0xf]
        %v900 = vld [vmem:[%s781 + $0x28] sm:$0xf]
        %v901 = vld [vmem:[%s781 + $0x2c] sm:$0xf]
        %v902 = vld [vmem:[%s781 + $0x30] sm:$0xf]
        %v903 = vld [vmem:[%s781 + $0x34] sm:$0xf]
        %v904 = vld [vmem:[%s781 + $0x38] sm:$0xf]
        %v905 = vld [vmem:[%s781 + $0x3c] sm:$0xf]
        %v906 = vld [vmem:[%s781 + $0x40] sm:$0xf]
        %v907 = vld [vmem:[%s781 + $0x44] sm:$0xf]
        %v908 = vld [vmem:[%s781 + $0x48] sm:$0xf]
        %v909 = vld [vmem:[%s781 + $0x4c] sm:$0xf]
        %v910 = vld [vmem:[%s781 + $0x50] sm:$0xf]
        %v911 = vld [vmem:[%s781 + $0x54] sm:$0xf]
        %v912 = vld [vmem:[%s781 + $0x58] sm:$0xf]
        %v913 = vld [vmem:[%s781 + $0x5c] sm:$0xf]
        %v914 = vld [vmem:[%s781 + $0x60] sm:$0xf]
        %v915 = vld [vmem:[%s781 + $0x64] sm:$0xf]
        %v916 = vld [vmem:[%s781 + $0x68] sm:$0xf]
        %v917 = vld [vmem:[%s781 + $0x6c] sm:$0xf]
        %v918 = vld [vmem:[%s781 + $0x70] sm:$0xf]
        %v919 = vld [vmem:[%s781 + $0x74] sm:$0xf]
        %v920 = vld [vmem:[%s781 + $0x78] sm:$0xf]
        %v921 = vld [vmem:[%s781 + $0x7c] sm:$0xf]
        %v954 = vunpack.c.l.b16 %v858
        %v955 = vunpack.c.l.b16 %v859
        %v956 = vunpack.c.l.b16 %v860
        %v957 = vunpack.c.l.b16 %v861
        %v958 = vunpack.c.l.b16 %v862
        %v959 = vunpack.c.l.b16 %v863
        %v960 = vunpack.c.l.b16 %v864
        %v961 = vunpack.c.l.b16 %v865
        %v962 = vunpack.c.l.b16 %v866
        %v963 = vunpack.c.l.b16 %v867
        %v964 = vunpack.c.l.b16 %v868
        %v965 = vunpack.c.l.b16 %v869
        %v966 = vunpack.c.l.b16 %v870
        %v967 = vunpack.c.l.b16 %v871
        %v968 = vunpack.c.l.b16 %v872
        %v969 = vunpack.c.l.b16 %v873
        %v970 = vunpack.c.l.b16 %v874
        %v971 = vunpack.c.l.b16 %v875
        %v972 = vunpack.c.l.b16 %v876
        %v973 = vunpack.c.l.b16 %v877
        %v974 = vunpack.c.l.b16 %v878
        %v975 = vunpack.c.l.b16 %v879
        %v976 = vunpack.c.l.b16 %v880
        %v977 = vunpack.c.l.b16 %v881
        %v978 = vunpack.c.l.b16 %v882
        %v979 = vunpack.c.l.b16 %v883
        %v980 = vunpack.c.l.b16 %v884
        %v981 = vunpack.c.l.b16 %v885
        %v982 = vunpack.c.l.b16 %v886
        %v983 = vunpack.c.l.b16 %v887
        %v984 = vunpack.c.l.b16 %v888
        %v985 = vunpack.c.l.b16 %v889
        %v986 = vpack.c.b16 %v955, %v954
        %v987 = vpack.c.b16 %v957, %v956
        %v988 = vpack.c.b16 %v959, %v958
        %v989 = vpack.c.b16 %v961, %v960
        %v990 = vpack.c.b16 %v963, %v962
        %v991 = vpack.c.b16 %v965, %v964
        %v992 = vpack.c.b16 %v967, %v966
        %v993 = vpack.c.b16 %v969, %v968
        %v994 = vpack.c.b16 %v971, %v970
        %v995 = vpack.c.b16 %v973, %v972
        %v996 = vpack.c.b16 %v975, %v974
        %v997 = vpack.c.b16 %v977, %v976
        %v998 = vpack.c.b16 %v979, %v978
        %v999 = vpack.c.b16 %v981, %v980
        %v1000 = vpack.c.b16 %v983, %v982
        %v1001 = vpack.c.b16 %v985, %v984
        %v1050 = vunpack.c.l.b16 %v890
        %v1051 = vunpack.c.l.b16 %v891
        %v1052 = vunpack.c.l.b16 %v892
        %v1053 = vunpack.c.l.b16 %v893
        %v1054 = vunpack.c.l.b16 %v894
        %v1055 = vunpack.c.l.b16 %v895
        %v1056 = vunpack.c.l.b16 %v896
        %v1057 = vunpack.c.l.b16 %v897
        %v1058 = vunpack.c.l.b16 %v898
        %v1059 = vunpack.c.l.b16 %v899
        %v1060 = vunpack.c.l.b16 %v900
        %v1061 = vunpack.c.l.b16 %v901
        %v1062 = vunpack.c.l.b16 %v902
        %v1063 = vunpack.c.l.b16 %v903
        %v1064 = vunpack.c.l.b16 %v904
        %v1065 = vunpack.c.l.b16 %v905
        %v1066 = vunpack.c.l.b16 %v906
        %v1067 = vunpack.c.l.b16 %v907
        %v1068 = vunpack.c.l.b16 %v908
        %v1069 = vunpack.c.l.b16 %v909
        %v1070 = vunpack.c.l.b16 %v910
        %v1071 = vunpack.c.l.b16 %v911
        %v1072 = vunpack.c.l.b16 %v912
        %v1073 = vunpack.c.l.b16 %v913
        %v1074 = vunpack.c.l.b16 %v914
        %v1075 = vunpack.c.l.b16 %v915
        %v1076 = vunpack.c.l.b16 %v916
        %v1077 = vunpack.c.l.b16 %v917
        %v1078 = vunpack.c.l.b16 %v918
        %v1079 = vunpack.c.l.b16 %v919
        %v1080 = vunpack.c.l.b16 %v920
        %v1081 = vunpack.c.l.b16 %v921
        %v1082 = vpack.c.b16 %v1051, %v1050
        %v1083 = vpack.c.b16 %v1053, %v1052
        %v1084 = vpack.c.b16 %v1055, %v1054
        %v1085 = vpack.c.b16 %v1057, %v1056
        %v1086 = vpack.c.b16 %v1059, %v1058
        %v1087 = vpack.c.b16 %v1061, %v1060
        %v1088 = vpack.c.b16 %v1063, %v1062
        %v1089 = vpack.c.b16 %v1065, %v1064
        %v1090 = vpack.c.b16 %v1067, %v1066
        %v1091 = vpack.c.b16 %v1069, %v1068
        %v1092 = vpack.c.b16 %v1071, %v1070
        %v1093 = vpack.c.b16 %v1073, %v1072
        %v1094 = vpack.c.b16 %v1075, %v1074
        %v1095 = vpack.c.b16 %v1077, %v1076
        %v1096 = vpack.c.b16 %v1079, %v1078
        %v1097 = vpack.c.b16 %v1081, %v1080
        %1114 = vmatprep.subr.bf16.mxu0 0
        %1115 = vmatpush1.bf16.xpose.msra.mxu0 %v1082
        %1116 = vmatprep.subr.bf16.mxu0 0
        %1117 = vmatpush1.bf16.xpose.msra.mxu0 %v1083
        %1118 = vmatprep.subr.bf16.mxu0 0
        %1119 = vmatpush1.bf16.xpose.msra.mxu0 %v1084
        %1120 = vmatprep.subr.bf16.mxu0 0
        %1121 = vmatpush1.bf16.xpose.msra.mxu0 %v1085
        %1122 = vmatprep.subr.bf16.mxu0 0
        %1123 = vmatpush1.bf16.xpose.msra.mxu0 %v1086
        %1124 = vmatprep.subr.bf16.mxu0 0
        %1125 = vmatpush1.bf16.xpose.msra.mxu0 %v1087
        %1126 = vmatprep.subr.bf16.mxu0 0
        %1127 = vmatpush1.bf16.xpose.msra.mxu0 %v1088
        %1128 = vmatprep.subr.bf16.mxu0 0
        %1129 = vmatpush1.bf16.xpose.msra.mxu0 %v1089
        %1130 = vmatprep.subr.bf16.mxu0 0
        %1131 = vmatpush1.bf16.xpose.msra.mxu0 %v1090
        %1132 = vmatprep.subr.bf16.mxu0 0
        %1133 = vmatpush1.bf16.xpose.msra.mxu0 %v1091
        %1134 = vmatprep.subr.bf16.mxu0 0
        %1135 = vmatpush1.bf16.xpose.msra.mxu0 %v1092
        %1136 = vmatprep.subr.bf16.mxu0 0
        %1137 = vmatpush1.bf16.xpose.msra.mxu0 %v1093
        %1138 = vmatprep.subr.bf16.mxu0 0
        %1139 = vmatpush1.bf16.xpose.msra.mxu0 %v1094
        %1140 = vmatprep.subr.bf16.mxu0 0
        %1141 = vmatpush1.bf16.xpose.msra.mxu0 %v1095
        %1142 = vmatprep.subr.bf16.mxu0 0
        %1143 = vmatpush1.bf16.xpose.msra.mxu0 %v1096
        %1144 = vmatprep.subr.bf16.mxu0 0
        %1145 = vmatpush1.bf16.xpose.msra.mxu0 %v1097
        %1146 = vmatprep.mubr.bf16.mxu0 0
        %1147 = vmatmul.mubr.bf16.gmra.mrb[0].mxu0 %v986
        %v1148 = vpop.f32.mrb[0].mxu0
        %v1149 = vadd.f32 0.0, %v1148
        %v1150 = vpop.f32.mrb[0].mxu0
        %v1151 = vadd.f32 0.0, %v1150
        %v1152 = vpop.f32.mrb[0].mxu0
        %v1153 = vadd.f32 0.0, %v1152
        %v1154 = vpop.f32.mrb[0].mxu0
        %v1155 = vadd.f32 0.0, %v1154
        %1156 = vmatprep.mubr.bf16.mxu0 0
        %1157 = vmatmul.mubr.bf16.gmra.mrb[0].mxu0 %v987
        %v1158 = vpop.f32.mrb[0].mxu0
        %v1159 = vadd.f32 0.0, %v1158
        %v1160 = vpop.f32.mrb[0].mxu0
        %v1161 = vadd.f32 0.0, %v1160
        %v1162 = vpop.f32.mrb[0].mxu0
        %v1163 = vadd.f32 0.0, %v1162
        %v1164 = vpop.f32.mrb[0].mxu0
        %v1165 = vadd.f32 0.0, %v1164
        %1166 = vmatprep.mubr.bf16.mxu0 0
        %1167 = vmatmul.mubr.bf16.gmra.mrb[0].mxu0 %v988
        %v1168 = vpop.f32.mrb[0].mxu0
        %v1169 = vadd.f32 0.0, %v1168
        %v1170 = vpop.f32.mrb[0].mxu0
        %v1171 = vadd.f32 0.0, %v1170
        %v1172 = vpop.f32.mrb[0].mxu0
        %v1173 = vadd.f32 0.0, %v1172
        %v1174 = vpop.f32.mrb[0].mxu0
        %v1175 = vadd.f32 0.0, %v1174
        %1176 = vmatprep.mubr.bf16.mxu0 0
        %1177 = vmatmul.mubr.bf16.gmra.mrb[0].mxu0 %v989
        %v1178 = vpop.f32.mrb[0].mxu0
        %v1179 = vadd.f32 0.0, %v1178
        %v1180 = vpop.f32.mrb[0].mxu0
        %v1181 = vadd.f32 0.0, %v1180
        %v1182 = vpop.f32.mrb[0].mxu0
        %v1183 = vadd.f32 0.0, %v1182
        %v1184 = vpop.f32.mrb[0].mxu0
        %v1185 = vadd.f32 0.0, %v1184
        %1186 = vmatprep.mubr.bf16.mxu0 0
        %1187 = vmatmul.mubr.bf16.gmra.mrb[0].mxu0 %v990
        %v1188 = vpop.f32.mrb[0].mxu0
        %v1189 = vadd.f32 0.0, %v1188
        %v1190 = vpop.f32.mrb[0].mxu0
        %v1191 = vadd.f32 0.0, %v1190
        %v1192 = vpop.f32.mrb[0].mxu0
        %v1193 = vadd.f32 0.0, %v1192
        %v1194 = vpop.f32.mrb[0].mxu0
        %v1195 = vadd.f32 0.0, %v1194
        %1196 = vmatprep.mubr.bf16.mxu0 0
        %1197 = vmatmul.mubr.bf16.gmra.mrb[0].mxu0 %v991
        %v1198 = vpop.f32.mrb[0].mxu0
        %v1199 = vadd.f32 0.0, %v1198
        %v1200 = vpop.f32.mrb[0].mxu0
        %v1201 = vadd.f32 0.0, %v1200
        %v1202 = vpop.f32.mrb[0].mxu0
        %v1203 = vadd.f32 0.0, %v1202
        %v1204 = vpop.f32.mrb[0].mxu0
        %v1205 = vadd.f32 0.0, %v1204
        %1206 = vmatprep.mubr.bf16.mxu0 0
        %1207 = vmatmul.mubr.bf16.gmra.mrb[0].mxu0 %v992
        %v1208 = vpop.f32.mrb[0].mxu0
        %v1209 = vadd.f32 0.0, %v1208
        %v1210 = vpop.f32.mrb[0].mxu0
        %v1211 = vadd.f32 0.0, %v1210
        %v1212 = vpop.f32.mrb[0].mxu0
        %v1213 = vadd.f32 0.0, %v1212
        %v1214 = vpop.f32.mrb[0].mxu0
        %v1215 = vadd.f32 0.0, %v1214
        %1216 = vmatprep.mubr.bf16.mxu0 0
        %1217 = vmatmul.mubr.bf16.gmra.mrb[0].mxu0 %v993
        %v1218 = vpop.f32.mrb[0].mxu0
        %v1219 = vadd.f32 0.0, %v1218
        %v1220 = vpop.f32.mrb[0].mxu0
        %v1221 = vadd.f32 0.0, %v1220
        %v1222 = vpop.f32.mrb[0].mxu0
        %v1223 = vadd.f32 0.0, %v1222
        %v1224 = vpop.f32.mrb[0].mxu0
        %v1225 = vadd.f32 0.0, %v1224
        %1226 = vmatprep.mubr.bf16.mxu0 0
        %1227 = vmatmul.mubr.bf16.gmra.mrb[0].mxu0 %v994
        %v1228 = vpop.f32.mrb[0].mxu0
        %v1229 = vadd.f32 0.0, %v1228
        %v1230 = vpop.f32.mrb[0].mxu0
        %v1231 = vadd.f32 0.0, %v1230
        %v1232 = vpop.f32.mrb[0].mxu0
        %v1233 = vadd.f32 0.0, %v1232
        %v1234 = vpop.f32.mrb[0].mxu0
        %v1235 = vadd.f32 0.0, %v1234
        %1236 = vmatprep.mubr.bf16.mxu0 0
        %1237 = vmatmul.mubr.bf16.gmra.mrb[0].mxu0 %v995
        %v1238 = vpop.f32.mrb[0].mxu0
        %v1239 = vadd.f32 0.0, %v1238
        %v1240 = vpop.f32.mrb[0].mxu0
        %v1241 = vadd.f32 0.0, %v1240
        %v1242 = vpop.f32.mrb[0].mxu0
        %v1243 = vadd.f32 0.0, %v1242
        %v1244 = vpop.f32.mrb[0].mxu0
        %v1245 = vadd.f32 0.0, %v1244
        %1246 = vmatprep.mubr.bf16.mxu0 0
        %1247 = vmatmul.mubr.bf16.gmra.mrb[0].mxu0 %v996
        %v1248 = vpop.f32.mrb[0].mxu0
        %v1249 = vadd.f32 0.0, %v1248
        %v1250 = vpop.f32.mrb[0].mxu0
        %v1251 = vadd.f32 0.0, %v1250
        %v1252 = vpop.f32.mrb[0].mxu0
        %v1253 = vadd.f32 0.0, %v1252
        %v1254 = vpop.f32.mrb[0].mxu0
        %v1255 = vadd.f32 0.0, %v1254
        %1256 = vmatprep.mubr.bf16.mxu0 0
        %1257 = vmatmul.mubr.bf16.gmra.mrb[0].mxu0 %v997
        %v1258 = vpop.f32.mrb[0].mxu0
        %v1259 = vadd.f32 0.0, %v1258
        %v1260 = vpop.f32.mrb[0].mxu0
        %v1261 = vadd.f32 0.0, %v1260
        %v1262 = vpop.f32.mrb[0].mxu0
        %v1263 = vadd.f32 0.0, %v1262
        %v1264 = vpop.f32.mrb[0].mxu0
        %v1265 = vadd.f32 0.0, %v1264
        %1266 = vmatprep.mubr.bf16.mxu0 0
        %1267 = vmatmul.mubr.bf16.gmra.mrb[0].mxu0 %v998
        %v1268 = vpop.f32.mrb[0].mxu0
        %v1269 = vadd.f32 0.0, %v1268
        %v1270 = vpop.f32.mrb[0].mxu0
        %v1271 = vadd.f32 0.0, %v1270
        %v1272 = vpop.f32.mrb[0].mxu0
        %v1273 = vadd.f32 0.0, %v1272
        %v1274 = vpop.f32.mrb[0].mxu0
        %v1275 = vadd.f32 0.0, %v1274
        %1276 = vmatprep.mubr.bf16.mxu0 0
        %1277 = vmatmul.mubr.bf16.gmra.mrb[0].mxu0 %v999
        %v1278 = vpop.f32.mrb[0].mxu0
        %v1279 = vadd.f32 0.0, %v1278
        %v1280 = vpop.f32.mrb[0].mxu0
        %v1281 = vadd.f32 0.0, %v1280
        %v1282 = vpop.f32.mrb[0].mxu0
        %v1283 = vadd.f32 0.0, %v1282
        %v1284 = vpop.f32.mrb[0].mxu0
        %v1285 = vadd.f32 0.0, %v1284
        %1286 = vmatprep.mubr.bf16.mxu0 0
        %1287 = vmatmul.mubr.bf16.gmra.mrb[0].mxu0 %v1000
        %v1288 = vpop.f32.mrb[0].mxu0
        %v1289 = vadd.f32 0.0, %v1288
        %v1290 = vpop.f32.mrb[0].mxu0
        %v1291 = vadd.f32 0.0, %v1290
        %v1292 = vpop.f32.mrb[0].mxu0
        %v1293 = vadd.f32 0.0, %v1292
        %v1294 = vpop.f32.mrb[0].mxu0
        %v1295 = vadd.f32 0.0, %v1294
        %1296 = vmatprep.mubr.bf16.mxu0 0
        %1297 = vmatmul.mubr.bf16.gmra.mrb[0].mxu0 %v1001
        %v1298 = vpop.f32.mrb[0].mxu0
        %v1299 = vadd.f32 0.0, %v1298
        %v1300 = vpop.f32.mrb[0].mxu0
        %v1301 = vadd.f32 0.0, %v1300
        %v1302 = vpop.f32.mrb[0].mxu0
        %v1303 = vadd.f32 0.0, %v1302
        %v1304 = vpop.f32.mrb[0].mxu0
        %v1305 = vadd.f32 0.0, %v1304
        %1306 = vdwg.mxu0
        %v1307 = vmax.f32 %v1149, %v1151
        %1308 = vmax.xlane.f32.xlu0 %v1307
        %v1309 = vpop.xlane.xlu0 %1308
        %v1310 = vmax.f32 %v1153, %v1155
        %1311 = vmax.xlane.f32.xlu0 %v1310
        %v1312 = vpop.xlane.xlu0 %1311
        %v1313 = vmax.f32 %v1159, %v1161
        %1314 = vmax.xlane.f32.xlu0 %v1313
        %v1315 = vpop.xlane.xlu0 %1314
        %v1316 = vmax.f32 %v1163, %v1165
        %1317 = vmax.xlane.f32.xlu0 %v1316
        %v1318 = vpop.xlane.xlu0 %1317
        %v1319 = vmax.f32 %v1169, %v1171
        %1320 = vmax.xlane.f32.xlu0 %v1319
        %v1321 = vpop.xlane.xlu0 %1320
        %v1322 = vmax.f32 %v1173, %v1175
        %1323 = vmax.xlane.f32.xlu0 %v1322
        %v1324 = vpop.xlane.xlu0 %1323
        %v1325 = vmax.f32 %v1179, %v1181
        %1326 = vmax.xlane.f32.xlu0 %v1325
        %v1327 = vpop.xlane.xlu0 %1326
        %v1328 = vmax.f32 %v1183, %v1185
        %1329 = vmax.xlane.f32.xlu0 %v1328
        %v1330 = vpop.xlane.xlu0 %1329
        %v1331 = vmax.f32 %v1189, %v1191
        %1332 = vmax.xlane.f32.xlu0 %v1331
        %v1333 = vpop.xlane.xlu0 %1332
        %v1334 = vmax.f32 %v1193, %v1195
        %1335 = vmax.xlane.f32.xlu0 %v1334
        %v1336 = vpop.xlane.xlu0 %1335
        %v1337 = vmax.f32 %v1199, %v1201
        %1338 = vmax.xlane.f32.xlu0 %v1337
        %v1339 = vpop.xlane.xlu0 %1338
        %v1340 = vmax.f32 %v1203, %v1205
        %1341 = vmax.xlane.f32.xlu0 %v1340
        %v1342 = vpop.xlane.xlu0 %1341
        %v1343 = vmax.f32 %v1209, %v1211
        %1344 = vmax.xlane.f32.xlu0 %v1343
        %v1345 = vpop.xlane.xlu0 %1344
        %v1346 = vmax.f32 %v1213, %v1215
        %1347 = vmax.xlane.f32.xlu0 %v1346
        %v1348 = vpop.xlane.xlu0 %1347
        %v1349 = vmax.f32 %v1219, %v1221
        %1350 = vmax.xlane.f32.xlu0 %v1349
        %v1351 = vpop.xlane.xlu0 %1350
        %v1352 = vmax.f32 %v1223, %v1225
        %1353 = vmax.xlane.f32.xlu0 %v1352
        %v1354 = vpop.xlane.xlu0 %1353
        %v1355 = vmax.f32 %v1229, %v1231
        %1356 = vmax.xlane.f32.xlu0 %v1355
        %v1357 = vpop.xlane.xlu0 %1356
        %v1358 = vmax.f32 %v1233, %v1235
        %1359 = vmax.xlane.f32.xlu0 %v1358
        %v1360 = vpop.xlane.xlu0 %1359
        %v1361 = vmax.f32 %v1239, %v1241
        %1362 = vmax.xlane.f32.xlu0 %v1361
        %v1363 = vpop.xlane.xlu0 %1362
        %v1364 = vmax.f32 %v1243, %v1245
        %1365 = vmax.xlane.f32.xlu0 %v1364
        %v1366 = vpop.xlane.xlu0 %1365
        %v1367 = vmax.f32 %v1249, %v1251
        %1368 = vmax.xlane.f32.xlu0 %v1367
        %v1369 = vpop.xlane.xlu0 %1368
        %v1370 = vmax.f32 %v1253, %v1255
        %1371 = vmax.xlane.f32.xlu0 %v1370
        %v1372 = vpop.xlane.xlu0 %1371
        %v1373 = vmax.f32 %v1259, %v1261
        %1374 = vmax.xlane.f32.xlu0 %v1373
        %v1375 = vpop.xlane.xlu0 %1374
        %v1376 = vmax.f32 %v1263, %v1265
        %1377 = vmax.xlane.f32.xlu0 %v1376
        %v1378 = vpop.xlane.xlu0 %1377
        %v1379 = vmax.f32 %v1269, %v1271
        %1380 = vmax.xlane.f32.xlu0 %v1379
        %v1381 = vpop.xlane.xlu0 %1380
        %v1382 = vmax.f32 %v1273, %v1275
        %1383 = vmax.xlane.f32.xlu0 %v1382
        %v1384 = vpop.xlane.xlu0 %1383
        %v1385 = vmax.f32 %v1279, %v1281
        %1386 = vmax.xlane.f32.xlu0 %v1385
        %v1387 = vpop.xlane.xlu0 %1386
        %v1388 = vmax.f32 %v1283, %v1285
        %1389 = vmax.xlane.f32.xlu0 %v1388
        %v1390 = vpop.xlane.xlu0 %1389
        %v1391 = vmax.f32 %v1289, %v1291
        %1392 = vmax.xlane.f32.xlu0 %v1391
        %v1393 = vpop.xlane.xlu0 %1392
        %v1394 = vmax.f32 %v1293, %v1295
        %1395 = vmax.xlane.f32.xlu0 %v1394
        %v1396 = vpop.xlane.xlu0 %1395
        %v1397 = vmax.f32 %v1299, %v1301
        %1398 = vmax.xlane.f32.xlu0 %v1397
        %v1399 = vpop.xlane.xlu0 %1398
        %v1400 = vmax.f32 %v1303, %v1305
        %1401 = vmax.xlane.f32.xlu0 %v1400
        %v1402 = vpop.xlane.xlu0 %1401
        %v1403 = vsub.f32 %v1149, %v1309
        %v1404 = vsub.f32 %v1151, %v1309
        %v1405 = vsub.f32 %v1153, %v1312
        %v1406 = vsub.f32 %v1155, %v1312
        %v1407 = vsub.f32 %v1159, %v1315
        %v1408 = vsub.f32 %v1161, %v1315
        %v1409 = vsub.f32 %v1163, %v1318
        %v1410 = vsub.f32 %v1165, %v1318
        %v1411 = vsub.f32 %v1169, %v1321
        %v1412 = vsub.f32 %v1171, %v1321
        %v1413 = vsub.f32 %v1173, %v1324
        %v1414 = vsub.f32 %v1175, %v1324
        %v1415 = vsub.f32 %v1179, %v1327
        %v1416 = vsub.f32 %v1181, %v1327
        %v1417 = vsub.f32 %v1183, %v1330
        %v1418 = vsub.f32 %v1185, %v1330
        %v1419 = vsub.f32 %v1189, %v1333
        %v1420 = vsub.f32 %v1191, %v1333
        %v1421 = vsub.f32 %v1193, %v1336
        %v1422 = vsub.f32 %v1195, %v1336
        %v1423 = vsub.f32 %v1199, %v1339
        %v1424 = vsub.f32 %v1201, %v1339
        %v1425 = vsub.f32 %v1203, %v1342
        %v1426 = vsub.f32 %v1205, %v1342
        %v1427 = vsub.f32 %v1209, %v1345
        %v1428 = vsub.f32 %v1211, %v1345
        %v1429 = vsub.f32 %v1213, %v1348
        %v1430 = vsub.f32 %v1215, %v1348
        %v1431 = vsub.f32 %v1219, %v1351
        %v1432 = vsub.f32 %v1221, %v1351
        %v1433 = vsub.f32 %v1223, %v1354
        %v1434 = vsub.f32 %v1225, %v1354
        %v1435 = vsub.f32 %v1229, %v1357
        %v1436 = vsub.f32 %v1231, %v1357
        %v1437 = vsub.f32 %v1233, %v1360
        %v1438 = vsub.f32 %v1235, %v1360
        %v1439 = vsub.f32 %v1239, %v1363
        %v1440 = vsub.f32 %v1241, %v1363
        %v1441 = vsub.f32 %v1243, %v1366
        %v1442 = vsub.f32 %v1245, %v1366
        %v1443 = vsub.f32 %v1249, %v1369
        %v1444 = vsub.f32 %v1251, %v1369
        %v1445 = vsub.f32 %v1253, %v1372
        %v1446 = vsub.f32 %v1255, %v1372
        %v1447 = vsub.f32 %v1259, %v1375
        %v1448 = vsub.f32 %v1261, %v1375
        %v1449 = vsub.f32 %v1263, %v1378
        %v1450 = vsub.f32 %v1265, %v1378
        %v1451 = vsub.f32 %v1269, %v1381
        %v1452 = vsub.f32 %v1271, %v1381
        %v1453 = vsub.f32 %v1273, %v1384
        %v1454 = vsub.f32 %v1275, %v1384
        %v1455 = vsub.f32 %v1279, %v1387
        %v1456 = vsub.f32 %v1281, %v1387
        %v1457 = vsub.f32 %v1283, %v1390
        %v1458 = vsub.f32 %v1285, %v1390
        %v1459 = vsub.f32 %v1289, %v1393
        %v1460 = vsub.f32 %v1291, %v1393
        %v1461 = vsub.f32 %v1293, %v1396
        %v1462 = vsub.f32 %v1295, %v1396
        %v1463 = vsub.f32 %v1299, %v1399
        %v1464 = vsub.f32 %v1301, %v1399
        %v1465 = vsub.f32 %v1303, %v1402
        %v1466 = vsub.f32 %v1305, %v1402
        %v1467 = vmul.f32 %v1403, 1.442695
        %v1468 = vpow.pop %v1467
        %v1469 = vmul.f32 %v1404, 1.442695
        %v1470 = vpow.pop %v1469
        %v1471 = vmul.f32 %v1405, 1.442695
        %v1472 = vpow.pop %v1471
        %v1473 = vmul.f32 %v1406, 1.442695
        %v1474 = vpow.pop %v1473
        %v1475 = vmul.f32 %v1407, 1.442695
        %v1476 = vpow.pop %v1475
        %v1477 = vmul.f32 %v1408, 1.442695
        %v1478 = vpow.pop %v1477
        %v1479 = vmul.f32 %v1409, 1.442695
        %v1480 = vpow.pop %v1479
        %v1481 = vmul.f32 %v1410, 1.442695
        %v1482 = vpow.pop %v1481
        %v1483 = vmul.f32 %v1411, 1.442695
        %v1484 = vpow.pop %v1483
        %v1485 = vmul.f32 %v1412, 1.442695
        %v1486 = vpow.pop %v1485
        %v1487 = vmul.f32 %v1413, 1.442695
        %v1488 = vpow.pop %v1487
        %v1489 = vmul.f32 %v1414, 1.442695
        %v1490 = vpow.pop %v1489
        %v1491 = vmul.f32 %v1415, 1.442695
        %v1492 = vpow.pop %v1491
        %v1493 = vmul.f32 %v1416, 1.442695
        %v1494 = vpow.pop %v1493
        %v1495 = vmul.f32 %v1417, 1.442695
        %v1496 = vpow.pop %v1495
        %v1497 = vmul.f32 %v1418, 1.442695
        %v1498 = vpow.pop %v1497
        %v1499 = vmul.f32 %v1419, 1.442695
        %v1500 = vpow.pop %v1499
        %v1501 = vmul.f32 %v1420, 1.442695
        %v1502 = vpow.pop %v1501
        %v1503 = vmul.f32 %v1421, 1.442695
        %v1504 = vpow.pop %v1503
        %v1505 = vmul.f32 %v1422, 1.442695
        %v1506 = vpow.pop %v1505
        %v1507 = vmul.f32 %v1423, 1.442695
        %v1508 = vpow.pop %v1507
        %v1509 = vmul.f32 %v1424, 1.442695
        %v1510 = vpow.pop %v1509
        %v1511 = vmul.f32 %v1425, 1.442695
        %v1512 = vpow.pop %v1511
        %v1513 = vmul.f32 %v1426, 1.442695
        %v1514 = vpow.pop %v1513
        %v1515 = vmul.f32 %v1427, 1.442695
        %v1516 = vpow.pop %v1515
        %v1517 = vmul.f32 %v1428, 1.442695
        %v1518 = vpow.pop %v1517
        %v1519 = vmul.f32 %v1429, 1.442695
        %v1520 = vpow.pop %v1519
        %v1521 = vmul.f32 %v1430, 1.442695
        %v1522 = vpow.pop %v1521
        %v1523 = vmul.f32 %v1431, 1.442695
        %v1524 = vpow.pop %v1523
        %v1525 = vmul.f32 %v1432, 1.442695
        %v1526 = vpow.pop %v1525
        %v1527 = vmul.f32 %v1433, 1.442695
        %v1528 = vpow.pop %v1527
        %v1529 = vmul.f32 %v1434, 1.442695
        %v1530 = vpow.pop %v1529
        %v1531 = vmul.f32 %v1435, 1.442695
        %v1532 = vpow.pop %v1531
        %v1533 = vmul.f32 %v1436, 1.442695
        %v1534 = vpow.pop %v1533
        %v1535 = vmul.f32 %v1437, 1.442695
        %v1536 = vpow.pop %v1535
        %v1537 = vmul.f32 %v1438, 1.442695
        %v1538 = vpow.pop %v1537
        %v1539 = vmul.f32 %v1439, 1.442695
        %v1540 = vpow.pop %v1539
        %v1541 = vmul.f32 %v1440, 1.442695
        %v1542 = vpow.pop %v1541
        %v1543 = vmul.f32 %v1441, 1.442695
        %v1544 = vpow.pop %v1543
        %v1545 = vmul.f32 %v1442, 1.442695
        %v1546 = vpow.pop %v1545
        %v1547 = vmul.f32 %v1443, 1.442695
        %v1548 = vpow.pop %v1547
        %v1549 = vmul.f32 %v1444, 1.442695
        %v1550 = vpow.pop %v1549
        %v1551 = vmul.f32 %v1445, 1.442695
        %v1552 = vpow.pop %v1551
        %v1553 = vmul.f32 %v1446, 1.442695
        %v1554 = vpow.pop %v1553
        %v1555 = vmul.f32 %v1447, 1.442695
        %v1556 = vpow.pop %v1555
        %v1557 = vmul.f32 %v1448, 1.442695
        %v1558 = vpow.pop %v1557
        %v1559 = vmul.f32 %v1449, 1.442695
        %v1560 = vpow.pop %v1559
        %v1561 = vmul.f32 %v1450, 1.442695
        %v1562 = vpow.pop %v1561
        %v1563 = vmul.f32 %v1451, 1.442695
        %v1564 = vpow.pop %v1563
        %v1565 = vmul.f32 %v1452, 1.442695
        %v1566 = vpow.pop %v1565
        %v1567 = vmul.f32 %v1453, 1.442695
        %v1568 = vpow.pop %v1567
        %v1569 = vmul.f32 %v1454, 1.442695
        %v1570 = vpow.pop %v1569
        %v1571 = vmul.f32 %v1455, 1.442695
        %v1572 = vpow.pop %v1571
        %v1573 = vmul.f32 %v1456, 1.442695
        %v1574 = vpow.pop %v1573
        %v1575 = vmul.f32 %v1457, 1.442695
        %v1576 = vpow.pop %v1575
        %v1577 = vmul.f32 %v1458, 1.442695
        %v1578 = vpow.pop %v1577
        %v1579 = vmul.f32 %v1459, 1.442695
        %v1580 = vpow.pop %v1579
        %v1581 = vmul.f32 %v1460, 1.442695
        %v1582 = vpow.pop %v1581
        %v1583 = vmul.f32 %v1461, 1.442695
        %v1584 = vpow.pop %v1583
        %v1585 = vmul.f32 %v1462, 1.442695
        %v1586 = vpow.pop %v1585
        %v1587 = vmul.f32 %v1463, 1.442695
        %v1588 = vpow.pop %v1587
        %v1589 = vmul.f32 %v1464, 1.442695
        %v1590 = vpow.pop %v1589
        %v1591 = vmul.f32 %v1465, 1.442695
        %v1592 = vpow.pop %v1591
        %v1593 = vmul.f32 %v1466, 1.442695
        %v1594 = vpow.pop %v1593
        %v1595 = vadd.f32 %v1468, %v1470
        %1596 = vadd.xlane.f32.xlu0 %v1595
        %v1597 = vpop.xlane.xlu0 %1596
        %v1598 = vadd.f32 %v1472, %v1474
        %1599 = vadd.xlane.f32.xlu0 %v1598
        %v1600 = vpop.xlane.xlu0 %1599
        %v1601 = vadd.f32 %v1476, %v1478
        %1602 = vadd.xlane.f32.xlu0 %v1601
        %v1603 = vpop.xlane.xlu0 %1602
        %v1604 = vadd.f32 %v1480, %v1482
        %1605 = vadd.xlane.f32.xlu0 %v1604
        %v1606 = vpop.xlane.xlu0 %1605
        %v1607 = vadd.f32 %v1484, %v1486
        %1608 = vadd.xlane.f32.xlu0 %v1607
        %v1609 = vpop.xlane.xlu0 %1608
        %v1610 = vadd.f32 %v1488, %v1490
        %1611 = vadd.xlane.f32.xlu0 %v1610
        %v1612 = vpop.xlane.xlu0 %1611
        %v1613 = vadd.f32 %v1492, %v1494
        %1614 = vadd.xlane.f32.xlu0 %v1613
        %v1615 = vpop.xlane.xlu0 %1614
        %v1616 = vadd.f32 %v1496, %v1498
        %1617 = vadd.xlane.f32.xlu0 %v1616
        %v1618 = vpop.xlane.xlu0 %1617
        %v1619 = vadd.f32 %v1500, %v1502
        %1620 = vadd.xlane.f32.xlu0 %v1619
        %v1621 = vpop.xlane.xlu0 %1620
        %v1622 = vadd.f32 %v1504, %v1506
        %1623 = vadd.xlane.f32.xlu0 %v1622
        %v1624 = vpop.xlane.xlu0 %1623
        %v1625 = vadd.f32 %v1508, %v1510
        %1626 = vadd.xlane.f32.xlu0 %v1625
        %v1627 = vpop.xlane.xlu0 %1626
        %v1628 = vadd.f32 %v1512, %v1514
        %1629 = vadd.xlane.f32.xlu0 %v1628
        %v1630 = vpop.xlane.xlu0 %1629
        %v1631 = vadd.f32 %v1516, %v1518
        %1632 = vadd.xlane.f32.xlu0 %v1631
        %v1633 = vpop.xlane.xlu0 %1632
        %v1634 = vadd.f32 %v1520, %v1522
        %1635 = vadd.xlane.f32.xlu0 %v1634
        %v1636 = vpop.xlane.xlu0 %1635
        %v1637 = vadd.f32 %v1524, %v1526
        %1638 = vadd.xlane.f32.xlu0 %v1637
        %v1639 = vpop.xlane.xlu0 %1638
        %v1640 = vadd.f32 %v1528, %v1530
        %1641 = vadd.xlane.f32.xlu0 %v1640
        %v1642 = vpop.xlane.xlu0 %1641
        %v1643 = vadd.f32 %v1532, %v1534
        %1644 = vadd.xlane.f32.xlu0 %v1643
        %v1645 = vpop.xlane.xlu0 %1644
        %v1646 = vadd.f32 %v1536, %v1538
        %1647 = vadd.xlane.f32.xlu0 %v1646
        %v1648 = vpop.xlane.xlu0 %1647
        %v1649 = vadd.f32 %v1540, %v1542
        %1650 = vadd.xlane.f32.xlu0 %v1649
        %v1651 = vpop.xlane.xlu0 %1650
        %v1652 = vadd.f32 %v1544, %v1546
        %1653 = vadd.xlane.f32.xlu0 %v1652
        %v1654 = vpop.xlane.xlu0 %1653
        %v1655 = vadd.f32 %v1548, %v1550
        %1656 = vadd.xlane.f32.xlu0 %v1655
        %v1657 = vpop.xlane.xlu0 %1656
        %v1658 = vadd.f32 %v1552, %v1554
        %1659 = vadd.xlane.f32.xlu0 %v1658
        %v1660 = vpop.xlane.xlu0 %1659
        %v1661 = vadd.f32 %v1556, %v1558
        %1662 = vadd.xlane.f32.xlu0 %v1661
        %v1663 = vpop.xlane.xlu0 %1662
        %v1664 = vadd.f32 %v1560, %v1562
        %1665 = vadd.xlane.f32.xlu0 %v1664
        %v1666 = vpop.xlane.xlu0 %1665
        %v1667 = vadd.f32 %v1564, %v1566
        %1668 = vadd.xlane.f32.xlu0 %v1667
        %v1669 = vpop.xlane.xlu0 %1668
        %v1670 = vadd.f32 %v1568, %v1570
        %1671 = vadd.xlane.f32.xlu0 %v1670
        %v1672 = vpop.xlane.xlu0 %1671
        %v1673 = vadd.f32 %v1572, %v1574
        %1674 = vadd.xlane.f32.xlu0 %v1673
        %v1675 = vpop.xlane.xlu0 %1674
        %v1676 = vadd.f32 %v1576, %v1578
        %1677 = vadd.xlane.f32.xlu0 %v1676
        %v1678 = vpop.xlane.xlu0 %1677
        %v1679 = vadd.f32 %v1580, %v1582
        %1680 = vadd.xlane.f32.xlu0 %v1679
        %v1681 = vpop.xlane.xlu0 %1680
        %v1682 = vadd.f32 %v1584, %v1586
        %1683 = vadd.xlane.f32.xlu0 %v1682
        %v1684 = vpop.xlane.xlu0 %1683
        %v1685 = vadd.f32 %v1588, %v1590
        %1686 = vadd.xlane.f32.xlu0 %v1685
        %v1687 = vpop.xlane.xlu0 %1686
        %v1688 = vadd.f32 %v1592, %v1594
        %1689 = vadd.xlane.f32.xlu0 %v1688
        %v1690 = vpop.xlane.xlu0 %1689
        %v1691 = vpack.c.bf16 %v1472, %v1468
        %v1692 = vpack.c.bf16 %v1474, %v1470
        %v1693 = vpack.c.bf16 %v1480, %v1476
        %v1694 = vpack.c.bf16 %v1482, %v1478
        %v1695 = vpack.c.bf16 %v1488, %v1484
        %v1696 = vpack.c.bf16 %v1490, %v1486
        %v1697 = vpack.c.bf16 %v1496, %v1492
        %v1698 = vpack.c.bf16 %v1498, %v1494
        %v1699 = vpack.c.bf16 %v1504, %v1500
        %v1700 = vpack.c.bf16 %v1506, %v1502
        %v1701 = vpack.c.bf16 %v1512, %v1508
        %v1702 = vpack.c.bf16 %v1514, %v1510
        %v1703 = vpack.c.bf16 %v1520, %v1516
        %v1704 = vpack.c.bf16 %v1522, %v1518
        %v1705 = vpack.c.bf16 %v1528, %v1524
        %v1706 = vpack.c.bf16 %v1530, %v1526
        %v1707 = vpack.c.bf16 %v1536, %v1532
        %v1708 = vpack.c.bf16 %v1538, %v1534
        %v1709 = vpack.c.bf16 %v1544, %v1540
        %v1710 = vpack.c.bf16 %v1546, %v1542
        %v1711 = vpack.c.bf16 %v1552, %v1548
        %v1712 = vpack.c.bf16 %v1554, %v1550
        %v1713 = vpack.c.bf16 %v1560, %v1556
        %v1714 = vpack.c.bf16 %v1562, %v1558
        %v1715 = vpack.c.bf16 %v1568, %v1564
        %v1716 = vpack.c.bf16 %v1570, %v1566
        %v1717 = vpack.c.bf16 %v1576, %v1572
        %v1718 = vpack.c.bf16 %v1578, %v1574
        %v1719 = vpack.c.bf16 %v1584, %v1580
        %v1720 = vpack.c.bf16 %v1586, %v1582
        %v1721 = vpack.c.bf16 %v1592, %v1588
        %v1722 = vpack.c.bf16 %v1594, %v1590
        %v1723 = vld [vmem:[%s788] sm:$0xf]
        %v1724 = vld [vmem:[%s788 + $0x4] sm:$0xf]
        %v1725 = vld [vmem:[%s788 + $0x8] sm:$0xf]
        %v1726 = vld [vmem:[%s788 + $0xc] sm:$0xf]
        %v1727 = vld [vmem:[%s788 + $0x10] sm:$0xf]
        %v1728 = vld [vmem:[%s788 + $0x14] sm:$0xf]
        %v1729 = vld [vmem:[%s788 + $0x18] sm:$0xf]
        %v1730 = vld [vmem:[%s788 + $0x1c] sm:$0xf]
        %v1731 = vld [vmem:[%s788 + $0x20] sm:$0xf]
        %v1732 = vld [vmem:[%s788 + $0x24] sm:$0xf]
        %v1733 = vld [vmem:[%s788 + $0x28] sm:$0xf]
        %v1734 = vld [vmem:[%s788 + $0x2c] sm:$0xf]
        %v1735 = vld [vmem:[%s788 + $0x30] sm:$0xf]
        %v1736 = vld [vmem:[%s788 + $0x34] sm:$0xf]
        %v1737 = vld [vmem:[%s788 + $0x38] sm:$0xf]
        %v1738 = vld [vmem:[%s788 + $0x3c] sm:$0xf]
        %v1739 = vld [vmem:[%s788 + $0x40] sm:$0xf]
        %v1740 = vld [vmem:[%s788 + $0x44] sm:$0xf]
        %v1741 = vld [vmem:[%s788 + $0x48] sm:$0xf]
        %v1742 = vld [vmem:[%s788 + $0x4c] sm:$0xf]
        %v1743 = vld [vmem:[%s788 + $0x50] sm:$0xf]
        %v1744 = vld [vmem:[%s788 + $0x54] sm:$0xf]
        %v1745 = vld [vmem:[%s788 + $0x58] sm:$0xf]
        %v1746 = vld [vmem:[%s788 + $0x5c] sm:$0xf]
        %v1747 = vld [vmem:[%s788 + $0x60] sm:$0xf]
        %v1748 = vld [vmem:[%s788 + $0x64] sm:$0xf]
        %v1749 = vld [vmem:[%s788 + $0x68] sm:$0xf]
        %v1750 = vld [vmem:[%s788 + $0x6c] sm:$0xf]
        %v1751 = vld [vmem:[%s788 + $0x70] sm:$0xf]
        %v1752 = vld [vmem:[%s788 + $0x74] sm:$0xf]
        %v1753 = vld [vmem:[%s788 + $0x78] sm:$0xf]
        %v1754 = vld [vmem:[%s788 + $0x7c] sm:$0xf]
        %v1787 = vunpack.c.l.b16 %v1723
        %v1788 = vunpack.c.l.b16 %v1724
        %v1789 = vunpack.c.l.b16 %v1725
        %v1790 = vunpack.c.l.b16 %v1726
        %v1791 = vunpack.c.l.b16 %v1727
        %v1792 = vunpack.c.l.b16 %v1728
        %v1793 = vunpack.c.l.b16 %v1729
        %v1794 = vunpack.c.l.b16 %v1730
        %v1795 = vunpack.c.l.b16 %v1731
        %v1796 = vunpack.c.l.b16 %v1732
        %v1797 = vunpack.c.l.b16 %v1733
        %v1798 = vunpack.c.l.b16 %v1734
        %v1799 = vunpack.c.l.b16 %v1735
        %v1800 = vunpack.c.l.b16 %v1736
        %v1801 = vunpack.c.l.b16 %v1737
        %v1802 = vunpack.c.l.b16 %v1738
        %v1803 = vunpack.c.l.b16 %v1739
        %v1804 = vunpack.c.l.b16 %v1740
        %v1805 = vunpack.c.l.b16 %v1741
        %v1806 = vunpack.c.l.b16 %v1742
        %v1807 = vunpack.c.l.b16 %v1743
        %v1808 = vunpack.c.l.b16 %v1744
        %v1809 = vunpack.c.l.b16 %v1745
        %v1810 = vunpack.c.l.b16 %v1746
        %v1811 = vunpack.c.l.b16 %v1747
        %v1812 = vunpack.c.l.b16 %v1748
        %v1813 = vunpack.c.l.b16 %v1749
        %v1814 = vunpack.c.l.b16 %v1750
        %v1815 = vunpack.c.l.b16 %v1751
        %v1816 = vunpack.c.l.b16 %v1752
        %v1817 = vunpack.c.l.b16 %v1753
        %v1818 = vunpack.c.l.b16 %v1754
        %v1819 = vpack.c.b16 %v1788, %v1787
        %v1820 = vpack.c.b16 %v1790, %v1789
        %v1821 = vpack.c.b16 %v1792, %v1791
        %v1822 = vpack.c.b16 %v1794, %v1793
        %v1823 = vpack.c.b16 %v1796, %v1795
        %v1824 = vpack.c.b16 %v1798, %v1797
        %v1825 = vpack.c.b16 %v1800, %v1799
        %v1826 = vpack.c.b16 %v1802, %v1801
        %v1827 = vpack.c.b16 %v1804, %v1803
        %v1828 = vpack.c.b16 %v1806, %v1805
        %v1829 = vpack.c.b16 %v1808, %v1807
        %v1830 = vpack.c.b16 %v1810, %v1809
        %v1831 = vpack.c.b16 %v1812, %v1811
        %v1832 = vpack.c.b16 %v1814, %v1813
        %v1833 = vpack.c.b16 %v1816, %v1815
        %v1834 = vpack.c.b16 %v1818, %v1817
        %1851 = vmatprep.subr.bf16.mxu0 0
        %1852 = vmatpush1.bf16.msra.mxu0 %v1819
        %1853 = vmatprep.subr.bf16.mxu0 0
        %1854 = vmatpush1.bf16.msra.mxu0 %v1820
        %1855 = vmatprep.subr.bf16.mxu0 0
        %1856 = vmatpush1.bf16.msra.mxu0 %v1821
        %1857 = vmatprep.subr.bf16.mxu0 0
        %1858 = vmatpush1.bf16.msra.mxu0 %v1822
        %1859 = vmatprep.subr.bf16.mxu0 0
        %1860 = vmatpush1.bf16.msra.mxu0 %v1823
        %1861 = vmatprep.subr.bf16.mxu0 0
        %1862 = vmatpush1.bf16.msra.mxu0 %v1824
        %1863 = vmatprep.subr.bf16.mxu0 0
        %1864 = vmatpush1.bf16.msra.mxu0 %v1825
        %1865 = vmatprep.subr.bf16.mxu0 0
        %1866 = vmatpush1.bf16.msra.mxu0 %v1826
        %1867 = vmatprep.subr.bf16.mxu0 0
        %1868 = vmatpush1.bf16.msra.mxu0 %v1827
        %1869 = vmatprep.subr.bf16.mxu0 0
        %1870 = vmatpush1.bf16.msra.mxu0 %v1828
        %1871 = vmatprep.subr.bf16.mxu0 0
        %1872 = vmatpush1.bf16.msra.mxu0 %v1829
        %1873 = vmatprep.subr.bf16.mxu0 0
        %1874 = vmatpush1.bf16.msra.mxu0 %v1830
        %1875 = vmatprep.subr.bf16.mxu0 0
        %1876 = vmatpush1.bf16.msra.mxu0 %v1831
        %1877 = vmatprep.subr.bf16.mxu0 0
        %1878 = vmatpush1.bf16.msra.mxu0 %v1832
        %1879 = vmatprep.subr.bf16.mxu0 0
        %1880 = vmatpush1.bf16.msra.mxu0 %v1833
        %1881 = vmatprep.subr.bf16.mxu0 0
        %1882 = vmatpush1.bf16.msra.mxu0 %v1834
        %1883 = vmatprep.mubr.bf16.mxu0 %v1692
        %1884 = vmatmul.mubr.bf16.gmra.mrb[0].mxu0 %v1691
        %v1885 = vpop.f32.mrb[0].mxu0
        %v1886 = vadd.f32 0.0, %v1885
        %v1887 = vpop.f32.mrb[0].mxu0
        %v1888 = vpop.f32.mrb[0].mxu0
        %v1889 = vadd.f32 0.0, %v1888
        %v1890 = vpop.f32.mrb[0].mxu0
        %1891 = vmatprep.mubr.bf16.mxu0 %v1694
        %1892 = vmatmul.mubr.bf16.gmra.mrb[0].mxu0 %v1693
        %v1893 = vpop.f32.mrb[0].mxu0
        %v1894 = vadd.f32 0.0, %v1893
        %v1895 = vpop.f32.mrb[0].mxu0
        %v1896 = vpop.f32.mrb[0].mxu0
        %v1897 = vadd.f32 0.0, %v1896
        %v1898 = vpop.f32.mrb[0].mxu0
        %1899 = vmatprep.mubr.bf16.mxu0 %v1696
        %1900 = vmatmul.mubr.bf16.gmra.mrb[0].mxu0 %v1695
        %v1901 = vpop.f32.mrb[0].mxu0
        %v1902 = vadd.f32 0.0, %v1901
        %v1903 = vpop.f32.mrb[0].mxu0
        %v1904 = vpop.f32.mrb[0].mxu0
        %v1905 = vadd.f32 0.0, %v1904
        %v1906 = vpop.f32.mrb[0].mxu0
        %1907 = vmatprep.mubr.bf16.mxu0 %v1698
        %1908 = vmatmul.mubr.bf16.gmra.mrb[0].mxu0 %v1697
        %v1909 = vpop.f32.mrb[0].mxu0
        %v1910 = vadd.f32 0.0, %v1909
        %v1911 = vpop.f32.mrb[0].mxu0
        %v1912 = vpop.f32.mrb[0].mxu0
        %v1913 = vadd.f32 0.0, %v1912
        %v1914 = vpop.f32.mrb[0].mxu0
        %1915 = vmatprep.mubr.bf16.mxu0 %v1700
        %1916 = vmatmul.mubr.bf16.gmra.mrb[0].mxu0 %v1699
        %v1917 = vpop.f32.mrb[0].mxu0
        %v1918 = vadd.f32 0.0, %v1917
        %v1919 = vpop.f32.mrb[0].mxu0
        %v1920 = vpop.f32.mrb[0].mxu0
        %v1921 = vadd.f32 0.0, %v1920
        %v1922 = vpop.f32.mrb[0].mxu0
        %1923 = vmatprep.mubr.bf16.mxu0 %v1702
        %1924 = vmatmul.mubr.bf16.gmra.mrb[0].mxu0 %v1701
        %v1925 = vpop.f32.mrb[0].mxu0
        %v1926 = vadd.f32 0.0, %v1925
        %v1927 = vpop.f32.mrb[0].mxu0
        %v1928 = vpop.f32.mrb[0].mxu0
        %v1929 = vadd.f32 0.0, %v1928
        %v1930 = vpop.f32.mrb[0].mxu0
        %1931 = vmatprep.mubr.bf16.mxu0 %v1704
        %1932 = vmatmul.mubr.bf16.gmra.mrb[0].mxu0 %v1703
        %v1933 = vpop.f32.mrb[0].mxu0
        %v1934 = vadd.f32 0.0, %v1933
        %v1935 = vpop.f32.mrb[0].mxu0
        %v1936 = vpop.f32.mrb[0].mxu0
        %v1937 = vadd.f32 0.0, %v1936
        %v1938 = vpop.f32.mrb[0].mxu0
        %1939 = vmatprep.mubr.bf16.mxu0 %v1706
        %1940 = vmatmul.mubr.bf16.gmra.mrb[0].mxu0 %v1705
        %v1941 = vpop.f32.mrb[0].mxu0
        %v1942 = vadd.f32 0.0, %v1941
        %v1943 = vpop.f32.mrb[0].mxu0
        %v1944 = vpop.f32.mrb[0].mxu0
        %v1945 = vadd.f32 0.0, %v1944
        %v1946 = vpop.f32.mrb[0].mxu0
        %1947 = vmatprep.mubr.bf16.mxu0 %v1708
        %1948 = vmatmul.mubr.bf16.gmra.mrb[0].mxu0 %v1707
        %v1949 = vpop.f32.mrb[0].mxu0
        %v1950 = vadd.f32 0.0, %v1949
        %v1951 = vpop.f32.mrb[0].mxu0
        %v1952 = vpop.f32.mrb[0].mxu0
        %v1953 = vadd.f32 0.0, %v1952
        %v1954 = vpop.f32.mrb[0].mxu0
        %1955 = vmatprep.mubr.bf16.mxu0 %v1710
        %1956 = vmatmul.mubr.bf16.gmra.mrb[0].mxu0 %v1709
        %v1957 = vpop.f32.mrb[0].mxu0
        %v1958 = vadd.f32 0.0, %v1957
        %v1959 = vpop.f32.mrb[0].mxu0
        %v1960 = vpop.f32.mrb[0].mxu0
        %v1961 = vadd.f32 0.0, %v1960
        %v1962 = vpop.f32.mrb[0].mxu0
        %1963 = vmatprep.mubr.bf16.mxu0 %v1712
        %1964 = vmatmul.mubr.bf16.gmra.mrb[0].mxu0 %v1711
        %v1965 = vpop.f32.mrb[0].mxu0
        %v1966 = vadd.f32 0.0, %v1965
        %v1967 = vpop.f32.mrb[0].mxu0
        %v1968 = vpop.f32.mrb[0].mxu0
        %v1969 = vadd.f32 0.0, %v1968
        %v1970 = vpop.f32.mrb[0].mxu0
        %1971 = vmatprep.mubr.bf16.mxu0 %v1714
        %1972 = vmatmul.mubr.bf16.gmra.mrb[0].mxu0 %v1713
        %v1973 = vpop.f32.mrb[0].mxu0
        %v1974 = vadd.f32 0.0, %v1973
        %v1975 = vpop.f32.mrb[0].mxu0
        %v1976 = vpop.f32.mrb[0].mxu0
        %v1977 = vadd.f32 0.0, %v1976
        %v1978 = vpop.f32.mrb[0].mxu0
        %1979 = vmatprep.mubr.bf16.mxu0 %v1716
        %1980 = vmatmul.mubr.bf16.gmra.mrb[0].mxu0 %v1715
        %v1981 = vpop.f32.mrb[0].mxu0
        %v1982 = vadd.f32 0.0, %v1981
        %v1983 = vpop.f32.mrb[0].mxu0
        %v1984 = vpop.f32.mrb[0].mxu0
        %v1985 = vadd.f32 0.0, %v1984
        %v1986 = vpop.f32.mrb[0].mxu0
        %1987 = vmatprep.mubr.bf16.mxu0 %v1718
        %1988 = vmatmul.mubr.bf16.gmra.mrb[0].mxu0 %v1717
        %v1989 = vpop.f32.mrb[0].mxu0
        %v1990 = vadd.f32 0.0, %v1989
        %v1991 = vpop.f32.mrb[0].mxu0
        %v1992 = vpop.f32.mrb[0].mxu0
        %v1993 = vadd.f32 0.0, %v1992
        %v1994 = vpop.f32.mrb[0].mxu0
        %1995 = vmatprep.mubr.bf16.mxu0 %v1720
        %1996 = vmatmul.mubr.bf16.gmra.mrb[0].mxu0 %v1719
        %v1997 = vpop.f32.mrb[0].mxu0
        %v1998 = vadd.f32 0.0, %v1997
        %v1999 = vpop.f32.mrb[0].mxu0
        %v2000 = vpop.f32.mrb[0].mxu0
        %v2001 = vadd.f32 0.0, %v2000
        %v2002 = vpop.f32.mrb[0].mxu0
        %2003 = vmatprep.mubr.bf16.mxu0 %v1722
        %2004 = vmatmul.mubr.bf16.gmra.mrb[0].mxu0 %v1721
        %v2005 = vpop.f32.mrb[0].mxu0
        %v2006 = vadd.f32 0.0, %v2005
        %v2007 = vpop.f32.mrb[0].mxu0
        %v2008 = vpop.f32.mrb[0].mxu0
        %v2009 = vadd.f32 0.0, %v2008
        %v2010 = vpop.f32.mrb[0].mxu0
        %2011 = vdwg.mxu0
        %v2012 = vrcp.pop %v1597
        %v2013 = vmul.f32 %v1886, %v2012
        %v2014 = vrcp.pop %v1600
        %v2015 = vmul.f32 %v1889, %v2014
        %v2016 = vrcp.pop %v1603
        %v2017 = vmul.f32 %v1894, %v2016
        %v2018 = vrcp.pop %v1606
        %v2019 = vmul.f32 %v1897, %v2018
        %v2020 = vrcp.pop %v1609
        %v2021 = vmul.f32 %v1902, %v2020
        %v2022 = vrcp.pop %v1612
        %v2023 = vmul.f32 %v1905, %v2022
        %v2024 = vrcp.pop %v1615
        %v2025 = vmul.f32 %v1910, %v2024
        %v2026 = vrcp.pop %v1618
        %v2027 = vmul.f32 %v1913, %v2026
        %v2028 = vrcp.pop %v1621
        %v2029 = vmul.f32 %v1918, %v2028
        %v2030 = vrcp.pop %v1624
        %v2031 = vmul.f32 %v1921, %v2030
        %v2032 = vrcp.pop %v1627
        %v2033 = vmul.f32 %v1926, %v2032
        %v2034 = vrcp.pop %v1630
        %v2035 = vmul.f32 %v1929, %v2034
        %v2036 = vrcp.pop %v1633
        %v2037 = vmul.f32 %v1934, %v2036
        %v2038 = vrcp.pop %v1636
        %v2039 = vmul.f32 %v1937, %v2038
        %v2040 = vrcp.pop %v1639
        %v2041 = vmul.f32 %v1942, %v2040
        %v2042 = vrcp.pop %v1642
        %v2043 = vmul.f32 %v1945, %v2042
        %v2044 = vrcp.pop %v1645
        %v2045 = vmul.f32 %v1950, %v2044
        %v2046 = vrcp.pop %v1648
        %v2047 = vmul.f32 %v1953, %v2046
        %v2048 = vrcp.pop %v1651
        %v2049 = vmul.f32 %v1958, %v2048
        %v2050 = vrcp.pop %v1654
        %v2051 = vmul.f32 %v1961, %v2050
        %v2052 = vrcp.pop %v1657
        %v2053 = vmul.f32 %v1966, %v2052
        %v2054 = vrcp.pop %v1660
        %v2055 = vmul.f32 %v1969, %v2054
        %v2056 = vrcp.pop %v1663
        %v2057 = vmul.f32 %v1974, %v2056
        %v2058 = vrcp.pop %v1666
        %v2059 = vmul.f32 %v1977, %v2058
        %v2060 = vrcp.pop %v1669
        %v2061 = vmul.f32 %v1982, %v2060
        %v2062 = vrcp.pop %v1672
        %v2063 = vmul.f32 %v1985, %v2062
        %v2064 = vrcp.pop %v1675
        %v2065 = vmul.f32 %v1990, %v2064
        %v2066 = vrcp.pop %v1678
        %v2067 = vmul.f32 %v1993, %v2066
        %v2068 = vrcp.pop %v1681
        %v2069 = vmul.f32 %v1998, %v2068
        %v2070 = vrcp.pop %v1684
        %v2071 = vmul.f32 %v2001, %v2070
        %v2072 = vrcp.pop %v1687
        %v2073 = vmul.f32 %v2006, %v2072
        %v2074 = vrcp.pop %v1690
        %v2075 = vmul.f32 %v2009, %v2074
        %v2076 = vld [vmem:[%s4] sm:$0xf]
        %v2077 = vld [vmem:[%s4 + $0x4] sm:$0xf]
        %v2078 = vld [vmem:[%s4 + $0x8] sm:$0xf]
        %v2079 = vld [vmem:[%s4 + $0xc] sm:$0xf]
        %v2080 = vld [vmem:[%s4 + $0x10] sm:$0xf]
        %v2081 = vld [vmem:[%s4 + $0x14] sm:$0xf]
        %v2082 = vld [vmem:[%s4 + $0x18] sm:$0xf]
        %v2083 = vld [vmem:[%s4 + $0x1c] sm:$0xf]
        %v2084 = vld [vmem:[%s4 + $0x20] sm:$0xf]
        %v2085 = vld [vmem:[%s4 + $0x24] sm:$0xf]
        %v2086 = vld [vmem:[%s4 + $0x28] sm:$0xf]
        %v2087 = vld [vmem:[%s4 + $0x2c] sm:$0xf]
        %v2088 = vld [vmem:[%s4 + $0x30] sm:$0xf]
        %v2089 = vld [vmem:[%s4 + $0x34] sm:$0xf]
        %v2090 = vld [vmem:[%s4 + $0x38] sm:$0xf]
        %v2091 = vld [vmem:[%s4 + $0x3c] sm:$0xf]
        %v2092 = vpack.c.bf16 %v2015, %v2013
        %v2093 = vpack.c.bf16 %v2019, %v2017
        %v2094 = vpack.c.bf16 %v2023, %v2021
        %v2095 = vpack.c.bf16 %v2027, %v2025
        %v2096 = vpack.c.bf16 %v2031, %v2029
        %v2097 = vpack.c.bf16 %v2035, %v2033
        %v2098 = vpack.c.bf16 %v2039, %v2037
        %v2099 = vpack.c.bf16 %v2043, %v2041
        %v2100 = vpack.c.bf16 %v2047, %v2045
        %v2101 = vpack.c.bf16 %v2051, %v2049
        %v2102 = vpack.c.bf16 %v2055, %v2053
        %v2103 = vpack.c.bf16 %v2059, %v2057
        %v2104 = vpack.c.bf16 %v2063, %v2061
        %v2105 = vpack.c.bf16 %v2067, %v2065
        %v2106 = vpack.c.bf16 %v2071, %v2069
        %v2107 = vpack.c.bf16 %v2075, %v2073
        %v2124 = vunpack.c.l.b16 %v2076
        %v2125 = vunpack.c.l.b16 %v2077
        %v2126 = vunpack.c.l.b16 %v2078
        %v2127 = vunpack.c.l.b16 %v2079
        %v2128 = vunpack.c.l.b16 %v2080
        %v2129 = vunpack.c.l.b16 %v2081
        %v2130 = vunpack.c.l.b16 %v2082
        %v2131 = vunpack.c.l.b16 %v2083
        %v2132 = vunpack.c.l.b16 %v2084
        %v2133 = vunpack.c.l.b16 %v2085
        %v2134 = vunpack.c.l.b16 %v2086
        %v2135 = vunpack.c.l.b16 %v2087
        %v2136 = vunpack.c.l.b16 %v2088
        %v2137 = vunpack.c.l.b16 %v2089
        %v2138 = vunpack.c.l.b16 %v2090
        %v2139 = vunpack.c.l.b16 %v2091
        %v2140 = vpack.c.b16 %v2125, %v2124
        %v2141 = vpack.c.b16 %v2127, %v2126
        %v2142 = vpack.c.b16 %v2129, %v2128
        %v2143 = vpack.c.b16 %v2131, %v2130
        %v2144 = vpack.c.b16 %v2133, %v2132
        %v2145 = vpack.c.b16 %v2135, %v2134
        %v2146 = vpack.c.b16 %v2137, %v2136
        %v2147 = vpack.c.b16 %v2139, %v2138
        %2156 = vmatprep.subr.bf16.mxu0 0
        %2157 = vmatpush1.bf16.xpose.msra.mxu0 %v2092
        %2158 = vmatprep.subr.bf16.mxu0 0
        %2159 = vmatpush1.bf16.xpose.msra.mxu0 %v2093
        %2160 = vmatprep.subr.bf16.mxu0 0
        %2161 = vmatpush1.bf16.xpose.msra.mxu0 %v2094
        %2162 = vmatprep.subr.bf16.mxu0 0
        %2163 = vmatpush1.bf16.xpose.msra.mxu0 %v2095
        %2164 = vmatprep.subr.bf16.mxu0 0
        %2165 = vmatpush1.bf16.xpose.msra.mxu0 %v2096
        %2166 = vmatprep.subr.bf16.mxu0 0
        %2167 = vmatpush1.bf16.xpose.msra.mxu0 %v2097
        %2168 = vmatprep.subr.bf16.mxu0 0
        %2169 = vmatpush1.bf16.xpose.msra.mxu0 %v2098
        %2170 = vmatprep.subr.bf16.mxu0 0
        %2171 = vmatpush1.bf16.xpose.msra.mxu0 %v2099
        %2172 = vmatprep.subr.bf16.mxu0 0
        %2173 = vmatpush1.bf16.xpose.msra.mxu0 %v2100
        %2174 = vmatprep.subr.bf16.mxu0 0
        %2175 = vmatpush1.bf16.xpose.msra.mxu0 %v2101
        %2176 = vmatprep.subr.bf16.mxu0 0
        %2177 = vmatpush1.bf16.xpose.msra.mxu0 %v2102
        %2178 = vmatprep.subr.bf16.mxu0 0
        %2179 = vmatpush1.bf16.xpose.msra.mxu0 %v2103
        %2180 = vmatprep.subr.bf16.mxu0 0
        %2181 = vmatpush1.bf16.xpose.msra.mxu0 %v2104
        %2182 = vmatprep.subr.bf16.mxu0 0
        %2183 = vmatpush1.bf16.xpose.msra.mxu0 %v2105
        %2184 = vmatprep.subr.bf16.mxu0 0
        %2185 = vmatpush1.bf16.xpose.msra.mxu0 %v2106
        %2186 = vmatprep.subr.bf16.mxu0 0
        %2187 = vmatpush1.bf16.xpose.msra.mxu0 %v2107
        %2188 = vmatprep.mubr.bf16.mxu0 0
        %2189 = vmatmul.mubr.bf16.gmra.mrb[0].mxu0 %v2140
        %v2190 = vpop.f32.mrb[0].mxu0
        %v2191 = vadd.f32 0.0, %v2190
        %v2192 = vpop.f32.mrb[0].mxu0
        %v2193 = vadd.f32 0.0, %v2192
        %v2194 = vpop.f32.mrb[0].mxu0
        %v2195 = vadd.f32 0.0, %v2194
        %v2196 = vpop.f32.mrb[0].mxu0
        %v2197 = vadd.f32 0.0, %v2196
        %2198 = vmatprep.mubr.bf16.mxu0 0
        %2199 = vmatmul.mubr.bf16.gmra.mrb[0].mxu0 %v2141
        %v2200 = vpop.f32.mrb[0].mxu0
        %v2201 = vadd.f32 0.0, %v2200
        %v2202 = vpop.f32.mrb[0].mxu0
        %v2203 = vadd.f32 0.0, %v2202
        %v2204 = vpop.f32.mrb[0].mxu0
        %v2205 = vadd.f32 0.0, %v2204
        %v2206 = vpop.f32.mrb[0].mxu0
        %v2207 = vadd.f32 0.0, %v2206
        %2208 = vmatprep.mubr.bf16.mxu0 0
        %2209 = vmatmul.mubr.bf16.gmra.mrb[0].mxu0 %v2142
        %v2210 = vpop.f32.mrb[0].mxu0
        %v2211 = vadd.f32 0.0, %v2210
        %v2212 = vpop.f32.mrb[0].mxu0
        %v2213 = vadd.f32 0.0, %v2212
        %v2214 = vpop.f32.mrb[0].mxu0
        %v2215 = vadd.f32 0.0, %v2214
        %v2216 = vpop.f32.mrb[0].mxu0
        %v2217 = vadd.f32 0.0, %v2216
        %2218 = vmatprep.mubr.bf16.mxu0 0
        %2219 = vmatmul.mubr.bf16.gmra.mrb[0].mxu0 %v2143
        %v2220 = vpop.f32.mrb[0].mxu0
        %v2221 = vadd.f32 0.0, %v2220
        %v2222 = vpop.f32.mrb[0].mxu0
        %v2223 = vadd.f32 0.0, %v2222
        %v2224 = vpop.f32.mrb[0].mxu0
        %v2225 = vadd.f32 0.0, %v2224
        %v2226 = vpop.f32.mrb[0].mxu0
        %v2227 = vadd.f32 0.0, %v2226
        %2228 = vmatprep.mubr.bf16.mxu0 0
        %2229 = vmatmul.mubr.bf16.gmra.mrb[0].mxu0 %v2144
        %v2230 = vpop.f32.mrb[0].mxu0
        %v2231 = vadd.f32 0.0, %v2230
        %v2232 = vpop.f32.mrb[0].mxu0
        %v2233 = vadd.f32 0.0, %v2232
        %v2234 = vpop.f32.mrb[0].mxu0
        %v2235 = vadd.f32 0.0, %v2234
        %v2236 = vpop.f32.mrb[0].mxu0
        %v2237 = vadd.f32 0.0, %v2236
        %2238 = vmatprep.mubr.bf16.mxu0 0
        %2239 = vmatmul.mubr.bf16.gmra.mrb[0].mxu0 %v2145
        %v2240 = vpop.f32.mrb[0].mxu0
        %v2241 = vadd.f32 0.0, %v2240
        %v2242 = vpop.f32.mrb[0].mxu0
        %v2243 = vadd.f32 0.0, %v2242
        %v2244 = vpop.f32.mrb[0].mxu0
        %v2245 = vadd.f32 0.0, %v2244
        %v2246 = vpop.f32.mrb[0].mxu0
        %v2247 = vadd.f32 0.0, %v2246
        %2248 = vmatprep.mubr.bf16.mxu0 0
        %2249 = vmatmul.mubr.bf16.gmra.mrb[0].mxu0 %v2146
        %v2250 = vpop.f32.mrb[0].mxu0
        %v2251 = vadd.f32 0.0, %v2250
        %v2252 = vpop.f32.mrb[0].mxu0
        %v2253 = vadd.f32 0.0, %v2252
        %v2254 = vpop.f32.mrb[0].mxu0
        %v2255 = vadd.f32 0.0, %v2254
        %v2256 = vpop.f32.mrb[0].mxu0
        %v2257 = vadd.f32 0.0, %v2256
        %2258 = vmatprep.mubr.bf16.mxu0 0
        %2259 = vmatmul.mubr.bf16.gmra.mrb[0].mxu0 %v2147
        %v2260 = vpop.f32.mrb[0].mxu0
        %v2261 = vadd.f32 0.0, %v2260
        %v2262 = vpop.f32.mrb[0].mxu0
        %v2263 = vadd.f32 0.0, %v2262
        %v2264 = vpop.f32.mrb[0].mxu0
        %v2265 = vadd.f32 0.0, %v2264
        %v2266 = vpop.f32.mrb[0].mxu0
        %v2267 = vadd.f32 0.0, %v2266
        %2268 = vdwg.mxu0
        %v2269 = vld [vmem:[%s845] sm:$0xff]
        %v2270 = vld [vmem:[%s845 + $0x8] sm:$0xff]
        %v2271 = vld [vmem:[%s845 + $0x10] sm:$0xff]
        %v2272 = vld [vmem:[%s845 + $0x18] sm:$0xff]
        %v2273 = vld [vmem:[%s845 + $0x20] sm:$0xff]
        %v2274 = vld [vmem:[%s845 + $0x28] sm:$0xff]
        %v2275 = vld [vmem:[%s845 + $0x30] sm:$0xff]
        %v2276 = vld [vmem:[%s845 + $0x38] sm:$0xff]
        %v2277 = vld [vmem:[%s845 + $0x40] sm:$0xff]
        %v2278 = vld [vmem:[%s845 + $0x48] sm:$0xff]
        %v2279 = vld [vmem:[%s845 + $0x50] sm:$0xff]
        %v2280 = vld [vmem:[%s845 + $0x58] sm:$0xff]
        %v2281 = vld [vmem:[%s845 + $0x60] sm:$0xff]
        %v2282 = vld [vmem:[%s845 + $0x68] sm:$0xff]
        %v2283 = vld [vmem:[%s845 + $0x70] sm:$0xff]
        %v2284 = vld [vmem:[%s845 + $0x78] sm:$0xff]
        %v2285 = vld [vmem:[%s845 + $0x80] sm:$0xff]
        %v2286 = vld [vmem:[%s845 + $0x88] sm:$0xff]
        %v2287 = vld [vmem:[%s845 + $0x90] sm:$0xff]
        %v2288 = vld [vmem:[%s845 + $0x98] sm:$0xff]
        %v2289 = vld [vmem:[%s845 + $0xa0] sm:$0xff]
        %v2290 = vld [vmem:[%s845 + $0xa8] sm:$0xff]
        %v2291 = vld [vmem:[%s845 + $0xb0] sm:$0xff]
        %v2292 = vld [vmem:[%s845 + $0xb8] sm:$0xff]
        %v2293 = vld [vmem:[%s845 + $0xc0] sm:$0xff]
        %v2294 = vld [vmem:[%s845 + $0xc8] sm:$0xff]
        %v2295 = vld [vmem:[%s845 + $0xd0] sm:$0xff]
        %v2296 = vld [vmem:[%s845 + $0xd8] sm:$0xff]
        %v2297 = vld [vmem:[%s845 + $0xe0] sm:$0xff]
        %v2298 = vld [vmem:[%s845 + $0xe8] sm:$0xff]
        %v2299 = vld [vmem:[%s845 + $0xf0] sm:$0xff]
        %v2300 = vld [vmem:[%s845 + $0xf8] sm:$0xff]
        %v2301 = vadd.f32 %v2269, %v2191
        %v2302 = vadd.f32 %v2270, %v2193
        %v2303 = vadd.f32 %v2271, %v2195
        %v2304 = vadd.f32 %v2272, %v2197
        %v2305 = vadd.f32 %v2273, %v2201
        %v2306 = vadd.f32 %v2274, %v2203
        %v2307 = vadd.f32 %v2275, %v2205
        %v2308 = vadd.f32 %v2276, %v2207
        %v2309 = vadd.f32 %v2277, %v2211
        %v2310 = vadd.f32 %v2278, %v2213
        %v2311 = vadd.f32 %v2279, %v2215
        %v2312 = vadd.f32 %v2280, %v2217
        %v2313 = vadd.f32 %v2281, %v2221
        %v2314 = vadd.f32 %v2282, %v2223
        %v2315 = vadd.f32 %v2283, %v2225
        %v2316 = vadd.f32 %v2284, %v2227
        %v2317 = vadd.f32 %v2285, %v2231
        %v2318 = vadd.f32 %v2286, %v2233
        %v2319 = vadd.f32 %v2287, %v2235
        %v2320 = vadd.f32 %v2288, %v2237
        %v2321 = vadd.f32 %v2289, %v2241
        %v2322 = vadd.f32 %v2290, %v2243
        %v2323 = vadd.f32 %v2291, %v2245
        %v2324 = vadd.f32 %v2292, %v2247
        %v2325 = vadd.f32 %v2293, %v2251
        %v2326 = vadd.f32 %v2294, %v2253
        %v2327 = vadd.f32 %v2295, %v2255
        %v2328 = vadd.f32 %v2296, %v2257
        %v2329 = vadd.f32 %v2297, %v2261
        %v2330 = vadd.f32 %v2298, %v2263
        %v2331 = vadd.f32 %v2299, %v2265
        %v2332 = vadd.f32 %v2300, %v2267
        %v2333 = vld [vmem:[%s5] sm:$0xff]
        %v2334 = vld [vmem:[%s5 + $0x8] sm:$0xff]
        %v2335 = vld [vmem:[%s5 + $0x10] sm:$0xff]
        %v2336 = vld [vmem:[%s5 + $0x18] sm:$0xff]
        %v2337 = vld [vmem:[%s5 + $0x20] sm:$0xff]
        %v2338 = vld [vmem:[%s5 + $0x28] sm:$0xff]
        %v2339 = vld [vmem:[%s5 + $0x30] sm:$0xff]
        %v2340 = vld [vmem:[%s5 + $0x38] sm:$0xff]
        %v2341 = vld [vmem:[%s5 + $0x40] sm:$0xff]
        %v2342 = vld [vmem:[%s5 + $0x48] sm:$0xff]
        %v2343 = vld [vmem:[%s5 + $0x50] sm:$0xff]
        %v2344 = vld [vmem:[%s5 + $0x58] sm:$0xff]
        %v2345 = vld [vmem:[%s5 + $0x60] sm:$0xff]
        %v2346 = vld [vmem:[%s5 + $0x68] sm:$0xff]
        %v2347 = vld [vmem:[%s5 + $0x70] sm:$0xff]
        %v2348 = vld [vmem:[%s5 + $0x78] sm:$0xff]
        %2350 = vset.pattern.permute.xlu0 0
        %2351 = vperm.xlu0 %2350, %v2333
        %v2352 = vpop.permute.xlu0 %2351
        %2355 = vset.pattern.permute.xlu0 0
        %2356 = vperm.xlu0 %2355, %v2334
        %v2357 = vpop.permute.xlu0 %2356
        %2360 = vset.pattern.permute.xlu0 0
        %2361 = vperm.xlu0 %2360, %v2335
        %v2362 = vpop.permute.xlu0 %2361
        %2365 = vset.pattern.permute.xlu0 0
        %2366 = vperm.xlu0 %2365, %v2336
        %v2367 = vpop.permute.xlu0 %2366
        %2370 = vset.pattern.permute.xlu0 0
        %2371 = vperm.xlu0 %2370, %v2337
        %v2372 = vpop.permute.xlu0 %2371
        %2375 = vset.pattern.permute.xlu0 0
        %2376 = vperm.xlu0 %2375, %v2338
        %v2377 = vpop.permute.xlu0 %2376
        %2380 = vset.pattern.permute.xlu0 0
        %2381 = vperm.xlu0 %2380, %v2339
        %v2382 = vpop.permute.xlu0 %2381
        %2385 = vset.pattern.permute.xlu0 0
        %2386 = vperm.xlu0 %2385, %v2340
        %v2387 = vpop.permute.xlu0 %2386
        %2390 = vset.pattern.permute.xlu0 0
        %2391 = vperm.xlu0 %2390, %v2341
        %v2392 = vpop.permute.xlu0 %2391
        %2395 = vset.pattern.permute.xlu0 0
        %2396 = vperm.xlu0 %2395, %v2342
        %v2397 = vpop.permute.xlu0 %2396
        %2400 = vset.pattern.permute.xlu0 0
        %2401 = vperm.xlu0 %2400, %v2343
        %v2402 = vpop.permute.xlu0 %2401
        %2405 = vset.pattern.permute.xlu0 0
        %2406 = vperm.xlu0 %2405, %v2344
        %v2407 = vpop.permute.xlu0 %2406
        %2410 = vset.pattern.permute.xlu0 0
        %2411 = vperm.xlu0 %2410, %v2345
        %v2412 = vpop.permute.xlu0 %2411
        %2415 = vset.pattern.permute.xlu0 0
        %2416 = vperm.xlu0 %2415, %v2346
        %v2417 = vpop.permute.xlu0 %2416
        %2420 = vset.pattern.permute.xlu0 0
        %2421 = vperm.xlu0 %2420, %v2347
        %v2422 = vpop.permute.xlu0 %2421
        %2425 = vset.pattern.permute.xlu0 0
        %2426 = vperm.xlu0 %2425, %v2348
        %v2427 = vpop.permute.xlu0 %2426
        %v2429 = vadd.f32 %v2301, %v2352
        %v2430 = vadd.f32 %v2302, %v2352
        %v2431 = vadd.f32 %v2303, %v2357
        %v2432 = vadd.f32 %v2304, %v2357
        %v2433 = vadd.f32 %v2305, %v2362
        %v2434 = vadd.f32 %v2306, %v2362
        %v2435 = vadd.f32 %v2307, %v2367
        %v2436 = vadd.f32 %v2308, %v2367
        %v2437 = vadd.f32 %v2309, %v2372
        %v2438 = vadd.f32 %v2310, %v2372
        %v2439 = vadd.f32 %v2311, %v2377
        %v2440 = vadd.f32 %v2312, %v2377
        %v2441 = vadd.f32 %v2313, %v2382
        %v2442 = vadd.f32 %v2314, %v2382
        %v2443 = vadd.f32 %v2315, %v2387
        %v2444 = vadd.f32 %v2316, %v2387
        %v2445 = vadd.f32 %v2317, %v2392
        %v2446 = vadd.f32 %v2318, %v2392
        %v2447 = vadd.f32 %v2319, %v2397
        %v2448 = vadd.f32 %v2320, %v2397
        %v2449 = vadd.f32 %v2321, %v2402
        %v2450 = vadd.f32 %v2322, %v2402
        %v2451 = vadd.f32 %v2323, %v2407
        %v2452 = vadd.f32 %v2324, %v2407
        %v2453 = vadd.f32 %v2325, %v2412
        %v2454 = vadd.f32 %v2326, %v2412
        %v2455 = vadd.f32 %v2327, %v2417
        %v2456 = vadd.f32 %v2328, %v2417
        %v2457 = vadd.f32 %v2329, %v2422
        %v2458 = vadd.f32 %v2330, %v2422
        %v2459 = vadd.f32 %v2331, %v2427
        %v2460 = vadd.f32 %v2332, %v2427
        %2461 = vst [vmem:[%s855] sm:$0xff] %v2429
        %2462 = vst [vmem:[%s855 + $0x8] sm:$0xff] %v2430
        %2463 = vst [vmem:[%s855 + $0x10] sm:$0xff] %v2431
        %2464 = vst [vmem:[%s855 + $0x18] sm:$0xff] %v2432
        %2465 = vst [vmem:[%s855 + $0x20] sm:$0xff] %v2433
        %2466 = vst [vmem:[%s855 + $0x28] sm:$0xff] %v2434
        %2467 = vst [vmem:[%s855 + $0x30] sm:$0xff] %v2435
        %2468 = vst [vmem:[%s855 + $0x38] sm:$0xff] %v2436
        %2469 = vst [vmem:[%s855 + $0x40] sm:$0xff] %v2437
        %2470 = vst [vmem:[%s855 + $0x48] sm:$0xff] %v2438
        %2471 = vst [vmem:[%s855 + $0x50] sm:$0xff] %v2439
        %2472 = vst [vmem:[%s855 + $0x58] sm:$0xff] %v2440
        %2473 = vst [vmem:[%s855 + $0x60] sm:$0xff] %v2441
        %2474 = vst [vmem:[%s855 + $0x68] sm:$0xff] %v2442
        %2475 = vst [vmem:[%s855 + $0x70] sm:$0xff] %v2443
        %2476 = vst [vmem:[%s855 + $0x78] sm:$0xff] %v2444
        %2477 = vst [vmem:[%s855 + $0x80] sm:$0xff] %v2445
        %2478 = vst [vmem:[%s855 + $0x88] sm:$0xff] %v2446
        %2479 = vst [vmem:[%s855 + $0x90] sm:$0xff] %v2447
        %2480 = vst [vmem:[%s855 + $0x98] sm:$0xff] %v2448
        %2481 = vst [vmem:[%s855 + $0xa0] sm:$0xff] %v2449
        %2482 = vst [vmem:[%s855 + $0xa8] sm:$0xff] %v2450
        %2483 = vst [vmem:[%s855 + $0xb0] sm:$0xff] %v2451
        %2484 = vst [vmem:[%s855 + $0xb8] sm:$0xff] %v2452
        %2485 = vst [vmem:[%s855 + $0xc0] sm:$0xff] %v2453
        %2486 = vst [vmem:[%s855 + $0xc8] sm:$0xff] %v2454
        %2487 = vst [vmem:[%s855 + $0xd0] sm:$0xff] %v2455
        %2488 = vst [vmem:[%s855 + $0xd8] sm:$0xff] %v2456
        %2489 = vst [vmem:[%s855 + $0xe0] sm:$0xff] %v2457
        %2490 = vst [vmem:[%s855 + $0xe8] sm:$0xff] %v2458
        %2491 = vst [vmem:[%s855 + $0xf0] sm:$0xff] %v2459
        %2492 = vst [vmem:[%s855 + $0xf8] sm:$0xff] %v2460
        %s2493 = smul.u32 2, %s22
        %p2494 = scmp.lt.s32.totalorder %s21, 1
        %s2495 = scalar_select %p2494, %s21, 1
        %p2496 = scmp.lt.s32.totalorder %s2493, 1
        %s2497 = scalar_select %p2496, %s2493, 1
        %s2498 = smul.addr %s2495, 32
        %s2499 = sadd.s32 %s2497, %s2498
        %s2500 = smul.addr %s2499, 8
        %s2501 = scalar_lea.vmem %s6, %s2500
        // Predicated region
        $region168: #{attn_block_pallas.5} parent=154 // pred_check
          %p2502 = pneg %p199
        $region169: #{attn_block_pallas.5} parent=154 // pred_check_branch
          %2504 = sbr.rel (%p2502) target = $region171
        $region170: #{attn_block_pallas.5} parent=154 // pred_region
          %s2505 = smul.u32 2, %s22
        $region171: #{attn_block_pallas.5} parent=154 // pred_fallthru
          _
      $region155: #{attn_block_pallas.5} parent=5 // pred_fallthru
        _
      %p2506 = scmp.le.s32.totalorder 2, %s12
      // Predicated region
      $region172: #{attn_block_pallas.5} parent=5 // pred_check
        %p2507 = pneg %p2506
      $region173: #{attn_block_pallas.5} parent=5 // pred_check_branch
        %2509 = sbr.rel (%p2507) target = $region175
      $region174: #{attn_block_pallas.5} parent=5 // pred_region
        %s2510 = ssub.s32 %s12, 2
        // Predicated region
        $region176: #{attn_block_pallas.5} parent=174 // pred_check
          %p2511 = pneg %p205
        $region177: #{attn_block_pallas.5} parent=174 // pred_check_branch
          %2513 = sbr.rel (%p2511) target = $region179
        $region178: #{attn_block_pallas.5} parent=174 // pred_region
          %s2514 = smul.u32 2, %s24
          %p2515 = scmp.lt.s32.totalorder %s23, 1
          %s2516 = scalar_select %p2515, %s23, 1
          %p2517 = scmp.lt.s32.totalorder %s2514, 1
          %s2518 = scalar_select %p2517, %s2514, 1
          %s2519 = smul.addr %s2516, 32
          %s2520 = sadd.s32 %s2518, %s2519
          %s2521 = smul.addr %s2520, 8
          %s2522 = scalar_lea.vmem %s6, %s2521
        $region179: #{attn_block_pallas.5} parent=174 // pred_fallthru
          _
      $region175: #{attn_block_pallas.5} parent=5 // pred_fallthru
        _
    $region6: #{attn_block_pallas.5} parent=1 // loop_footer
      %s16 = sadd.s32 1, %s12
    $region7: #{attn_block_pallas.5} parent=1 // loop_footer_branch
      %11 = sbr.rel target = $region3
    $region8: #{attn_block_pallas.5} parent=1 // loop_exit
      _

</llo_original>
